<compile_context>
chip_gen: v7x
topology: tpu7x:2x2x1
jax: 0.10.0
libtpu: 0.0.40
codegen_flags: <defaults>
</compile_context>

<pallas_src>
import jax
import jax.numpy as jnp
from jax import lax
from jax.experimental import pallas as pl
from jax.experimental.pallas import tpu as pltpu

BF16 = jnp.bfloat16
F32 = jnp.float32
VMEM_LIMIT = 32 * 1024 * 1024  # valid on every generation; actual usage << this


def _round_up(x, m):
    return ((x + m - 1) // m) * m


def _cparams(sem):
    return pltpu.CompilerParams(dimension_semantics=sem,
                                vmem_limit_bytes=VMEM_LIMIT)


def _pick_tile(n, cap, align=8):
    """Largest exact divisor of n that is <= cap and a multiple of `align`
    (falls back to the full extent, which is always layout-legal)."""
    if n <= cap:
        return n
    for d in range(cap, 0, -1):
        if n % d == 0 and d % align == 0:
            return d
    return n


# ----------------------------------------------------------------------------
# Dilated 3x3 conv: channel GEMM with the kw shift-and-add fused in the epilogue
# ----------------------------------------------------------------------------
def _dilated_conv_kernel(a_ref, w0_ref, w1_ref, w2_ref, u_ref):
    # a_ref : (tm, Cin) bf16 -- rows are padded (hp, wp) positions; tm is a whole
    #         number of padded image rows, so the kw shifts stay inside the tile.
    # wk_ref: (Cin, 3*Cout) bf16, columns ordered (kh, cout), one per kw tap.
    # u_ref : (tm, 3*Cout) bf16 -- kw-combined intermediate u.
    a = a_ref[...]
    c3 = u_ref.shape[-1]
    u = jnp.dot(a, w0_ref[...], preferred_element_type=jnp.float32)
    for kw, w_ref in ((1, w1_ref), (2, w2_ref)):
        part = jnp.dot(a, w_ref[...], preferred_element_type=jnp.float32)
        shifted = jnp.concatenate(
            [part[kw:, :], jnp.zeros((kw, c3), jnp.float32)], axis=0)
        u = u + shifted
    u_ref[...] = u.astype(u_ref.dtype)


def dilated_conv_nhwc(x_list, w, b, dil):
    """Conv2d(Cin, Cout, (3,3), dilation=(dil,1), padding=(dil,1)) applied to the
    channel concatenation of x_list (newest first), NHWC bf16 in, bf16 out."""
    B, H, W, _ = x_list[0].shape
    Cout = w.shape[0]
    xcat = x_list[0] if len(x_list) == 1 else jnp.concatenate(x_list, axis=-1)
    Cin = xcat.shape[-1]
    Wp = W + 2
    Hp = H + 2 * dil

    # rows-per-tile r (multiple of 8 so tm = r*Wp is sublane aligned); keep the
    # in-kernel f32 working set under a few MiB.
    r = 8
    for cand in (64, 32, 16):
        if cand * Wp * 9 * Cout * 4 <= 6 * 1024 * 1024 and cand <= max(8, Hp):
            r = cand
            break
    eh = (-Hp) % r                       # extra H pad so M is a multiple of tm
    Hp2 = Hp + eh
    # concat + spatial pad + bf16 cast fuse into one XLA pass (skip never
    # materialized unpadded).
    xp = jnp.pad(xcat.astype(BF16), ((0, 0), (dil, dil + eh), (1, 1), (0, 0)))
    M = B * Hp2 * Wp
    tm = r * Wp
    a = xp.reshape(M, Cin)

    # weight (Cout, Cin, 3, 3) -> per-kw (Cin, 3*Cout) with columns (kh, cout)
    wk = [jnp.transpose(w[:, :, :, kw], (1, 2, 0)).reshape(Cin, 3 * Cout).astype(BF16)
          for kw in range(3)]

    u = pl.pallas_call(
        _dilated_conv_kernel,
        out_shape=jax.ShapeDtypeStruct((M, 3 * Cout), BF16),
        grid=(M // tm,),
        in_specs=[pl.BlockSpec((tm, Cin), lambda i: (i, 0)),
                  pl.BlockSpec((Cin, 3 * Cout), lambda i: (0, 0)),
                  pl.BlockSpec((Cin, 3 * Cout), lambda i: (0, 0)),
                  pl.BlockSpec((Cin, 3 * Cout), lambda i: (0, 0))],
        out_specs=pl.BlockSpec((tm, 3 * Cout), lambda i: (i, 0)),
        compiler_params=_cparams(("parallel",)),
    )(a, wk[0], wk[1], wk[2])

    # kh combine: 3 fused slice-adds (each u element used exactly once).
    u = u.reshape(B, Hp2, Wp, 3 * Cout)
    y = (u[:, 0:H, :W, 0:Cout].astype(F32)
         + u[:, dil:dil + H, :W, Cout:2 * Cout]
         + u[:, 2 * dil:2 * dil + H, :W, 2 * Cout:3 * Cout]
         + b.astype(F32))
    return y.astype(BF16)


# ----------------------------------------------------------------------------
# InstanceNorm2d(C, affine=True) + PReLU(C): two-pass, tiled over S = H*W
# ----------------------------------------------------------------------------
def _in_stats_kernel(y_ref, s_ref):
    @pl.when(pl.program_id(1) == 0)
    def _():
        s_ref[...] = jnp.zeros_like(s_ref)

    y = y_ref[...].astype(jnp.float32)                       # (1, ts, C)
    s = jnp.sum(y, axis=1, keepdims=True)                    # (1, 1, C)
    sq = jnp.sum(y * y, axis=1, keepdims=True)
    s_ref[...] += jnp.concatenate([s, sq], axis=1)           # (1, 2, C)


def _in_apply_kernel(y_ref, sc_ref, sh_ref, al_ref, o_ref):
    y = y_ref[...].astype(jnp.float32)
    v = y * sc_ref[...] + sh_ref[...]
    o_ref[...] = (jnp.maximum(v, 0.0)
                  + al_ref[...] * jnp.minimum(v, 0.0)).astype(o_ref.dtype)


def instnorm_prelu_nhwc(x, gamma, beta, alpha):
    B, H, W, C = x.shape
    S = H * W
    x3 = x.reshape(B, S, C)
    ts = _pick_tile(S, 2048)
    grid_s = S // ts

    stats = pl.pallas_call(
        _in_stats_kernel,
        out_shape=jax.ShapeDtypeStruct((B, 2, C), F32),
        grid=(B, grid_s),
        in_specs=[pl.BlockSpec((1, ts, C), lambda b, s: (b, s, 0))],
        out_specs=pl.BlockSpec((1, 2, C), lambda b, s: (b, 0, 0)),
        compiler_params=_cparams(("parallel", "arbitrary")),
    )(x3)

    mean = stats[:, 0, :] / S
    var = jnp.maximum(stats[:, 1, :] / S - mean * mean, 0.0)
    rstd = lax.rsqrt(var + 1e-5)
    g = gamma.astype(F32)
    scale = (g * rstd).reshape(B, 1, C)
    shift = (beta.astype(F32) - mean * g * rstd).reshape(B, 1, C)
    al = alpha.reshape(1, 1, C).astype(F32)

    y = pl.pallas_call(
        _in_apply_kernel,
        out_shape=jax.ShapeDtypeStruct((B, S, C), BF16),
        grid=(B, grid_s),
        in_specs=[pl.BlockSpec((1, ts, C), lambda b, s: (b, s, 0)),
                  pl.BlockSpec((1, 1, C), lambda b, s: (b, 0, 0)),
                  pl.BlockSpec((1, 1, C), lambda b, s: (b, 0, 0)),
                  pl.BlockSpec((1, 1, C), lambda b, s: (0, 0, 0))],
        out_specs=pl.BlockSpec((1, ts, C), lambda b, s: (b, s, 0)),
        compiler_params=_cparams(("parallel", "parallel")),
    )(x3, scale, shift, al)
    return y.reshape(B, H, W, C)


# ----------------------------------------------------------------------------
# ConvTranspose2d(dc, dc, (1,4), (1,2), (0,1)) fused with Conv2d(dc,1,(1,1)):
# 4 polyphase taps as a Cin reduction on the VPU, lane-dense (B, T, 2F) output.
# Output layout is de-interleaved: [:F] = even freq cols, [F:] = odd freq cols
# (the interleave permutation is folded into the final Conv1d weight).
# ----------------------------------------------------------------------------
def _convt_head_kernel(bias_ref, w_ref, x_ref, o_ref):
    x = x_ref[0].astype(jnp.float32)                 # (tt, F, Cin)
    tt, F, Cin = x.shape
    w = w_ref[...]                                   # (Cin, 4) f32

    def tap(k):
        return jnp.sum(x * w[:, k].reshape(1, 1, Cin), axis=-1)   # (tt, F)

    z0, z1, z2, z3 = tap(0), tap(1), tap(2), tap(3)
    zero = jnp.zeros((tt, 1), jnp.float32)
    even = z1 + jnp.concatenate([zero, z3[:, :F - 1]], axis=1)
    odd = z2 + jnp.concatenate([z0[:, 1:], zero], axis=1)
    o_ref[0] = jnp.concatenate([even, odd], axis=1) + bias_ref[0]


def conv_transpose_c1_fused(x, ct_w, ct_b, c1_w, c1_b):
    B, T, F, Cin = x.shape
    c1 = c1_w.reshape(-1).astype(F32)                      # (dc,)
    taps = ct_w[:, :, 0, :].astype(F32)                    # (Cin, dc, 4)
    w_eff = jnp.einsum("cok,o->ck", taps, c1)              # (Cin, 4)
    bias_eff = (jnp.dot(c1, ct_b.astype(F32)) + c1_b.reshape(-1)[0]).reshape(1)

    tt = _pick_tile(T, 128)
    return pl.pallas_call(
        _convt_head_kernel,
        out_shape=jax.ShapeDtypeStruct((B, T, 2 * F), F32),
        grid=(B, T // tt),
        in_specs=[pl.BlockSpec(memory_space=pltpu.MemorySpace.SMEM),
                  pl.BlockSpec((Cin, 4), lambda b, t: (0, 0)),
                  pl.BlockSpec((1, tt, F, Cin), lambda b, t: (b, t, 0, 0))],
        out_specs=pl.BlockSpec((1, tt, 2 * F), lambda b, t: (b, t, 0)),
        compiler_params=_cparams(("parallel", "parallel")),
    )(bias_eff, w_eff, x)


# ----------------------------------------------------------------------------
# Mask head: InstanceNorm2d(1) + PReLU(1) + Conv2d(1,1,(1,1)) fused (per batch)
# ----------------------------------------------------------------------------
def _mask_head_kernel(p_ref, x_ref, o_ref):
    # p_ref (SMEM): [gamma, beta, prelu_alpha, c2_w, c2_b]
    x = x_ref[...]                                        # (1, T, F2) f32
    mean = jnp.mean(x, axis=(1, 2), keepdims=True)
    var = jnp.mean((x - mean) ** 2, axis=(1, 2), keepdims=True)
    xn = (x - mean) * lax.rsqrt(var + 1e-5)
    y = xn * p_ref[0] + p_ref[1]
    z = jnp.maximum(y, 0.0) + p_ref[2] * jnp.minimum(y, 0.0)
    o_ref[...] = (p_ref[3] * z + p_ref[4]).astype(o_ref.dtype)


def mask_head(x, gamma, beta, alpha, c2_w, c2_b):
    B, T, F2 = x.shape
    p = jnp.concatenate([gamma.reshape(-1), beta.reshape(-1), alpha.reshape(-1),
                         c2_w.reshape(-1), c2_b.reshape(-1)]).astype(F32)  # (5,)
    return pl.pallas_call(
        _mask_head_kernel,
        out_shape=jax.ShapeDtypeStruct((B, T, F2), BF16),
        grid=(B,),
        in_specs=[pl.BlockSpec(memory_space=pltpu.MemorySpace.SMEM),
                  pl.BlockSpec((1, T, F2), lambda b: (b, 0, 0))],
        out_specs=pl.BlockSpec((1, T, F2), lambda b: (b, 0, 0)),
        compiler_params=_cparams(("parallel",)),
    )(p, x)


# ----------------------------------------------------------------------------
# Small GEMM + bias (used by the final Conv1d): grid over M only, full-extent
# K/N blocks, bf16 operands, f32 MXU accumulation, lane-dense stores.
# ----------------------------------------------------------------------------
def _gemm_bias_kernel(a_ref, b_ref, bias_ref, o_ref):
    acc = jnp.dot(a_ref[...], b_ref[...], preferred_element_type=jnp.float32)
    o_ref[...] = (acc + bias_ref[...]).astype(o_ref.dtype)


def matmul_bias(a, b, bias, out_dtype=F32, tm_max=512):
    M, K = a.shape
    _, N = b.shape
    tm = min(tm_max, _round_up(M, 8))
    Mp = _round_up(M, tm)
    a_p = a.astype(BF16)
    if Mp != M:
        a_p = jnp.pad(a_p, ((0, Mp - M), (0, 0)))
    out = pl.pallas_call(
        _gemm_bias_kernel,
        out_shape=jax.ShapeDtypeStruct((Mp, N), out_dtype),
        grid=(Mp // tm,),
        in_specs=[pl.BlockSpec((tm, K), lambda i: (i, 0)),
                  pl.BlockSpec((K, N), lambda i: (0, 0)),
                  pl.BlockSpec((1, N), lambda i: (0, 0))],
        out_specs=pl.BlockSpec((tm, N), lambda i: (i, 0)),
        compiler_params=_cparams(("parallel",)),
    )(a_p, b.astype(BF16), bias.astype(F32).reshape(1, N))
    return out[:M] if Mp != M else out


def conv1d_freq(x_deint, w, b):
    """Conv1d(F2, F2, 1) over the freq axis of (B, T, F2).  x is de-interleaved
    ([even|odd]); the interleave permutation is folded into the weight columns."""
    B, T, F2 = x_deint.shape
    w2 = w.reshape(F2, F2)                                          # [out, in]
    w_perm = jnp.concatenate([w2[:, 0::2], w2[:, 1::2]], axis=1)    # [out, deint]
    y = matmul_bias(x_deint.reshape(B * T, F2), w_perm.T.astype(F32), b)
    return y.reshape(B, T, F2)


# ----------------------------------------------------------------------------
# Parameters (deterministic synthetic init, PyTorch weight layouts)
# ----------------------------------------------------------------------------
def init_params(key, dense_channel, dim_freq, out_channel, depth=4):
    params = {"dense": []}
    keys = jax.random.split(key, 32)
    k = iter(keys)

    def nrm(kk, shape, scale=0.05):
        return (scale * jax.random.normal(kk, shape)).astype(jnp.float32)

    for i in range(depth):
        cin = dense_channel * (i + 1)
        params["dense"].append(dict(
            w=nrm(next(k), (dense_channel, cin, 3, 3)),
            b=nrm(next(k), (dense_channel,)),
            gamma=jnp.ones((dense_channel,), jnp.float32),
            beta=jnp.zeros((dense_channel,), jnp.float32),
            alpha=jnp.full((dense_channel,), 0.25, jnp.float32),
        ))
    params["mask"] = dict(
        ct_w=nrm(next(k), (dense_channel, dense_channel, 1, 4)),
        ct_b=nrm(next(k), (dense_channel,)),
        c1_w=nrm(next(k), (out_channel, dense_channel, 1, 1)),
        c1_b=nrm(next(k), (out_channel,)),
        in_gamma=jnp.ones((out_channel,), jnp.float32),
        in_beta=jnp.zeros((out_channel,), jnp.float32),
        prelu_alpha=jnp.full((out_channel,), 0.25, jnp.float32),
        c2_w=nrm(next(k), (out_channel, out_channel, 1, 1)),
        c2_b=nrm(next(k), (out_channel,)),
    )
    params["ls_w"] = nrm(next(k), (dim_freq, dim_freq, 1))
    params["ls_b"] = nrm(next(k), (dim_freq,))
    return params


# ----------------------------------------------------------------------------
# MaskDecoder forward
# ----------------------------------------------------------------------------
# TODO(synk): LearnableSigmoid_2d branch (discriminative=True) not implemented;
# the default MaskDecoder constructor uses the Conv1d(dim_freq, dim_freq, 1) path.
# TODO(synk): rest of DiMaSE (DenseEncoder, TFMambaBlock/ConvMambaBlock,
# PhaseDecoder, complex recombination) is out of scope -- ConvMambaBlock is not
# defined in the provided source.
@jax.jit
def mask_decoder_forward(x_nchw, params):
    # NCHW -> NHWC once, bf16 end-to-end below.
    x = jnp.transpose(x_nchw, (0, 2, 3, 1)).astype(BF16)            # (B, T, F, dc)

    # DenseBlock(depth=4): dilated conv -> InstanceNorm -> PReLU, dense skips.
    # Per-layer outputs are kept in a list; the (newest-first) concat is fused
    # into the next conv's spatial-pad pass (no standalone skip concat writes).
    feats = [x]
    out = x
    for i in range(4):
        p = params["dense"][i]
        h = dilated_conv_nhwc(list(reversed(feats)), p["w"], p["b"], 2 ** i)
        out = instnorm_prelu_nhwc(h, p["gamma"], p["beta"], p["alpha"])
        feats.append(out)

    # mask_conv: ConvT(1,4)/(1,2)/(0,1) fused with 1x1(dc->1), then
    # InstanceNorm(1)+PReLU(1)+1x1(1->1) fused, then Conv1d(2F, 2F, 1).
    mp = params["mask"]
    m = conv_transpose_c1_fused(out, mp["ct_w"], mp["ct_b"],
                                mp["c1_w"], mp["c1_b"])              # (B, T, 2F)
    m = mask_head(m, mp["in_gamma"], mp["in_beta"], mp["prelu_alpha"],
                  mp["c2_w"], mp["c2_b"])                            # (B, T, 2F)
    y = conv1d_freq(m, params["ls_w"], params["ls_b"])               # (B, T, 2F)
    return y[:, None, :, :]                                          # (B, 1, T, 2F)


if __name__ == "__main__":
    B = 2
    dense_channel = 8
    T = 4                 # time frames
    F_in = 8              # freq bins entering the decoder
    dim_freq = 2 * F_in   # ConvTranspose (1,4)/(1,2)/(0,1) doubles freq -> 16
    out_channel = 1

    key = jax.random.PRNGKey(0)
    kx, kp = jax.random.split(key)
    x = jax.random.normal(kx, (B, dense_channel, T, F_in), dtype=jnp.float32)
    params = init_params(kp, dense_channel, dim_freq, out_channel)

    y = mask_decoder_forward(x, params)
    y = jax.block_until_ready(y)
    assert y.shape == (B, 1, T, dim_freq), y.shape
    assert jnp.all(jnp.isfinite(y))
    print("KERNEL_OK")
</pallas_src>

<mosaic_0001>
module attributes {stable_mosaic.version = 11 : i64} {
  func.func @_dilated_conv_kernel(%arg0: i32, %arg1: memref<80x8xbf16, #tpu.memory_space<vmem>>, %arg2: memref<8x24xbf16, #tpu.memory_space<vmem>>, %arg3: memref<8x24xbf16, #tpu.memory_space<vmem>>, %arg4: memref<8x24xbf16, #tpu.memory_space<vmem>>, %arg5: memref<80x24xbf16, #tpu.memory_space<vmem>>) attributes {dimension_semantics = [#tpu.dimension_semantics<parallel>], iteration_bounds = array<i64: 2>, scalar_prefetch = 0 : i64, scratch_operands = 0 : i64, tpu.core_type = #tpu.core_type<tc>, window_params = [{transform_indices = @transform_0, window_bounds = array<i64: 80, 8>}, {pipeline_mode = #tpu.pipeline_mode<synchronous>, transform_indices = @transform_1, window_bounds = array<i64: 8, 24>}, {pipeline_mode = #tpu.pipeline_mode<synchronous>, transform_indices = @transform_2, window_bounds = array<i64: 8, 24>}, {pipeline_mode = #tpu.pipeline_mode<synchronous>, transform_indices = @transform_3, window_bounds = array<i64: 8, 24>}, {transform_indices = @transform_4, window_bounds = array<i64: 80, 24>}]} {
    %c0 = arith.constant 0 : index
    %c0_0 = arith.constant 0 : index
    %0 = vector.load %arg1[%c0, %c0_0] : memref<80x8xbf16, #tpu.memory_space<vmem>>, vector<80x8xbf16>
    %c0_1 = arith.constant 0 : index
    %c0_2 = arith.constant 0 : index
    %1 = vector.load %arg2[%c0_1, %c0_2] : memref<8x24xbf16, #tpu.memory_space<vmem>>, vector<8x24xbf16>
    %cst = arith.constant dense<0.000000e+00> : vector<80x24xf32>
    %2 = tpu.matmul %0, %1, %cst {dimension_numbers = #tpu.dot_dimension_numbers<[1], [0], [0], [1], [0, 0, 1, 1], [], []>} : vector<80x8xbf16>, vector<8x24xbf16>, vector<80x24xf32> -> vector<80x24xf32>
    %c0_3 = arith.constant 0 : index
    %c0_4 = arith.constant 0 : index
    %3 = vector.load %arg3[%c0_3, %c0_4] : memref<8x24xbf16, #tpu.memory_space<vmem>>, vector<8x24xbf16>
    %cst_5 = arith.constant dense<0.000000e+00> : vector<80x24xf32>
    %4 = tpu.matmul %0, %3, %cst_5 {dimension_numbers = #tpu.dot_dimension_numbers<[1], [0], [0], [1], [0, 0, 1, 1], [], []>} : vector<80x8xbf16>, vector<8x24xbf16>, vector<80x24xf32> -> vector<80x24xf32>
    %5 = vector.extract_strided_slice %4 {offsets = [1, 0], sizes = [79, 24], strides = [1, 1]} : vector<80x24xf32> to vector<79x24xf32>
    %cst_6 = arith.constant 0.000000e+00 : f32
    %6 = vector.broadcast %cst_6 : f32 to vector<1x24xf32>
    %7 = tpu.concatenate %5, %6 in 0 : vector<79x24xf32>, vector<1x24xf32> -> vector<80x24xf32>
    %8 = arith.addf %2, %7 : vector<80x24xf32>
    %c0_7 = arith.constant 0 : index
    %c0_8 = arith.constant 0 : index
    %9 = vector.load %arg4[%c0_7, %c0_8] : memref<8x24xbf16, #tpu.memory_space<vmem>>, vector<8x24xbf16>
    %cst_9 = arith.constant dense<0.000000e+00> : vector<80x24xf32>
    %10 = tpu.matmul %0, %9, %cst_9 {dimension_numbers = #tpu.dot_dimension_numbers<[1], [0], [0], [1], [0, 0, 1, 1], [], []>} : vector<80x8xbf16>, vector<8x24xbf16>, vector<80x24xf32> -> vector<80x24xf32>
    %11 = vector.extract_strided_slice %10 {offsets = [2, 0], sizes = [78, 24], strides = [1, 1]} : vector<80x24xf32> to vector<78x24xf32>
    %cst_10 = arith.constant 0.000000e+00 : f32
    %12 = vector.broadcast %cst_10 : f32 to vector<2x24xf32>
    %13 = tpu.concatenate %11, %12 in 0 : vector<78x24xf32>, vector<2x24xf32> -> vector<80x24xf32>
    %14 = arith.addf %8, %13 : vector<80x24xf32>
    %15 = arith.truncf %14 : vector<80x24xf32> to vector<80x24xbf16>
    %c0_11 = arith.constant 0 : index
    %c0_12 = arith.constant 0 : index
    %16 = vector.load %arg5[%c0_11, %c0_12] : memref<80x24xbf16, #tpu.memory_space<vmem>>, vector<80x24xbf16>
    tpu.vector_store %arg5[%c0_11, %c0_12], %15 {strides = array<i32>} : memref<80x24xbf16, #tpu.memory_space<vmem>>, vector<80x24xbf16>,
    return
  }
  func.func @transform_0(%arg0: i32) -> (i32, i32) {
    %c0_i32 = arith.constant 0 : i32
    %c0_i32_0 = arith.constant 0 : i32
    return %arg0, %c0_i32 : i32, i32
  }
  func.func @transform_1(%arg0: i32) -> (i32, i32) {
    %c0_i32 = arith.constant 0 : i32
    %c0_i32_0 = arith.constant 0 : i32
    %c0_i32_1 = arith.constant 0 : i32
    return %c0_i32, %c0_i32_0 : i32, i32
  }
  func.func @transform_2(%arg0: i32) -> (i32, i32) {
    %c0_i32 = arith.constant 0 : i32
    %c0_i32_0 = arith.constant 0 : i32
    %c0_i32_1 = arith.constant 0 : i32
    return %c0_i32, %c0_i32_0 : i32, i32
  }
  func.func @transform_3(%arg0: i32) -> (i32, i32) {
    %c0_i32 = arith.constant 0 : i32
    %c0_i32_0 = arith.constant 0 : i32
    %c0_i32_1 = arith.constant 0 : i32
    return %c0_i32, %c0_i32_0 : i32, i32
  }
  func.func @transform_4(%arg0: i32) -> (i32, i32) {
    %c0_i32 = arith.constant 0 : i32
    %c0_i32_0 = arith.constant 0 : i32
    return %arg0, %c0_i32 : i32, i32
  }
}

module attributes {stable_mosaic.version = 11 : i64} {
  func.func @_in_stats_kernel(%arg0: i32, %arg1: i32, %arg2: memref<1x32x8xbf16, #tpu.memory_space<vmem>>, %arg3: memref<1x2x8xf32, #tpu.memory_space<vmem>>) attributes {dimension_semantics = [#tpu.dimension_semantics<parallel>, #tpu.dimension_semantics<arbitrary>], iteration_bounds = array<i64: 2, 1>, scalar_prefetch = 0 : i64, scratch_operands = 0 : i64, tpu.core_type = #tpu.core_type<tc>, window_params = [{transform_indices = @transform_0, window_bounds = array<i64: 1, 32, 8>}, {transform_indices = @transform_1, window_bounds = array<i64: 1, 2, 8>}]} {
    %c0_i32 = arith.constant 0 : i32
    %0 = arith.cmpi eq, %arg1, %c0_i32 : i32
    %1 = arith.extui %0 : i1 to i32
    %c0_i32_0 = arith.constant 0 : i32
    %2 = arith.cmpi ne, %1, %c0_i32_0 : i32
    scf.if %2 {
      %cst_10 = arith.constant 0.000000e+00 : f32
      %14 = vector.broadcast %cst_10 : f32 to vector<1x2x8xf32>
      %c0_11 = arith.constant 0 : index
      %c0_12 = arith.constant 0 : index
      %c0_13 = arith.constant 0 : index
      %15 = vector.load %arg3[%c0_11, %c0_12, %c0_13] : memref<1x2x8xf32, #tpu.memory_space<vmem>>, vector<1x2x8xf32>
      tpu.vector_store %arg3[%c0_11, %c0_12, %c0_13], %14 {strides = array<i32>} : memref<1x2x8xf32, #tpu.memory_space<vmem>>, vector<1x2x8xf32>,
    } else {
    }
    %c0 = arith.constant 0 : index
    %c0_1 = arith.constant 0 : index
    %c0_2 = arith.constant 0 : index
    %3 = vector.load %arg2[%c0, %c0_1, %c0_2] : memref<1x32x8xbf16, #tpu.memory_space<vmem>>, vector<1x32x8xbf16>
    %4 = arith.extf %3 : vector<1x32x8xbf16> to vector<1x32x8xf32>
    %cst = arith.constant dense<0.000000e+00> : vector<1x8xf32>
    %5 = vector.multi_reduction <add>, %4, %cst [1] : vector<1x32x8xf32> to vector<1x8xf32>
    %6 = vector.shape_cast %5 : vector<1x8xf32> to vector<1x1x8xf32>
    %7 = arith.mulf %4, %4 : vector<1x32x8xf32>
    %cst_3 = arith.constant dense<0.000000e+00> : vector<1x8xf32>
    %8 = vector.multi_reduction <add>, %7, %cst_3 [1] : vector<1x32x8xf32> to vector<1x8xf32>
    %9 = vector.shape_cast %8 : vector<1x8xf32> to vector<1x1x8xf32>
    %c0_4 = arith.constant 0 : index
    %c0_5 = arith.constant 0 : index
    %c0_6 = arith.constant 0 : index
    %10 = vector.load %arg3[%c0_4, %c0_5, %c0_6] : memref<1x2x8xf32, #tpu.memory_space<vmem>>, vector<1x2x8xf32>
    %11 = tpu.concatenate %6, %9 in 1 : vector<1x1x8xf32>, vector<1x1x8xf32> -> vector<1x2x8xf32>
    %12 = arith.addf %10, %11 : vector<1x2x8xf32>
    %c0_7 = arith.constant 0 : index
    %c0_8 = arith.constant 0 : index
    %c0_9 = arith.constant 0 : index
    %13 = vector.load %arg3[%c0_7, %c0_8, %c0_9] : memref<1x2x8xf32, #tpu.memory_space<vmem>>, vector<1x2x8xf32>
    tpu.vector_store %arg3[%c0_7, %c0_8, %c0_9], %12 {strides = array<i32>} : memref<1x2x8xf32, #tpu.memory_space<vmem>>, vector<1x2x8xf32>,
    return
  }
  func.func @transform_0(%arg0: i32, %arg1: i32) -> (i32, i32, i32) {
    %c0_i32 = arith.constant 0 : i32
    %c0_i32_0 = arith.constant 0 : i32
    return %arg0, %arg1, %c0_i32 : i32, i32, i32
  }
  func.func @transform_1(%arg0: i32, %arg1: i32) -> (i32, i32, i32) {
    %c0_i32 = arith.constant 0 : i32
    %c0_i32_0 = arith.constant 0 : i32
    %c0_i32_1 = arith.constant 0 : i32
    return %arg0, %c0_i32, %c0_i32_0 : i32, i32, i32
  }
}

module attributes {stable_mosaic.version = 11 : i64} {
  func.func @_in_apply_kernel(%arg0: i32, %arg1: i32, %arg2: memref<1x32x8xbf16, #tpu.memory_space<vmem>>, %arg3: memref<1x1x8xf32, #tpu.memory_space<vmem>>, %arg4: memref<1x1x8xf32, #tpu.memory_space<vmem>>, %arg5: memref<1x1x8xf32, #tpu.memory_space<vmem>>, %arg6: memref<1x32x8xbf16, #tpu.memory_space<vmem>>) attributes {dimension_semantics = [#tpu.dimension_semantics<parallel>, #tpu.dimension_semantics<parallel>], iteration_bounds = array<i64: 2, 1>, scalar_prefetch = 0 : i64, scratch_operands = 0 : i64, tpu.core_type = #tpu.core_type<tc>, window_params = [{transform_indices = @transform_0, window_bounds = array<i64: 1, 32, 8>}, {transform_indices = @transform_1, window_bounds = array<i64: 1, 1, 8>}, {transform_indices = @transform_2, window_bounds = array<i64: 1, 1, 8>}, {pipeline_mode = #tpu.pipeline_mode<synchronous>, transform_indices = @transform_3, window_bounds = array<i64: 1, 1, 8>}, {transform_indices = @transform_4, window_bounds = array<i64: 1, 32, 8>}]} {
    %c0 = arith.constant 0 : index
    %c0_0 = arith.constant 0 : index
    %c0_1 = arith.constant 0 : index
    %0 = vector.load %arg2[%c0, %c0_0, %c0_1] : memref<1x32x8xbf16, #tpu.memory_space<vmem>>, vector<1x32x8xbf16>
    %1 = arith.extf %0 : vector<1x32x8xbf16> to vector<1x32x8xf32>
    %c0_2 = arith.constant 0 : index
    %c0_3 = arith.constant 0 : index
    %c0_4 = arith.constant 0 : index
    %2 = vector.load %arg3[%c0_2, %c0_3, %c0_4] : memref<1x1x8xf32, #tpu.memory_space<vmem>>, vector<1x1x8xf32>
    %3 = vector.broadcast %2 : vector<1x1x8xf32> to vector<1x32x8xf32>
    %4 = arith.mulf %1, %3 : vector<1x32x8xf32>
    %c0_5 = arith.constant 0 : index
    %c0_6 = arith.constant 0 : index
    %c0_7 = arith.constant 0 : index
    %5 = vector.load %arg4[%c0_5, %c0_6, %c0_7] : memref<1x1x8xf32, #tpu.memory_space<vmem>>, vector<1x1x8xf32>
    %6 = vector.broadcast %5 : vector<1x1x8xf32> to vector<1x32x8xf32>
    %7 = arith.addf %4, %6 : vector<1x32x8xf32>
    %cst = arith.constant 0.000000e+00 : f32
    %8 = vector.broadcast %cst : f32 to vector<1x32x8xf32>
    %9 = arith.maximumf %7, %8 : vector<1x32x8xf32>
    %c0_8 = arith.constant 0 : index
    %c0_9 = arith.constant 0 : index
    %c0_10 = arith.constant 0 : index
    %10 = vector.load %arg5[%c0_8, %c0_9, %c0_10] : memref<1x1x8xf32, #tpu.memory_space<vmem>>, vector<1x1x8xf32>
    %cst_11 = arith.constant 0.000000e+00 : f32
    %11 = vector.broadcast %cst_11 : f32 to vector<1x32x8xf32>
    %12 = arith.minimumf %7, %11 : vector<1x32x8xf32>
    %13 = vector.broadcast %10 : vector<1x1x8xf32> to vector<1x32x8xf32>
    %14 = arith.mulf %13, %12 : vector<1x32x8xf32>
    %15 = arith.addf %9, %14 : vector<1x32x8xf32>
    %16 = arith.truncf %15 : vector<1x32x8xf32> to vector<1x32x8xbf16>
    %c0_12 = arith.constant 0 : index
    %c0_13 = arith.constant 0 : index
    %c0_14 = arith.constant 0 : index
    %17 = vector.load %arg6[%c0_12, %c0_13, %c0_14] : memref<1x32x8xbf16, #tpu.memory_space<vmem>>, vector<1x32x8xbf16>
    tpu.vector_store %arg6[%c0_12, %c0_13, %c0_14], %16 {strides = array<i32>} : memref<1x32x8xbf16, #tpu.memory_space<vmem>>, vector<1x32x8xbf16>,
    return
  }
  func.func @transform_0(%arg0: i32, %arg1: i32) -> (i32, i32, i32) {
    %c0_i32 = arith.constant 0 : i32
    %c0_i32_0 = arith.constant 0 : i32
    return %arg0, %arg1, %c0_i32 : i32, i32, i32
  }
  func.func @transform_1(%arg0: i32, %arg1: i32) -> (i32, i32, i32) {
    %c0_i32 = arith.constant 0 : i32
    %c0_i32_0 = arith.constant 0 : i32
    %c0_i32_1 = arith.constant 0 : i32
    return %arg0, %c0_i32, %c0_i32_0 : i32, i32, i32
  }
  func.func @transform_2(%arg0: i32, %arg1: i32) -> (i32, i32, i32) {
    %c0_i32 = arith.constant 0 : i32
    %c0_i32_0 = arith.constant 0 : i32
    %c0_i32_1 = arith.constant 0 : i32
    return %arg0, %c0_i32, %c0_i32_0 : i32, i32, i32
  }
  func.func @transform_3(%arg0: i32, %arg1: i32) -> (i32, i32, i32) {
    %c0_i32 = arith.constant 0 : i32
    %c0_i32_0 = arith.constant 0 : i32
    %c0_i32_1 = arith.constant 0 : i32
    %c0_i32_2 = arith.constant 0 : i32
    return %c0_i32, %c0_i32_0, %c0_i32_1 : i32, i32, i32
  }
  func.func @transform_4(%arg0: i32, %arg1: i32) -> (i32, i32, i32) {
    %c0_i32 = arith.constant 0 : i32
    %c0_i32_0 = arith.constant 0 : i32
    return %arg0, %arg1, %c0_i32 : i32, i32, i32
  }
}

module attributes {stable_mosaic.version = 11 : i64} {
  func.func @_dilated_conv_kernel(%arg0: i32, %arg1: memref<80x16xbf16, #tpu.memory_space<vmem>>, %arg2: memref<16x24xbf16, #tpu.memory_space<vmem>>, %arg3: memref<16x24xbf16, #tpu.memory_space<vmem>>, %arg4: memref<16x24xbf16, #tpu.memory_space<vmem>>, %arg5: memref<80x24xbf16, #tpu.memory_space<vmem>>) attributes {dimension_semantics = [#tpu.dimension_semantics<parallel>], iteration_bounds = array<i64: 2>, scalar_prefetch = 0 : i64, scratch_operands = 0 : i64, tpu.core_type = #tpu.core_type<tc>, window_params = [{transform_indices = @transform_0, window_bounds = array<i64: 80, 16>}, {pipeline_mode = #tpu.pipeline_mode<synchronous>, transform_indices = @transform_1, window_bounds = array<i64: 16, 24>}, {pipeline_mode = #tpu.pipeline_mode<synchronous>, transform_indices = @transform_2, window_bounds = array<i64: 16, 24>}, {pipeline_mode = #tpu.pipeline_mode<synchronous>, transform_indices = @transform_3, window_bounds = array<i64: 16, 24>}, {transform_indices = @transform_4, window_bounds = array<i64: 80, 24>}]} {
    %c0 = arith.constant 0 : index
    %c0_0 = arith.constant 0 : index
    %0 = vector.load %arg1[%c0, %c0_0] : memref<80x16xbf16, #tpu.memory_space<vmem>>, vector<80x16xbf16>
    %c0_1 = arith.constant 0 : index
    %c0_2 = arith.constant 0 : index
    %1 = vector.load %arg2[%c0_1, %c0_2] : memref<16x24xbf16, #tpu.memory_space<vmem>>, vector<16x24xbf16>
    %cst = arith.constant dense<0.000000e+00> : vector<80x24xf32>
    %2 = tpu.matmul %0, %1, %cst {dimension_numbers = #tpu.dot_dimension_numbers<[1], [0], [0], [1], [0, 0, 1, 1], [], []>} : vector<80x16xbf16>, vector<16x24xbf16>, vector<80x24xf32> -> vector<80x24xf32>
    %c0_3 = arith.constant 0 : index
    %c0_4 = arith.constant 0 : index
    %3 = vector.load %arg3[%c0_3, %c0_4] : memref<16x24xbf16, #tpu.memory_space<vmem>>, vector<16x24xbf16>
    %cst_5 = arith.constant dense<0.000000e+00> : vector<80x24xf32>
    %4 = tpu.matmul %0, %3, %cst_5 {dimension_numbers = #tpu.dot_dimension_numbers<[1], [0], [0], [1], [0, 0, 1, 1], [], []>} : vector<80x16xbf16>, vector<16x24xbf16>, vector<80x24xf32> -> vector<80x24xf32>
    %5 = vector.extract_strided_slice %4 {offsets = [1, 0], sizes = [79, 24], strides = [1, 1]} : vector<80x24xf32> to vector<79x24xf32>
    %cst_6 = arith.constant 0.000000e+00 : f32
    %6 = vector.broadcast %cst_6 : f32 to vector<1x24xf32>
    %7 = tpu.concatenate %5, %6 in 0 : vector<79x24xf32>, vector<1x24xf32> -> vector<80x24xf32>
    %8 = arith.addf %2, %7 : vector<80x24xf32>
    %c0_7 = arith.constant 0 : index
    %c0_8 = arith.constant 0 : index
    %9 = vector.load %arg4[%c0_7, %c0_8] : memref<16x24xbf16, #tpu.memory_space<vmem>>, vector<16x24xbf16>
    %cst_9 = arith.constant dense<0.000000e+00> : vector<80x24xf32>
    %10 = tpu.matmul %0, %9, %cst_9 {dimension_numbers = #tpu.dot_dimension_numbers<[1], [0], [0], [1], [0, 0, 1, 1], [], []>} : vector<80x16xbf16>, vector<16x24xbf16>, vector<80x24xf32> -> vector<80x24xf32>
    %11 = vector.extract_strided_slice %10 {offsets = [2, 0], sizes = [78, 24], strides = [1, 1]} : vector<80x24xf32> to vector<78x24xf32>
    %cst_10 = arith.constant 0.000000e+00 : f32
    %12 = vector.broadcast %cst_10 : f32 to vector<2x24xf32>
    %13 = tpu.concatenate %11, %12 in 0 : vector<78x24xf32>, vector<2x24xf32> -> vector<80x24xf32>
    %14 = arith.addf %8, %13 : vector<80x24xf32>
    %15 = arith.truncf %14 : vector<80x24xf32> to vector<80x24xbf16>
    %c0_11 = arith.constant 0 : index
    %c0_12 = arith.constant 0 : index
    %16 = vector.load %arg5[%c0_11, %c0_12] : memref<80x24xbf16, #tpu.memory_space<vmem>>, vector<80x24xbf16>
    tpu.vector_store %arg5[%c0_11, %c0_12], %15 {strides = array<i32>} : memref<80x24xbf16, #tpu.memory_space<vmem>>, vector<80x24xbf16>,
    return
  }
  func.func @transform_0(%arg0: i32) -> (i32, i32) {
    %c0_i32 = arith.constant 0 : i32
    %c0_i32_0 = arith.constant 0 : i32
    return %arg0, %c0_i32 : i32, i32
  }
  func.func @transform_1(%arg0: i32) -> (i32, i32) {
    %c0_i32 = arith.constant 0 : i32
    %c0_i32_0 = arith.constant 0 : i32
    %c0_i32_1 = arith.constant 0 : i32
    return %c0_i32, %c0_i32_0 : i32, i32
  }
  func.func @transform_2(%arg0: i32) -> (i32, i32) {
    %c0_i32 = arith.constant 0 : i32
    %c0_i32_0 = arith.constant 0 : i32
    %c0_i32_1 = arith.constant 0 : i32
    return %c0_i32, %c0_i32_0 : i32, i32
  }
  func.func @transform_3(%arg0: i32) -> (i32, i32) {
    %c0_i32 = arith.constant 0 : i32
    %c0_i32_0 = arith.constant 0 : i32
    %c0_i32_1 = arith.constant 0 : i32
    return %c0_i32, %c0_i32_0 : i32, i32
  }
  func.func @transform_4(%arg0: i32) -> (i32, i32) {
    %c0_i32 = arith.constant 0 : i32
    %c0_i32_0 = arith.constant 0 : i32
    return %arg0, %c0_i32 : i32, i32
  }
}

module attributes {stable_mosaic.version = 11 : i64} {
  func.func @_dilated_conv_kernel(%arg0: i32, %arg1: memref<80x24xbf16, #tpu.memory_space<vmem>>, %arg2: memref<24x24xbf16, #tpu.memory_space<vmem>>, %arg3: memref<24x24xbf16, #tpu.memory_space<vmem>>, %arg4: memref<24x24xbf16, #tpu.memory_space<vmem>>, %arg5: memref<80x24xbf16, #tpu.memory_space<vmem>>) attributes {dimension_semantics = [#tpu.dimension_semantics<parallel>], iteration_bounds = array<i64: 4>, scalar_prefetch = 0 : i64, scratch_operands = 0 : i64, tpu.core_type = #tpu.core_type<tc>, window_params = [{transform_indices = @transform_0, window_bounds = array<i64: 80, 24>}, {pipeline_mode = #tpu.pipeline_mode<synchronous>, transform_indices = @transform_1, window_bounds = array<i64: 24, 24>}, {pipeline_mode = #tpu.pipeline_mode<synchronous>, transform_indices = @transform_2, window_bounds = array<i64: 24, 24>}, {pipeline_mode = #tpu.pipeline_mode<synchronous>, transform_indices = @transform_3, window_bounds = array<i64: 24, 24>}, {transform_indices = @transform_4, window_bounds = array<i64: 80, 24>}]} {
    %c0 = arith.constant 0 : index
    %c0_0 = arith.constant 0 : index
    %0 = vector.load %arg1[%c0, %c0_0] : memref<80x24xbf16, #tpu.memory_space<vmem>>, vector<80x24xbf16>
    %c0_1 = arith.constant 0 : index
    %c0_2 = arith.constant 0 : index
    %1 = vector.load %arg2[%c0_1, %c0_2] : memref<24x24xbf16, #tpu.memory_space<vmem>>, vector<24x24xbf16>
    %cst = arith.constant dense<0.000000e+00> : vector<80x24xf32>
    %2 = tpu.matmul %0, %1, %cst {dimension_numbers = #tpu.dot_dimension_numbers<[1], [0], [0], [1], [0, 0, 1, 1], [], []>} : vector<80x24xbf16>, vector<24x24xbf16>, vector<80x24xf32> -> vector<80x24xf32>
    %c0_3 = arith.constant 0 : index
    %c0_4 = arith.constant 0 : index
    %3 = vector.load %arg3[%c0_3, %c0_4] : memref<24x24xbf16, #tpu.memory_space<vmem>>, vector<24x24xbf16>
    %cst_5 = arith.constant dense<0.000000e+00> : vector<80x24xf32>
    %4 = tpu.matmul %0, %3, %cst_5 {dimension_numbers = #tpu.dot_dimension_numbers<[1], [0], [0], [1], [0, 0, 1, 1], [], []>} : vector<80x24xbf16>, vector<24x24xbf16>, vector<80x24xf32> -> vector<80x24xf32>
    %5 = vector.extract_strided_slice %4 {offsets = [1, 0], sizes = [79, 24], strides = [1, 1]} : vector<80x24xf32> to vector<79x24xf32>
    %cst_6 = arith.constant 0.000000e+00 : f32
    %6 = vector.broadcast %cst_6 : f32 to vector<1x24xf32>
    %7 = tpu.concatenate %5, %6 in 0 : vector<79x24xf32>, vector<1x24xf32> -> vector<80x24xf32>
    %8 = arith.addf %2, %7 : vector<80x24xf32>
    %c0_7 = arith.constant 0 : index
    %c0_8 = arith.constant 0 : index
    %9 = vector.load %arg4[%c0_7, %c0_8] : memref<24x24xbf16, #tpu.memory_space<vmem>>, vector<24x24xbf16>
    %cst_9 = arith.constant dense<0.000000e+00> : vector<80x24xf32>
    %10 = tpu.matmul %0, %9, %cst_9 {dimension_numbers = #tpu.dot_dimension_numbers<[1], [0], [0], [1], [0, 0, 1, 1], [], []>} : vector<80x24xbf16>, vector<24x24xbf16>, vector<80x24xf32> -> vector<80x24xf32>
    %11 = vector.extract_strided_slice %10 {offsets = [2, 0], sizes = [78, 24], strides = [1, 1]} : vector<80x24xf32> to vector<78x24xf32>
    %cst_10 = arith.constant 0.000000e+00 : f32
    %12 = vector.broadcast %cst_10 : f32 to vector<2x24xf32>
    %13 = tpu.concatenate %11, %12 in 0 : vector<78x24xf32>, vector<2x24xf32> -> vector<80x24xf32>
    %14 = arith.addf %8, %13 : vector<80x24xf32>
    %15 = arith.truncf %14 : vector<80x24xf32> to vector<80x24xbf16>
    %c0_11 = arith.constant 0 : index
    %c0_12 = arith.constant 0 : index
    %16 = vector.load %arg5[%c0_11, %c0_12] : memref<80x24xbf16, #tpu.memory_space<vmem>>, vector<80x24xbf16>
    tpu.vector_store %arg5[%c0_11, %c0_12], %15 {strides = array<i32>} : memref<80x24xbf16, #tpu.memory_space<vmem>>, vector<80x24xbf16>,
    return
  }
  func.func @transform_0(%arg0: i32) -> (i32, i32) {
    %c0_i32 = arith.constant 0 : i32
    %c0_i32_0 = arith.constant 0 : i32
    return %arg0, %c0_i32 : i32, i32
  }
  func.func @transform_1(%arg0: i32) -> (i32, i32) {
    %c0_i32 = arith.constant 0 : i32
    %c0_i32_0 = arith.constant 0 : i32
    %c0_i32_1 = arith.constant 0 : i32
    return %c0_i32, %c0_i32_0 : i32, i32
  }
  func.func @transform_2(%arg0: i32) -> (i32, i32) {
    %c0_i32 = arith.constant 0 : i32
    %c0_i32_0 = arith.constant 0 : i32
    %c0_i32_1 = arith.constant 0 : i32
    return %c0_i32, %c0_i32_0 : i32, i32
  }
  func.func @transform_3(%arg0: i32) -> (i32, i32) {
    %c0_i32 = arith.constant 0 : i32
    %c0_i32_0 = arith.constant 0 : i32
    %c0_i32_1 = arith.constant 0 : i32
    return %c0_i32, %c0_i32_0 : i32, i32
  }
  func.func @transform_4(%arg0: i32) -> (i32, i32) {
    %c0_i32 = arith.constant 0 : i32
    %c0_i32_0 = arith.constant 0 : i32
    return %arg0, %c0_i32 : i32, i32
  }
}

module attributes {stable_mosaic.version = 11 : i64} {
  func.func @_dilated_conv_kernel(%arg0: i32, %arg1: memref<160x32xbf16, #tpu.memory_space<vmem>>, %arg2: memref<32x24xbf16, #tpu.memory_space<vmem>>, %arg3: memref<32x24xbf16, #tpu.memory_space<vmem>>, %arg4: memref<32x24xbf16, #tpu.memory_space<vmem>>, %arg5: memref<160x24xbf16, #tpu.memory_space<vmem>>) attributes {dimension_semantics = [#tpu.dimension_semantics<parallel>], iteration_bounds = array<i64: 4>, scalar_prefetch = 0 : i64, scratch_operands = 0 : i64, tpu.core_type = #tpu.core_type<tc>, window_params = [{transform_indices = @transform_0, window_bounds = array<i64: 160, 32>}, {pipeline_mode = #tpu.pipeline_mode<synchronous>, transform_indices = @transform_1, window_bounds = array<i64: 32, 24>}, {pipeline_mode = #tpu.pipeline_mode<synchronous>, transform_indices = @transform_2, window_bounds = array<i64: 32, 24>}, {pipeline_mode = #tpu.pipeline_mode<synchronous>, transform_indices = @transform_3, window_bounds = array<i64: 32, 24>}, {transform_indices = @transform_4, window_bounds = array<i64: 160, 24>}]} {
    %c0 = arith.constant 0 : index
    %c0_0 = arith.constant 0 : index
    %0 = vector.load %arg1[%c0, %c0_0] : memref<160x32xbf16, #tpu.memory_space<vmem>>, vector<160x32xbf16>
    %c0_1 = arith.constant 0 : index
    %c0_2 = arith.constant 0 : index
    %1 = vector.load %arg2[%c0_1, %c0_2] : memref<32x24xbf16, #tpu.memory_space<vmem>>, vector<32x24xbf16>
    %cst = arith.constant dense<0.000000e+00> : vector<160x24xf32>
    %2 = tpu.matmul %0, %1, %cst {dimension_numbers = #tpu.dot_dimension_numbers<[1], [0], [0], [1], [0, 0, 1, 1], [], []>} : vector<160x32xbf16>, vector<32x24xbf16>, vector<160x24xf32> -> vector<160x24xf32>
    %c0_3 = arith.constant 0 : index
    %c0_4 = arith.constant 0 : index
    %3 = vector.load %arg3[%c0_3, %c0_4] : memref<32x24xbf16, #tpu.memory_space<vmem>>, vector<32x24xbf16>
    %cst_5 = arith.constant dense<0.000000e+00> : vector<160x24xf32>
    %4 = tpu.matmul %0, %3, %cst_5 {dimension_numbers = #tpu.dot_dimension_numbers<[1], [0], [0], [1], [0, 0, 1, 1], [], []>} : vector<160x32xbf16>, vector<32x24xbf16>, vector<160x24xf32> -> vector<160x24xf32>
    %5 = vector.extract_strided_slice %4 {offsets = [1, 0], sizes = [159, 24], strides = [1, 1]} : vector<160x24xf32> to vector<159x24xf32>
    %cst_6 = arith.constant 0.000000e+00 : f32
    %6 = vector.broadcast %cst_6 : f32 to vector<1x24xf32>
    %7 = tpu.concatenate %5, %6 in 0 : vector<159x24xf32>, vector<1x24xf32> -> vector<160x24xf32>
    %8 = arith.addf %2, %7 : vector<160x24xf32>
    %c0_7 = arith.constant 0 : index
    %c0_8 = arith.constant 0 : index
    %9 = vector.load %arg4[%c0_7, %c0_8] : memref<32x24xbf16, #tpu.memory_space<vmem>>, vector<32x24xbf16>
    %cst_9 = arith.constant dense<0.000000e+00> : vector<160x24xf32>
    %10 = tpu.matmul %0, %9, %cst_9 {dimension_numbers = #tpu.dot_dimension_numbers<[1], [0], [0], [1], [0, 0, 1, 1], [], []>} : vector<160x32xbf16>, vector<32x24xbf16>, vector<160x24xf32> -> vector<160x24xf32>
    %11 = vector.extract_strided_slice %10 {offsets = [2, 0], sizes = [158, 24], strides = [1, 1]} : vector<160x24xf32> to vector<158x24xf32>
    %cst_10 = arith.constant 0.000000e+00 : f32
    %12 = vector.broadcast %cst_10 : f32 to vector<2x24xf32>
    %13 = tpu.concatenate %11, %12 in 0 : vector<158x24xf32>, vector<2x24xf32> -> vector<160x24xf32>
    %14 = arith.addf %8, %13 : vector<160x24xf32>
    %15 = arith.truncf %14 : vector<160x24xf32> to vector<160x24xbf16>
    %c0_11 = arith.constant 0 : index
    %c0_12 = arith.constant 0 : index
    %16 = vector.load %arg5[%c0_11, %c0_12] : memref<160x24xbf16, #tpu.memory_space<vmem>>, vector<160x24xbf16>
    tpu.vector_store %arg5[%c0_11, %c0_12], %15 {strides = array<i32>} : memref<160x24xbf16, #tpu.memory_space<vmem>>, vector<160x24xbf16>,
    return
  }
  func.func @transform_0(%arg0: i32) -> (i32, i32) {
    %c0_i32 = arith.constant 0 : i32
    %c0_i32_0 = arith.constant 0 : i32
    return %arg0, %c0_i32 : i32, i32
  }
  func.func @transform_1(%arg0: i32) -> (i32, i32) {
    %c0_i32 = arith.constant 0 : i32
    %c0_i32_0 = arith.constant 0 : i32
    %c0_i32_1 = arith.constant 0 : i32
    return %c0_i32, %c0_i32_0 : i32, i32
  }
  func.func @transform_2(%arg0: i32) -> (i32, i32) {
    %c0_i32 = arith.constant 0 : i32
    %c0_i32_0 = arith.constant 0 : i32
    %c0_i32_1 = arith.constant 0 : i32
    return %c0_i32, %c0_i32_0 : i32, i32
  }
  func.func @transform_3(%arg0: i32) -> (i32, i32) {
    %c0_i32 = arith.constant 0 : i32
    %c0_i32_0 = arith.constant 0 : i32
    %c0_i32_1 = arith.constant 0 : i32
    return %c0_i32, %c0_i32_0 : i32, i32
  }
  func.func @transform_4(%arg0: i32) -> (i32, i32) {
    %c0_i32 = arith.constant 0 : i32
    %c0_i32_0 = arith.constant 0 : i32
    return %arg0, %c0_i32 : i32, i32
  }
}

module attributes {stable_mosaic.version = 11 : i64} {
  func.func @_convt_head_kernel(%arg0: i32, %arg1: i32, %arg2: memref<1xf32, #tpu.memory_space<smem>>, %arg3: memref<8x4xf32, #tpu.memory_space<vmem>>, %arg4: memref<1x4x8x8xbf16, #tpu.memory_space<vmem>>, %arg5: memref<1x4x16xf32, #tpu.memory_space<vmem>>) attributes {dimension_semantics = [#tpu.dimension_semantics<parallel>, #tpu.dimension_semantics<parallel>], iteration_bounds = array<i64: 2, 1>, scalar_prefetch = 0 : i64, scratch_operands = 0 : i64, tpu.core_type = #tpu.core_type<tc>, window_params = [{transform_indices = @transform_0, window_bounds = array<i64: 1>}, {pipeline_mode = #tpu.pipeline_mode<synchronous>, transform_indices = @transform_1, window_bounds = array<i64: 8, 4>}, {transform_indices = @transform_2, window_bounds = array<i64: 1, 4, 8, 8>}, {transform_indices = @transform_3, window_bounds = array<i64: 1, 4, 16>}]} {
    %c0 = arith.constant 0 : index
    %c0_0 = arith.constant 0 : index
    %c0_1 = arith.constant 0 : index
    %c0_2 = arith.constant 0 : index
    %0 = vector.load %arg4[%c0, %c0_0, %c0_1, %c0_2] : memref<1x4x8x8xbf16, #tpu.memory_space<vmem>>, vector<1x4x8x8xbf16>
    %1 = vector.shape_cast %0 : vector<1x4x8x8xbf16> to vector<4x8x8xbf16>
    %2 = arith.extf %1 : vector<4x8x8xbf16> to vector<4x8x8xf32>
    %c0_3 = arith.constant 0 : index
    %c0_4 = arith.constant 0 : index
    %3 = vector.load %arg3[%c0_3, %c0_4] : memref<8x4xf32, #tpu.memory_space<vmem>>, vector<8x4xf32>
    %4 = vector.extract_strided_slice %3 {offsets = [0, 0], sizes = [8, 1], strides = [1, 1]} : vector<8x4xf32> to vector<8x1xf32>
    %5 = vector.shape_cast %4 : vector<8x1xf32> to vector<8xf32>
    %6 = vector.shape_cast %5 : vector<8xf32> to vector<1x1x8xf32>
    %7 = vector.broadcast %6 : vector<1x1x8xf32> to vector<4x8x8xf32>
    %8 = arith.mulf %2, %7 : vector<4x8x8xf32>
    %cst = arith.constant dense<0.000000e+00> : vector<4x8xf32>
    %9 = vector.multi_reduction <add>, %8, %cst [2] : vector<4x8x8xf32> to vector<4x8xf32>
    %10 = vector.extract_strided_slice %3 {offsets = [0, 1], sizes = [8, 1], strides = [1, 1]} : vector<8x4xf32> to vector<8x1xf32>
    %11 = vector.shape_cast %10 : vector<8x1xf32> to vector<8xf32>
    %12 = vector.shape_cast %11 : vector<8xf32> to vector<1x1x8xf32>
    %13 = vector.broadcast %12 : vector<1x1x8xf32> to vector<4x8x8xf32>
    %14 = arith.mulf %2, %13 : vector<4x8x8xf32>
    %cst_5 = arith.constant dense<0.000000e+00> : vector<4x8xf32>
    %15 = vector.multi_reduction <add>, %14, %cst_5 [2] : vector<4x8x8xf32> to vector<4x8xf32>
    %16 = vector.extract_strided_slice %3 {offsets = [0, 2], sizes = [8, 1], strides = [1, 1]} : vector<8x4xf32> to vector<8x1xf32>
    %17 = vector.shape_cast %16 : vector<8x1xf32> to vector<8xf32>
    %18 = vector.shape_cast %17 : vector<8xf32> to vector<1x1x8xf32>
    %19 = vector.broadcast %18 : vector<1x1x8xf32> to vector<4x8x8xf32>
    %20 = arith.mulf %2, %19 : vector<4x8x8xf32>
    %cst_6 = arith.constant dense<0.000000e+00> : vector<4x8xf32>
    %21 = vector.multi_reduction <add>, %20, %cst_6 [2] : vector<4x8x8xf32> to vector<4x8xf32>
    %22 = vector.extract_strided_slice %3 {offsets = [0, 3], sizes = [8, 1], strides = [1, 1]} : vector<8x4xf32> to vector<8x1xf32>
    %23 = vector.shape_cast %22 : vector<8x1xf32> to vector<8xf32>
    %24 = vector.shape_cast %23 : vector<8xf32> to vector<1x1x8xf32>
    %25 = vector.broadcast %24 : vector<1x1x8xf32> to vector<4x8x8xf32>
    %26 = arith.mulf %2, %25 : vector<4x8x8xf32>
    %cst_7 = arith.constant dense<0.000000e+00> : vector<4x8xf32>
    %27 = vector.multi_reduction <add>, %26, %cst_7 [2] : vector<4x8x8xf32> to vector<4x8xf32>
    %cst_8 = arith.constant 0.000000e+00 : f32
    %28 = vector.broadcast %cst_8 : f32 to vector<4x1xf32>
    %29 = vector.extract_strided_slice %27 {offsets = [0, 0], sizes = [4, 7], strides = [1, 1]} : vector<4x8xf32> to vector<4x7xf32>
    %30 = tpu.concatenate %28, %29 in 1 : vector<4x1xf32>, vector<4x7xf32> -> vector<4x8xf32>
    %31 = arith.addf %15, %30 : vector<4x8xf32>
    %32 = vector.extract_strided_slice %9 {offsets = [0, 1], sizes = [4, 7], strides = [1, 1]} : vector<4x8xf32> to vector<4x7xf32>
    %33 = tpu.concatenate %32, %28 in 1 : vector<4x7xf32>, vector<4x1xf32> -> vector<4x8xf32>
    %34 = arith.addf %21, %33 : vector<4x8xf32>
    %35 = tpu.concatenate %31, %34 in 1 : vector<4x8xf32>, vector<4x8xf32> -> vector<4x16xf32>
    %c0_9 = arith.constant 0 : index
    %36 = memref.load %arg2[%c0_9] : memref<1xf32, #tpu.memory_space<smem>>
    %37 = vector.broadcast %36 : f32 to vector<4x16xf32>
    %38 = arith.addf %35, %37 : vector<4x16xf32>
    %c0_10 = arith.constant 0 : index
    %c0_11 = arith.constant 0 : index
    %c0_12 = arith.constant 0 : index
    %39 = vector.load %arg5[%c0_10, %c0_11, %c0_12] : memref<1x4x16xf32, #tpu.memory_space<vmem>>, vector<1x4x16xf32>
    %40 = vector.shape_cast %39 : vector<1x4x16xf32> to vector<4x16xf32>
    %41 = vector.shape_cast %38 : vector<4x16xf32> to vector<1x4x16xf32>
    tpu.vector_store %arg5[%c0_10, %c0_11, %c0_12], %41 {strides = array<i32>} : memref<1x4x16xf32, #tpu.memory_space<vmem>>, vector<1x4x16xf32>,
    return
  }
  func.func @transform_0(%arg0: i32, %arg1: i32) -> i32 {
    %c0_i32 = arith.constant 0 : i32
    %c0_i32_0 = arith.constant 0 : i32
    return %c0_i32 : i32
  }
  func.func @transform_1(%arg0: i32, %arg1: i32) -> (i32, i32) {
    %c0_i32 = arith.constant 0 : i32
    %c0_i32_0 = arith.constant 0 : i32
    %c0_i32_1 = arith.constant 0 : i32
    return %c0_i32, %c0_i32_0 : i32, i32
  }
  func.func @transform_2(%arg0: i32, %arg1: i32) -> (i32, i32, i32, i32) {
    %c0_i32 = arith.constant 0 : i32
    %c0_i32_0 = arith.constant 0 : i32
    %c0_i32_1 = arith.constant 0 : i32
    return %arg0, %arg1, %c0_i32, %c0_i32_0 : i32, i32, i32, i32
  }
  func.func @transform_3(%arg0: i32, %arg1: i32) -> (i32, i32, i32) {
    %c0_i32 = arith.constant 0 : i32
    %c0_i32_0 = arith.constant 0 : i32
    return %arg0, %arg1, %c0_i32 : i32, i32, i32
  }
}

module attributes {stable_mosaic.version = 11 : i64} {
  func.func @_mask_head_kernel(%arg0: i32, %arg1: memref<5xf32, #tpu.memory_space<smem>>, %arg2: memref<1x4x16xf32, #tpu.memory_space<vmem>>, %arg3: memref<1x4x16xbf16, #tpu.memory_space<vmem>>) attributes {dimension_semantics = [#tpu.dimension_semantics<parallel>], iteration_bounds = array<i64: 2>, scalar_prefetch = 0 : i64, scratch_operands = 0 : i64, tpu.core_type = #tpu.core_type<tc>, window_params = [{transform_indices = @transform_0, window_bounds = array<i64: 5>}, {transform_indices = @transform_1, window_bounds = array<i64: 1, 4, 16>}, {transform_indices = @transform_2, window_bounds = array<i64: 1, 4, 16>}]} {
    %c0 = arith.constant 0 : index
    %c0_0 = arith.constant 0 : index
    %c0_1 = arith.constant 0 : index
    %0 = vector.load %arg2[%c0, %c0_0, %c0_1] : memref<1x4x16xf32, #tpu.memory_space<vmem>>, vector<1x4x16xf32>
    %cst = arith.constant dense<0.000000e+00> : vector<1xf32>
    %1 = vector.multi_reduction <add>, %0, %cst [1, 2] : vector<1x4x16xf32> to vector<1xf32>
    %2 = vector.shape_cast %1 : vector<1xf32> to vector<1x1x1xf32>
    %cst_2 = arith.constant 6.400000e+01 : f32
    %3 = vector.broadcast %cst_2 : f32 to vector<1x1x1xf32>
    %4 = arith.divf %2, %3 : vector<1x1x1xf32>
    %5 = vector.broadcast %4 : vector<1x1x1xf32> to vector<1x4x16xf32>
    %6 = arith.subf %0, %5 : vector<1x4x16xf32>
    %7 = arith.mulf %6, %6 : vector<1x4x16xf32>
    %cst_3 = arith.constant dense<0.000000e+00> : vector<1xf32>
    %8 = vector.multi_reduction <add>, %7, %cst_3 [1, 2] : vector<1x4x16xf32> to vector<1xf32>
    %9 = vector.shape_cast %8 : vector<1xf32> to vector<1x1x1xf32>
    %cst_4 = arith.constant 6.400000e+01 : f32
    %10 = vector.broadcast %cst_4 : f32 to vector<1x1x1xf32>
    %11 = arith.divf %9, %10 : vector<1x1x1xf32>
    %12 = vector.broadcast %4 : vector<1x1x1xf32> to vector<1x4x16xf32>
    %13 = arith.subf %0, %12 : vector<1x4x16xf32>
    %cst_5 = arith.constant 9.99999974E-6 : f32
    %14 = vector.broadcast %cst_5 : f32 to vector<1x1x1xf32>
    %15 = arith.addf %11, %14 : vector<1x1x1xf32>
    %16 = math.rsqrt %15 : vector<1x1x1xf32>
    %17 = vector.broadcast %16 : vector<1x1x1xf32> to vector<1x4x16xf32>
    %18 = arith.mulf %13, %17 : vector<1x4x16xf32>
    %c0_6 = arith.constant 0 : index
    %19 = memref.load %arg1[%c0_6] : memref<5xf32, #tpu.memory_space<smem>>
    %20 = vector.broadcast %19 : f32 to vector<1x4x16xf32>
    %21 = arith.mulf %18, %20 : vector<1x4x16xf32>
    %c1 = arith.constant 1 : index
    %22 = memref.load %arg1[%c1] : memref<5xf32, #tpu.memory_space<smem>>
    %23 = vector.broadcast %22 : f32 to vector<1x4x16xf32>
    %24 = arith.addf %21, %23 : vector<1x4x16xf32>
    %cst_7 = arith.constant 0.000000e+00 : f32
    %25 = vector.broadcast %cst_7 : f32 to vector<1x4x16xf32>
    %26 = arith.maximumf %24, %25 : vector<1x4x16xf32>
    %c2 = arith.constant 2 : index
    %27 = memref.load %arg1[%c2] : memref<5xf32, #tpu.memory_space<smem>>
    %cst_8 = arith.constant 0.000000e+00 : f32
    %28 = vector.broadcast %cst_8 : f32 to vector<1x4x16xf32>
    %29 = arith.minimumf %24, %28 : vector<1x4x16xf32>
    %30 = vector.broadcast %27 : f32 to vector<1x4x16xf32>
    %31 = arith.mulf %30, %29 : vector<1x4x16xf32>
    %32 = arith.addf %26, %31 : vector<1x4x16xf32>
    %c3 = arith.constant 3 : index
    %33 = memref.load %arg1[%c3] : memref<5xf32, #tpu.memory_space<smem>>
    %34 = vector.broadcast %33 : f32 to vector<1x4x16xf32>
    %35 = arith.mulf %34, %32 : vector<1x4x16xf32>
    %c4 = arith.constant 4 : index
    %36 = memref.load %arg1[%c4] : memref<5xf32, #tpu.memory_space<smem>>
    %37 = vector.broadcast %36 : f32 to vector<1x4x16xf32>
    %38 = arith.addf %35, %37 : vector<1x4x16xf32>
    %39 = arith.truncf %38 : vector<1x4x16xf32> to vector<1x4x16xbf16>
    %c0_9 = arith.constant 0 : index
    %c0_10 = arith.constant 0 : index
    %c0_11 = arith.constant 0 : index
    %40 = vector.load %arg3[%c0_9, %c0_10, %c0_11] : memref<1x4x16xbf16, #tpu.memory_space<vmem>>, vector<1x4x16xbf16>
    tpu.vector_store %arg3[%c0_9, %c0_10, %c0_11], %39 {strides = array<i32>} : memref<1x4x16xbf16, #tpu.memory_space<vmem>>, vector<1x4x16xbf16>,
    return
  }
  func.func @transform_0(%arg0: i32) -> i32 {
    %c0_i32 = arith.constant 0 : i32
    %c0_i32_0 = arith.constant 0 : i32
    return %c0_i32 : i32
  }
  func.func @transform_1(%arg0: i32) -> (i32, i32, i32) {
    %c0_i32 = arith.constant 0 : i32
    %c0_i32_0 = arith.constant 0 : i32
    %c0_i32_1 = arith.constant 0 : i32
    return %arg0, %c0_i32, %c0_i32_0 : i32, i32, i32
  }
  func.func @transform_2(%arg0: i32) -> (i32, i32, i32) {
    %c0_i32 = arith.constant 0 : i32
    %c0_i32_0 = arith.constant 0 : i32
    %c0_i32_1 = arith.constant 0 : i32
    return %arg0, %c0_i32, %c0_i32_0 : i32, i32, i32
  }
}

module attributes {stable_mosaic.version = 11 : i64} {
  func.func @_gemm_bias_kernel(%arg0: i32, %arg1: memref<8x16xbf16, #tpu.memory_space<vmem>>, %arg2: memref<16x16xbf16, #tpu.memory_space<vmem>>, %arg3: memref<1x16xf32, #tpu.memory_space<vmem>>, %arg4: memref<8x16xf32, #tpu.memory_space<vmem>>) attributes {dimension_semantics = [#tpu.dimension_semantics<parallel>], iteration_bounds = array<i64: 1>, scalar_prefetch = 0 : i64, scratch_operands = 0 : i64, tpu.core_type = #tpu.core_type<tc>, window_params = [{transform_indices = @transform_0, window_bounds = array<i64: 8, 16>}, {pipeline_mode = #tpu.pipeline_mode<synchronous>, transform_indices = @transform_1, window_bounds = array<i64: 16, 16>}, {pipeline_mode = #tpu.pipeline_mode<synchronous>, transform_indices = @transform_2, window_bounds = array<i64: 1, 16>}, {transform_indices = @transform_3, window_bounds = array<i64: 8, 16>}]} {
    %c0 = arith.constant 0 : index
    %c0_0 = arith.constant 0 : index
    %0 = vector.load %arg1[%c0, %c0_0] : memref<8x16xbf16, #tpu.memory_space<vmem>>, vector<8x16xbf16>
    %c0_1 = arith.constant 0 : index
    %c0_2 = arith.constant 0 : index
    %1 = vector.load %arg2[%c0_1, %c0_2] : memref<16x16xbf16, #tpu.memory_space<vmem>>, vector<16x16xbf16>
    %cst = arith.constant dense<0.000000e+00> : vector<8x16xf32>
    %2 = tpu.matmul %0, %1, %cst {dimension_numbers = #tpu.dot_dimension_numbers<[1], [0], [0], [1], [0, 0, 1, 1], [], []>} : vector<8x16xbf16>, vector<16x16xbf16>, vector<8x16xf32> -> vector<8x16xf32>
    %c0_3 = arith.constant 0 : index
    %c0_4 = arith.constant 0 : index
    %3 = vector.load %arg3[%c0_3, %c0_4] : memref<1x16xf32, #tpu.memory_space<vmem>>, vector<1x16xf32>
    %4 = vector.broadcast %3 : vector<1x16xf32> to vector<8x16xf32>
    %5 = arith.addf %2, %4 : vector<8x16xf32>
    %c0_5 = arith.constant 0 : index
    %c0_6 = arith.constant 0 : index
    %6 = vector.load %arg4[%c0_5, %c0_6] : memref<8x16xf32, #tpu.memory_space<vmem>>, vector<8x16xf32>
    tpu.vector_store %arg4[%c0_5, %c0_6], %5 {strides = array<i32>} : memref<8x16xf32, #tpu.memory_space<vmem>>, vector<8x16xf32>,
    return
  }
  func.func @transform_0(%arg0: i32) -> (i32, i32) {
    %c0_i32 = arith.constant 0 : i32
    %c0_i32_0 = arith.constant 0 : i32
    return %arg0, %c0_i32 : i32, i32
  }
  func.func @transform_1(%arg0: i32) -> (i32, i32) {
    %c0_i32 = arith.constant 0 : i32
    %c0_i32_0 = arith.constant 0 : i32
    %c0_i32_1 = arith.constant 0 : i32
    return %c0_i32, %c0_i32_0 : i32, i32
  }
  func.func @transform_2(%arg0: i32) -> (i32, i32) {
    %c0_i32 = arith.constant 0 : i32
    %c0_i32_0 = arith.constant 0 : i32
    %c0_i32_1 = arith.constant 0 : i32
    return %c0_i32, %c0_i32_0 : i32, i32
  }
  func.func @transform_3(%arg0: i32) -> (i32, i32) {
    %c0_i32 = arith.constant 0 : i32
    %c0_i32_0 = arith.constant 0 : i32
    return %arg0, %c0_i32 : i32, i32
  }
}

</mosaic_0001>

<llo_original>
// kernel: mul.1
$region0: #{mul.1}
  #allocation0 [shape = 's32[1]{0}', space=sflag, size = 0x4, scoped, tag = 'scoped memory for mul.1']
  %s0 = inlined_call_operand.vmem [shape: f32[2,1,8], index: 0, kind: input, shape index: {}]
  %s1 = inlined_call_operand.vmem [shape: f32[2,1,8], index: 1, kind: input, shape index: {}]
  %s2 = inlined_call_operand.vmem [shape: f32[2,1,8], index: 2, kind: output, shape index: {}]
  %v3 = vld [vmem:[%s0] sm:$0x1]
  %v4 = vld [vmem:[%s1] sm:$0x1]
  %5 = xla_tuple %v3, %v4
  %6 = xla_tuple %5
  %v7 = vmul.f32 %v3, %v4
  %8 = xla_tuple %v7
  %9 = vst [vmem:[%s2] sm:$0x1] %v7
  %s10 = scalar_lea.vmem %s0, 1
  %v11 = vld [vmem:[%s10] sm:$0x1]
  %s12 = scalar_lea.vmem %s1, 1
  %v13 = vld [vmem:[%s12] sm:$0x1]
  %14 = xla_tuple %v11, %v13
  %15 = xla_tuple %14
  %v16 = vmul.f32 %v11, %v13
  %17 = xla_tuple %v16
  %s18 = scalar_lea.vmem %s2, 1
  %19 = vst [vmem:[%s18] sm:$0x1] %v16

// kernel: mask_decoder_forward.16
$region0: #{mask_decoder_forward.16}
  #allocation0 [shape = 'u32[]', space=smem, size = 0x4, offset = 0x4, fixed_abs, tag = 'smem constant byte address 0x4 - core index']
  #allocation1 [shape = 'u32[144,128]{1,0:T(1,128)}', space=vmem, size = 0x12000, scoped, tag = 'internal scratch']
  %s0 = inlined_call_operand.vmem [shape: bf16[2,32,8], index: 0, kind: input, shape index: {}]
  %s1 = inlined_call_operand.vmem [shape: f32[2,2,8], index: 1, kind: output, shape index: {}]
  %s2 = sld [smem:[#allocation0]]
  $region41: #{mask_decoder_forward.16} parent=0
    _
  %s4 = ssub.s32 1, %s2
  %s5 = scalar_select 0, %s4, %s2
  loop: start=0, step=1, limit=4
  $region2: #{mask_decoder_forward.16} parent=0 // loop_pre_header
    _
  $region3: #{mask_decoder_forward.16} parent=0 // loop_header
    %s7 = sphi 0, %s11
    %p8 = scmp.ge.s32.totalorder %s7, 4
    %s14 = sphi 0, %s26
    %s15 = sphi 0, %s22
    %s16 = sphi 0, %s14
    %s17 = sphi 0, %s15
    %s18 = sphi 0, %s16
    %s19 = sphi 0, %s17
    %s31 = sphi 0, %s33
    %s34 = sphi 0, %s31
    %s35 = sphi 0, %s34
    %s51 = sphi 0, %s35
    %s57 = sphi 0, %s59
    %s60 = sphi 0, %s57
    %s61 = sphi 0, %s60
    %s77 = sphi 0, %s61
  $region4: #{mask_decoder_forward.16} parent=0 // loop_header_branch
    %10 = sbr.rel (%p8) target = $region8
  $region5: #{mask_decoder_forward.16} parent=0 // loop_body
    %s12 = ssub.s32 %s7, 1
    %s13 = ssub.s32 %s7, 2
    %s20 = sadd.s32 1, %s15
    %p21 = scmp.ge.s32.totalorder %s20, 1
    %s22 = scalar_select %p21, 0, %s20
    %s23 = sadd.s32 1, %s14
    %s24 = scalar_select %p21, %s23, %s14
    %p25 = scmp.ge.s32.totalorder %s24, 2
    %s26 = scalar_select %p25, 0, %s24
    %s27 = ssub.s32 %s14, %s26
    %s28 = ssub.s32 %s15, %s22
    %s29 = sor.u32 %s27, %s28
    %p30 = scmp.eq.s32.totalorder %s29, 0
    %s32 = sadd.s32 %s31, 1
    %s33 = scalar_select %p30, %s31, %s32
    %p36 = pneg %p30
    %p37 = scmp.eq.s32.totalorder %s7, 1
    %p38 = por %p36, %p37
    %p39 = scmp.ne.s32.totalorder %s31, %s34
    %p40 = scmp.eq.s32.totalorder %s7, 0
    %p41 = por %p39, %p40
    %p42 = scmp.ne.s32.totalorder %s31, %s34
    %p43 = scmp.eq.s32.totalorder %s12, 1
    %p44 = por %p42, %p43
    %p45 = scmp.ne.s32.totalorder %s34, %s35
    %p46 = scmp.eq.s32.totalorder %s12, 0
    %p47 = por %p45, %p46
    %p48 = scmp.ne.s32.totalorder %s34, %s35
    %p49 = scmp.eq.s32.totalorder %s13, 1
    %p50 = por %p48, %p49
    %p52 = scmp.ne.s32.totalorder %s35, %s51
    %p53 = scmp.eq.s32.totalorder %s13, 0
    %p54 = por %p52, %p53
    %s55 = ssub.s32 %s14, %s26
    %p56 = scmp.eq.s32.totalorder %s55, 0
    %s58 = sadd.s32 %s57, 1
    %s59 = scalar_select %p56, %s57, %s58
    %p62 = pneg %p56
    %p63 = scmp.eq.s32.totalorder %s7, 1
    %p64 = por %p62, %p63
    %p65 = scmp.ne.s32.totalorder %s57, %s60
    %p66 = scmp.eq.s32.totalorder %s7, 0
    %p67 = por %p65, %p66
    %p68 = scmp.ne.s32.totalorder %s57, %s60
    %p69 = scmp.eq.s32.totalorder %s12, 1
    %p70 = por %p68, %p69
    %p71 = scmp.ne.s32.totalorder %s60, %s61
    %p72 = scmp.eq.s32.totalorder %s12, 0
    %p73 = por %p71, %p72
    %p74 = scmp.ne.s32.totalorder %s60, %s61
    %p75 = scmp.eq.s32.totalorder %s13, 1
    %p76 = por %p74, %p75
    %p78 = scmp.ne.s32.totalorder %s61, %s77
    %p79 = scmp.eq.s32.totalorder %s13, 0
    %p80 = por %p78, %p79
    %p81 = scmp.le.s32.totalorder 1, %s7
    %p82 = scmp.lt.s32.totalorder %s7, 3
    %p83 = pnand %p81, %p82
    %p84 = pneg %p83
    // Predicated region
    $region9: #{mask_decoder_forward.16} parent=5 // pred_check
      _
    $region10: #{mask_decoder_forward.16} parent=5 // pred_check_branch
      %86 = sbr.rel (%p83) target = $region12
    $region11: #{mask_decoder_forward.16} parent=5 // pred_region
      %s87 = ssub.s32 %s7, 1
    $region12: #{mask_decoder_forward.16} parent=5 // pred_fallthru
      _
    %p88 = scmp.lt.s32.totalorder %s7, 2
    // Predicated region
    $region13: #{mask_decoder_forward.16} parent=5 // pred_check
      %p89 = pneg %p88
    $region14: #{mask_decoder_forward.16} parent=5 // pred_check_branch
      %91 = sbr.rel (%p89) target = $region16
    $region15: #{mask_decoder_forward.16} parent=5 // pred_region
      // Predicated region
      $region17: #{mask_decoder_forward.16} parent=15 // pred_check
        %p92 = pneg %p41
      $region18: #{mask_decoder_forward.16} parent=15 // pred_check_branch
        %94 = sbr.rel (%p92) target = $region20
      $region19: #{mask_decoder_forward.16} parent=15 // pred_region
        %s95 = smul.u32 4, %s15
        %p96 = scmp.lt.s32.totalorder %s14, 1
        %s97 = scalar_select %p96, %s14, 1
        %p98 = scmp.lt.s32.totalorder %s95, 3
        %s99 = scalar_select %p98, %s95, 3
        %s100 = smul.addr %s97, 4
        %s101 = sadd.s32 %s99, %s100
        %s102 = smul.addr %s101, 4
        %s103 = scalar_lea.vmem %s0, %s102
        %s104 = smul.u32 4, %s15
      $region20: #{mask_decoder_forward.16} parent=15 // pred_fallthru
        _
    $region16: #{mask_decoder_forward.16} parent=5 // pred_fallthru
      _
    %p105 = scmp.le.s32.totalorder 1, %s7
    %p106 = scmp.lt.s32.totalorder %s7, 3
    %p107 = pnand %p105, %p106
    %p108 = pneg %p107
    // Predicated region
    $region21: #{mask_decoder_forward.16} parent=5 // pred_check
      _
    $region22: #{mask_decoder_forward.16} parent=5 // pred_check_branch
      %110 = sbr.rel (%p107) target = $region24
    $region23: #{mask_decoder_forward.16} parent=5 // pred_region
      %s111 = ssub.s32 %s7, 1
      %s112 = smul.u32 4, %s17
      %p113 = scmp.lt.s32.totalorder %s16, 1
      %s114 = scalar_select %p113, %s16, 1
      %p115 = scmp.lt.s32.totalorder %s112, 3
      %s116 = scalar_select %p115, %s112, 3
      %s117 = smul.addr %s114, 4
      %s118 = sadd.s32 %s116, %s117
      %s119 = smul.addr %s118, 4
      %s120 = scalar_lea.vmem %s0, %s119
      %p121 = pneg %p47
      %p122 = pneg %p44
      %p123 = pneg %p73
      %p124 = pneg %p70
      %p125 = scmp.lt.s32.totalorder %s16, 1
      %s126 = scalar_select %p125, %s16, 1
      %s127 = smul.addr %s126, 2
      %s128 = scalar_lea.vmem %s1, %s127
      %s129 = smul.u32 4, %s17
      %p130 = scmp.lt.s32.totalorder %s16, 1
      %s131 = scalar_select %p130, %s16, 1
      %p132 = scmp.lt.s32.totalorder %s129, 3
      %s133 = scalar_select %p132, %s129, 3
      %s134 = smul.addr %s131, 4
      %s135 = sadd.s32 %s133, %s134
      %s136 = smul.addr %s135, 4
      %s137 = scalar_lea.vmem %s0, %s136
      %s138 = smul.u32 4, %s17
      %p139 = scmp.lt.s32.totalorder %s16, 1
      %s140 = scalar_select %p139, %s16, 1
      %s141 = smul.addr %s140, 2
      %s142 = scalar_lea.vmem %s1, %s141
      %p143 = scmp.eq.s32.totalorder %s17, 0
      // Predicated region
      $region25: #{mask_decoder_forward.16} parent=23 // pred_check
        %p144 = pneg %p143
      $region26: #{mask_decoder_forward.16} parent=23 // pred_check_branch
        %146 = sbr.rel (%p144) target = $region28
      $region27: #{mask_decoder_forward.16} parent=23 // pred_region
        %vm147 = vcmask 58368
        %148 = vst.msk [vmem:[%s142] sm:$0x3] %vm147, 0.0
      $region28: #{mask_decoder_forward.16} parent=23 // pred_fallthru
        _
      %v149 = vld [vmem:[%s137] sm:$0xf]
      %v150 = vld [vmem:[%s137 + $0x4] sm:$0xf]
      %v151 = vld [vmem:[%s137 + $0x8] sm:$0xf]
      %v152 = vld [vmem:[%s137 + $0xc] sm:$0xf]
      %v153 = vunpack.c.l.bf16 %v149
      %v154 = vunpack.c.l.bf16 %v150
      %v155 = vunpack.c.l.bf16 %v151
      %v156 = vunpack.c.l.bf16 %v152
      %vm157 = vcmask 64512
      %v158 = vsel %vm157, %v153, 0.0
      %v159 = vsel %vm157, %v154, 0.0
      %v160 = vadd.f32 %v158, %v159
      %v161 = vsel %vm157, %v155, 0.0
      %v162 = vadd.f32 %v160, %v161
      %v163 = vsel %vm157, %v156, 0.0
      %v164 = vadd.f32 %v162, %v163
      %v165 = vrot.slane %v164, 4
      %v166 = vadd.f32 %v164, %v165
      %v167 = vrot.slane %v166, 2
      %v168 = vadd.f32 %v166, %v167
      %v169 = vrot.slane %v168, 1
      %v170 = vadd.f32 %v168, %v169
      %v171 = vmul.f32 %v153, %v153
      %v172 = vmul.f32 %v154, %v154
      %v173 = vmul.f32 %v155, %v155
      %v174 = vmul.f32 %v156, %v156
      %v175 = vsel %vm157, %v171, 0.0
      %v176 = vsel %vm157, %v172, 0.0
      %v177 = vadd.f32 %v175, %v176
      %v178 = vsel %vm157, %v173, 0.0
      %v179 = vadd.f32 %v177, %v178
      %v180 = vsel %vm157, %v174, 0.0
      %v181 = vadd.f32 %v179, %v180
      %v182 = vrot.slane %v181, 4
      %v183 = vadd.f32 %v181, %v182
      %v184 = vrot.slane %v183, 2
      %v185 = vadd.f32 %v183, %v184
      %v186 = vrot.slane %v185, 1
      %v187 = vadd.f32 %v185, %v186
      %v188 = vld [vmem:[%s142] sm:$0x3]
      %vm189 = vcmask 1040384
      %v190 = vsel %vm189, %v170, %v187
      %v191 = vadd.f32 %v188, %v190
      %vm192 = vcmask 58368
      %193 = vst.msk [vmem:[%s142] sm:$0x3] %vm192, %v191
      %p194 = scmp.lt.s32.totalorder %s16, 1
      %s195 = scalar_select %p194, %s16, 1
      %s196 = smul.addr %s195, 2
      %s197 = scalar_lea.vmem %s1, %s196
      // Predicated region
      $region29: #{mask_decoder_forward.16} parent=23 // pred_check
        %p198 = pneg %p70
      $region30: #{mask_decoder_forward.16} parent=23 // pred_check_branch
        %200 = sbr.rel (%p198) target = $region32
      $region31: #{mask_decoder_forward.16} parent=23 // pred_region
        _
      $region32: #{mask_decoder_forward.16} parent=23 // pred_fallthru
        _
    $region24: #{mask_decoder_forward.16} parent=5 // pred_fallthru
      _
    %p201 = scmp.le.s32.totalorder 2, %s7
    // Predicated region
    $region33: #{mask_decoder_forward.16} parent=5 // pred_check
      %p202 = pneg %p201
    $region34: #{mask_decoder_forward.16} parent=5 // pred_check_branch
      %204 = sbr.rel (%p202) target = $region36
    $region35: #{mask_decoder_forward.16} parent=5 // pred_region
      %s205 = ssub.s32 %s7, 2
      // Predicated region
      $region37: #{mask_decoder_forward.16} parent=35 // pred_check
        %p206 = pneg %p76
      $region38: #{mask_decoder_forward.16} parent=35 // pred_check_branch
        %208 = sbr.rel (%p206) target = $region40
      $region39: #{mask_decoder_forward.16} parent=35 // pred_region
        %p209 = scmp.lt.s32.totalorder %s18, 1
        %s210 = scalar_select %p209, %s18, 1
        %s211 = smul.addr %s210, 2
        %s212 = scalar_lea.vmem %s1, %s211
      $region40: #{mask_decoder_forward.16} parent=35 // pred_fallthru
        _
    $region36: #{mask_decoder_forward.16} parent=5 // pred_fallthru
      _
  $region6: #{mask_decoder_forward.16} parent=0 // loop_footer
    %s11 = sadd.s32 1, %s7
  $region7: #{mask_decoder_forward.16} parent=0 // loop_footer_branch
    %6 = sbr.rel target = $region3
  $region8: #{mask_decoder_forward.16} parent=0 // loop_exit
    _

// kernel: mask_decoder_forward.15
$region0: #{mask_decoder_forward.15}
  #allocation0 [shape = 'u32[]', space=smem, size = 0x4, offset = 0x4, fixed_abs, tag = 'smem constant byte address 0x4 - core index']
  #allocation1 [shape = 'u32[144,128]{1,0:T(1,128)}', space=vmem, size = 0x12000, scoped, tag = 'internal scratch']
  %s0 = inlined_call_operand.vmem [shape: bf16[160,8], index: 0, kind: input, shape index: {}]
  %s1 = inlined_call_operand.vmem [shape: bf16[8,24], index: 1, kind: input, shape index: {}]
  %s2 = inlined_call_operand.vmem [shape: bf16[8,24], index: 2, kind: input, shape index: {}]
  %s3 = inlined_call_operand.vmem [shape: bf16[8,24], index: 3, kind: input, shape index: {}]
  %s4 = inlined_call_operand.vmem [shape: bf16[160,24], index: 4, kind: output, shape index: {}]
  %s5 = sld [smem:[#allocation0]]
  $region49: #{mask_decoder_forward.15} parent=0
    _
  %s7 = ssub.s32 1, %s5
  %s8 = scalar_select 0, %s7, %s5
  loop: start=0, step=1, limit=4
  $region2: #{mask_decoder_forward.15} parent=0 // loop_pre_header
    _
  $region3: #{mask_decoder_forward.15} parent=0 // loop_header
    %s10 = sphi 0, %s14
    %p11 = scmp.ge.s32.totalorder %s10, 4
    %s20 = sphi 0, %s22
    %s23 = sphi 0, %s20
    %s24 = sphi 0, %s23
    %s40 = sphi 0, %s24
    %s44 = sphi 0, %s44
    %s46 = sphi 0, %s44
    %s47 = sphi 0, %s46
    %s61 = sphi 0, %s47
    %s65 = sphi 0, %s65
    %s67 = sphi 0, %s65
    %s68 = sphi 0, %s67
    %s82 = sphi 0, %s68
    %s86 = sphi 0, %s86
    %s88 = sphi 0, %s86
    %s89 = sphi 0, %s88
    %s103 = sphi 0, %s89
    %s109 = sphi 0, %s111
    %s112 = sphi 0, %s109
    %s113 = sphi 0, %s112
    %s129 = sphi 0, %s113
  $region4: #{mask_decoder_forward.15} parent=0 // loop_header_branch
    %13 = sbr.rel (%p11) target = $region8
  $region5: #{mask_decoder_forward.15} parent=0 // loop_body
    %s15 = ssub.s32 %s10, 1
    %s16 = ssub.s32 %s10, 2
    %s17 = sadd.s32 %s10, 1
    %s18 = ssub.s32 %s10, %s17
    %p19 = scmp.eq.s32.totalorder %s18, 0
    %s21 = sadd.s32 %s20, 1
    %s22 = scalar_select %p19, %s20, %s21
    %p25 = pneg %p19
    %p26 = scmp.eq.s32.totalorder %s10, 1
    %p27 = por %p25, %p26
    %p28 = scmp.ne.s32.totalorder %s20, %s23
    %p29 = scmp.eq.s32.totalorder %s10, 0
    %p30 = por %p28, %p29
    %p31 = scmp.ne.s32.totalorder %s20, %s23
    %p32 = scmp.eq.s32.totalorder %s15, 1
    %p33 = por %p31, %p32
    %p34 = scmp.ne.s32.totalorder %s23, %s24
    %p35 = scmp.eq.s32.totalorder %s15, 0
    %p36 = por %p34, %p35
    %p37 = scmp.ne.s32.totalorder %s23, %s24
    %p38 = scmp.eq.s32.totalorder %s16, 1
    %p39 = por %p37, %p38
    %p41 = scmp.ne.s32.totalorder %s24, %s40
    %p42 = scmp.eq.s32.totalorder %s16, 0
    %p43 = por %p41, %p42
    %s45 = sadd.s32 %s44, 1
    %p48 = scmp.eq.s32.totalorder %s10, 1
    %p49 = scmp.ne.s32.totalorder %s44, %s46
    %p50 = scmp.eq.s32.totalorder %s10, 0
    %p51 = por %p49, %p50
    %p52 = scmp.ne.s32.totalorder %s44, %s46
    %p53 = scmp.eq.s32.totalorder %s15, 1
    %p54 = por %p52, %p53
    %p55 = scmp.ne.s32.totalorder %s46, %s47
    %p56 = scmp.eq.s32.totalorder %s15, 0
    %p57 = por %p55, %p56
    %p58 = scmp.ne.s32.totalorder %s46, %s47
    %p59 = scmp.eq.s32.totalorder %s16, 1
    %p60 = por %p58, %p59
    %p62 = scmp.ne.s32.totalorder %s47, %s61
    %p63 = scmp.eq.s32.totalorder %s16, 0
    %p64 = por %p62, %p63
    %s66 = sadd.s32 %s65, 1
    %p69 = scmp.eq.s32.totalorder %s10, 1
    %p70 = scmp.ne.s32.totalorder %s65, %s67
    %p71 = scmp.eq.s32.totalorder %s10, 0
    %p72 = por %p70, %p71
    %p73 = scmp.ne.s32.totalorder %s65, %s67
    %p74 = scmp.eq.s32.totalorder %s15, 1
    %p75 = por %p73, %p74
    %p76 = scmp.ne.s32.totalorder %s67, %s68
    %p77 = scmp.eq.s32.totalorder %s15, 0
    %p78 = por %p76, %p77
    %p79 = scmp.ne.s32.totalorder %s67, %s68
    %p80 = scmp.eq.s32.totalorder %s16, 1
    %p81 = por %p79, %p80
    %p83 = scmp.ne.s32.totalorder %s68, %s82
    %p84 = scmp.eq.s32.totalorder %s16, 0
    %p85 = por %p83, %p84
    %s87 = sadd.s32 %s86, 1
    %p90 = scmp.eq.s32.totalorder %s10, 1
    %p91 = scmp.ne.s32.totalorder %s86, %s88
    %p92 = scmp.eq.s32.totalorder %s10, 0
    %p93 = por %p91, %p92
    %p94 = scmp.ne.s32.totalorder %s86, %s88
    %p95 = scmp.eq.s32.totalorder %s15, 1
    %p96 = por %p94, %p95
    %p97 = scmp.ne.s32.totalorder %s88, %s89
    %p98 = scmp.eq.s32.totalorder %s15, 0
    %p99 = por %p97, %p98
    %p100 = scmp.ne.s32.totalorder %s88, %s89
    %p101 = scmp.eq.s32.totalorder %s16, 1
    %p102 = por %p100, %p101
    %p104 = scmp.ne.s32.totalorder %s89, %s103
    %p105 = scmp.eq.s32.totalorder %s16, 0
    %p106 = por %p104, %p105
    %s107 = ssub.s32 %s10, %s17
    %p108 = scmp.eq.s32.totalorder %s107, 0
    %s110 = sadd.s32 %s109, 1
    %s111 = scalar_select %p108, %s109, %s110
    %p114 = pneg %p108
    %p115 = scmp.eq.s32.totalorder %s10, 1
    %p116 = por %p114, %p115
    %p117 = scmp.ne.s32.totalorder %s109, %s112
    %p118 = scmp.eq.s32.totalorder %s10, 0
    %p119 = por %p117, %p118
    %p120 = scmp.ne.s32.totalorder %s109, %s112
    %p121 = scmp.eq.s32.totalorder %s15, 1
    %p122 = por %p120, %p121
    %p123 = scmp.ne.s32.totalorder %s112, %s113
    %p124 = scmp.eq.s32.totalorder %s15, 0
    %p125 = por %p123, %p124
    %p126 = scmp.ne.s32.totalorder %s112, %s113
    %p127 = scmp.eq.s32.totalorder %s16, 1
    %p128 = por %p126, %p127
    %p130 = scmp.ne.s32.totalorder %s113, %s129
    %p131 = scmp.eq.s32.totalorder %s16, 0
    %p132 = por %p130, %p131
    %p133 = scmp.le.s32.totalorder 1, %s10
    %p134 = scmp.lt.s32.totalorder %s10, 3
    %p135 = pnand %p133, %p134
    %p136 = pneg %p135
    // Predicated region
    $region9: #{mask_decoder_forward.15} parent=5 // pred_check
      _
    $region10: #{mask_decoder_forward.15} parent=5 // pred_check_branch
      %138 = sbr.rel (%p135) target = $region12
    $region11: #{mask_decoder_forward.15} parent=5 // pred_region
      %s139 = ssub.s32 %s10, 1
      // Predicated region
      $region13: #{mask_decoder_forward.15} parent=11 // pred_check
        %p140 = pneg %p57
      $region14: #{mask_decoder_forward.15} parent=11 // pred_check_branch
        %142 = sbr.rel (%p140) target = $region16
      $region15: #{mask_decoder_forward.15} parent=11 // pred_region
        _
      $region16: #{mask_decoder_forward.15} parent=11 // pred_fallthru
        _
      // Predicated region
      $region17: #{mask_decoder_forward.15} parent=11 // pred_check
        %p143 = pneg %p78
      $region18: #{mask_decoder_forward.15} parent=11 // pred_check_branch
        %145 = sbr.rel (%p143) target = $region20
      $region19: #{mask_decoder_forward.15} parent=11 // pred_region
        _
      $region20: #{mask_decoder_forward.15} parent=11 // pred_fallthru
        _
      // Predicated region
      $region21: #{mask_decoder_forward.15} parent=11 // pred_check
        %p146 = pneg %p99
      $region22: #{mask_decoder_forward.15} parent=11 // pred_check_branch
        %148 = sbr.rel (%p146) target = $region24
      $region23: #{mask_decoder_forward.15} parent=11 // pred_region
        _
      $region24: #{mask_decoder_forward.15} parent=11 // pred_fallthru
        _
    $region12: #{mask_decoder_forward.15} parent=5 // pred_fallthru
      _
    %p149 = scmp.lt.s32.totalorder %s10, 2
    // Predicated region
    $region25: #{mask_decoder_forward.15} parent=5 // pred_check
      %p150 = pneg %p149
    $region26: #{mask_decoder_forward.15} parent=5 // pred_check_branch
      %152 = sbr.rel (%p150) target = $region28
    $region27: #{mask_decoder_forward.15} parent=5 // pred_region
      // Predicated region
      $region29: #{mask_decoder_forward.15} parent=27 // pred_check
        %p153 = pneg %p30
      $region30: #{mask_decoder_forward.15} parent=27 // pred_check_branch
        %155 = sbr.rel (%p153) target = $region32
      $region31: #{mask_decoder_forward.15} parent=27 // pred_region
        %s156 = smul.u32 10, %s10
        %p157 = scmp.lt.s32.totalorder %s156, 19
        %s158 = scalar_select %p157, %s156, 19
        %s159 = smul.addr %s158, 4
        %s160 = scalar_lea.vmem %s0, %s159
        %s161 = smul.u32 10, %s10
      $region32: #{mask_decoder_forward.15} parent=27 // pred_fallthru
        _
    $region28: #{mask_decoder_forward.15} parent=5 // pred_fallthru
      _
    %p162 = scmp.le.s32.totalorder 1, %s10
    %p163 = scmp.lt.s32.totalorder %s10, 3
    %p164 = pnand %p162, %p163
    %p165 = pneg %p164
    // Predicated region
    $region33: #{mask_decoder_forward.15} parent=5 // pred_check
      _
    $region34: #{mask_decoder_forward.15} parent=5 // pred_check_branch
      %167 = sbr.rel (%p164) target = $region36
    $region35: #{mask_decoder_forward.15} parent=5 // pred_region
      %s168 = ssub.s32 %s10, 1
      %s169 = smul.u32 10, %s15
      %p170 = scmp.lt.s32.totalorder %s169, 19
      %s171 = scalar_select %p170, %s169, 19
      %s172 = smul.addr %s171, 4
      %s173 = scalar_lea.vmem %s0, %s172
      %p174 = pneg %p36
      %p175 = pneg %p33
      %p176 = pneg %p57
      %p177 = pneg %p54
      %p178 = pneg %p78
      %p179 = pneg %p75
      %p180 = pneg %p99
      %p181 = pneg %p96
      %p182 = pneg %p125
      %p183 = pneg %p122
      %s184 = smul.u32 10, %s15
      %p185 = scmp.lt.s32.totalorder %s184, 19
      %s186 = scalar_select %p185, %s184, 19
      %s187 = smul.addr %s186, 4
      %s188 = scalar_lea.vmem %s4, %s187
      %s189 = smul.u32 10, %s15
      %p190 = scmp.lt.s32.totalorder %s189, 19
      %s191 = scalar_select %p190, %s189, 19
      %s192 = smul.addr %s191, 4
      %s193 = scalar_lea.vmem %s0, %s192
      %s194 = smul.u32 10, %s15
      %s195 = smul.u32 10, %s15
      %p196 = scmp.lt.s32.totalorder %s195, 19
      %s197 = scalar_select %p196, %s195, 19
      %s198 = smul.addr %s197, 4
      %s199 = scalar_lea.vmem %s4, %s198
      %s200 = smul.u32 10, %s15
      %v202 = vld [vmem:[%s193] sm:$0xf]
      %v203 = vld [vmem:[%s193 + $0x4] sm:$0xf]
      %v204 = vld [vmem:[%s193 + $0x8] sm:$0xf]
      %v205 = vld [vmem:[%s193 + $0xc] sm:$0xf]
      %v206 = vld [vmem:[%s193 + $0x10] sm:$0xf]
      %v207 = vld [vmem:[%s193 + $0x14] sm:$0xf]
      %v208 = vld [vmem:[%s193 + $0x18] sm:$0xf]
      %v209 = vld [vmem:[%s193 + $0x1c] sm:$0xf]
      %v210 = vld [vmem:[%s193 + $0x20] sm:$0xf]
      %v211 = vld [vmem:[%s193 + $0x24] sm:$0xf]
      %v212 = vld [vmem:[%s1] sm:$0xf]
      %v213 = vld [vmem:[%s2] sm:$0xf]
      %v224 = vunpack.c.l.b16 %v202
      %v225 = vunpack.c.l.b16 %v203
      %v226 = vunpack.c.l.b16 %v204
      %v227 = vunpack.c.l.b16 %v205
      %v228 = vunpack.c.l.b16 %v206
      %v229 = vunpack.c.l.b16 %v207
      %v230 = vunpack.c.l.b16 %v208
      %v231 = vunpack.c.l.b16 %v209
      %v232 = vunpack.c.l.b16 %v210
      %v233 = vunpack.c.l.b16 %v211
      %v234 = vpack.c.b16 %v225, %v224
      %v235 = vpack.c.b16 %v227, %v226
      %v236 = vpack.c.b16 %v229, %v228
      %v237 = vpack.c.b16 %v231, %v230
      %v238 = vpack.c.b16 %v233, %v232
      %vm239 = vcmask 64512
      %v241 = vsel %vm239, %v234, 0
      %v244 = vsel %vm239, %v235, 0
      %v247 = vsel %vm239, %v236, 0
      %v250 = vsel %vm239, %v237, 0
      %v253 = vsel %vm239, %v238, 0
      %vm255 = vcmask 1043456
      %v257 = vsel %vm255, %v213, 0
      %259 = vmatprep.subr.bf16.mxu0 0
      %260 = vmatpush1.bf16.msra.mxu0 %v257
      %261 = vmatprep.subr.bf16.mxu0 0
      %262 = vmatpush1.bf16.msra.mxu0 0
      %263 = vmatprep.subr.bf16.mxu0 0
      %264 = vmatpush1.bf16.msra.mxu0 0
      %265 = vmatprep.subr.bf16.mxu0 0
      %266 = vmatpush1.bf16.msra.mxu0 0
      %267 = vmatprep.subr.bf16.mxu0 0
      %268 = vmatpush1.bf16.msra.mxu0 0
      %269 = vmatprep.subr.bf16.mxu0 0
      %270 = vmatpush1.bf16.msra.mxu0 0
      %271 = vmatprep.subr.bf16.mxu0 0
      %272 = vmatpush1.bf16.msra.mxu0 0
      %273 = vmatprep.subr.bf16.mxu0 0
      %274 = vmatpush1.bf16.msra.mxu0 0
      %275 = vmatprep.subr.bf16.mxu0 0
      %276 = vmatpush1.bf16.msra.mxu0 0
      %277 = vmatprep.subr.bf16.mxu0 0
      %278 = vmatpush1.bf16.msra.mxu0 0
      %279 = vmatprep.subr.bf16.mxu0 0
      %280 = vmatpush1.bf16.msra.mxu0 0
      %281 = vmatprep.subr.bf16.mxu0 0
      %282 = vmatpush1.bf16.msra.mxu0 0
      %283 = vmatprep.subr.bf16.mxu0 0
      %284 = vmatpush1.bf16.msra.mxu0 0
      %285 = vmatprep.subr.bf16.mxu0 0
      %286 = vmatpush1.bf16.msra.mxu0 0
      %287 = vmatprep.subr.bf16.mxu0 0
      %288 = vmatpush1.bf16.msra.mxu0 0
      %289 = vmatprep.subr.bf16.mxu0 0
      %290 = vmatpush1.bf16.msra.mxu0 0
      %291 = vmatprep.mubr.bf16.mxu0 0
      %292 = vmatmul.mubr.bf16.gmra.mrb[0].mxu0 %v241
      %v293 = vpop.f32.mrb[0].mxu0
      %v294 = vadd.f32 0.0, %v293
      %v295 = vpop.f32.mrb[0].mxu0
      %v296 = vpop.f32.mrb[0].mxu0
      %v297 = vadd.f32 0.0, %v296
      %v298 = vpop.f32.mrb[0].mxu0
      %299 = vmatprep.mubr.bf16.mxu0 0
      %300 = vmatmul.mubr.bf16.gmra.mrb[0].mxu0 %v244
      %v301 = vpop.f32.mrb[0].mxu0
      %v302 = vadd.f32 0.0, %v301
      %v303 = vpop.f32.mrb[0].mxu0
      %v304 = vpop.f32.mrb[0].mxu0
      %v305 = vadd.f32 0.0, %v304
      %v306 = vpop.f32.mrb[0].mxu0
      %307 = vmatprep.mubr.bf16.mxu0 0
      %308 = vmatmul.mubr.bf16.gmra.mrb[0].mxu0 %v247
      %v309 = vpop.f32.mrb[0].mxu0
      %v310 = vadd.f32 0.0, %v309
      %v311 = vpop.f32.mrb[0].mxu0
      %v312 = vpop.f32.mrb[0].mxu0
      %v313 = vadd.f32 0.0, %v312
      %v314 = vpop.f32.mrb[0].mxu0
      %315 = vmatprep.mubr.bf16.mxu0 0
      %316 = vmatmul.mubr.bf16.gmra.mrb[0].mxu0 %v250
      %v317 = vpop.f32.mrb[0].mxu0
      %v318 = vadd.f32 0.0, %v317
      %v319 = vpop.f32.mrb[0].mxu0
      %v320 = vpop.f32.mrb[0].mxu0
      %v321 = vadd.f32 0.0, %v320
      %v322 = vpop.f32.mrb[0].mxu0
      %323 = vmatprep.mubr.bf16.mxu0 0
      %324 = vmatmul.mubr.bf16.gmra.mrb[0].mxu0 %v253
      %v325 = vpop.f32.mrb[0].mxu0
      %v326 = vadd.f32 0.0, %v325
      %v327 = vpop.f32.mrb[0].mxu0
      %v328 = vpop.f32.mrb[0].mxu0
      %v329 = vadd.f32 0.0, %v328
      %v330 = vpop.f32.mrb[0].mxu0
      %331 = vdwg.mxu0
      %vm342 = vcmask 1046528
      %v343 = vrot.slane %v294, 1
      %v344 = vrot.slane %v297, 1
      %v345 = vsel %vm342, %v343, %v344
      %v346 = vrot.slane %v302, 1
      %v347 = vsel %vm342, %v344, %v346
      %v348 = vrot.slane %v305, 1
      %v349 = vsel %vm342, %v346, %v348
      %v350 = vrot.slane %v310, 1
      %v351 = vsel %vm342, %v348, %v350
      %v352 = vrot.slane %v313, 1
      %v353 = vsel %vm342, %v350, %v352
      %v354 = vrot.slane %v318, 1
      %v355 = vsel %vm342, %v352, %v354
      %v356 = vrot.slane %v321, 1
      %v357 = vsel %vm342, %v354, %v356
      %v358 = vrot.slane %v326, 1
      %v359 = vsel %vm342, %v356, %v358
      %v360 = vrot.slane %v329, 1
      %v361 = vsel %vm342, %v358, %v360
      %v372 = vsel %vm342, %v360, 0.0
      %v374 = vsel %vm255, %v212, 0
      %376 = vmatprep.subr.bf16.mxu0 0
      %377 = vmatpush1.bf16.msra.mxu0 %v374
      %378 = vmatprep.subr.bf16.mxu0 0
      %379 = vmatpush1.bf16.msra.mxu0 0
      %380 = vmatprep.subr.bf16.mxu0 0
      %381 = vmatpush1.bf16.msra.mxu0 0
      %382 = vmatprep.subr.bf16.mxu0 0
      %383 = vmatpush1.bf16.msra.mxu0 0
      %384 = vmatprep.subr.bf16.mxu0 0
      %385 = vmatpush1.bf16.msra.mxu0 0
      %386 = vmatprep.subr.bf16.mxu0 0
      %387 = vmatpush1.bf16.msra.mxu0 0
      %388 = vmatprep.subr.bf16.mxu0 0
      %389 = vmatpush1.bf16.msra.mxu0 0
      %390 = vmatprep.subr.bf16.mxu0 0
      %391 = vmatpush1.bf16.msra.mxu0 0
      %392 = vmatprep.subr.bf16.mxu0 0
      %393 = vmatpush1.bf16.msra.mxu0 0
      %394 = vmatprep.subr.bf16.mxu0 0
      %395 = vmatpush1.bf16.msra.mxu0 0
      %396 = vmatprep.subr.bf16.mxu0 0
      %397 = vmatpush1.bf16.msra.mxu0 0
      %398 = vmatprep.subr.bf16.mxu0 0
      %399 = vmatpush1.bf16.msra.mxu0 0
      %400 = vmatprep.subr.bf16.mxu0 0
      %401 = vmatpush1.bf16.msra.mxu0 0
      %402 = vmatprep.subr.bf16.mxu0 0
      %403 = vmatpush1.bf16.msra.mxu0 0
      %404 = vmatprep.subr.bf16.mxu0 0
      %405 = vmatpush1.bf16.msra.mxu0 0
      %406 = vmatprep.subr.bf16.mxu0 0
      %407 = vmatpush1.bf16.msra.mxu0 0
      %408 = vmatprep.mubr.bf16.mxu0 0
      %409 = vmatmul.mubr.bf16.gmra.mrb[0].mxu0 %v241
      %v410 = vpop.f32.mrb[0].mxu0
      %v411 = vadd.f32 %v345, %v410
      %v412 = vpop.f32.mrb[0].mxu0
      %v413 = vpop.f32.mrb[0].mxu0
      %v414 = vadd.f32 %v347, %v413
      %v415 = vpop.f32.mrb[0].mxu0
      %416 = vmatprep.mubr.bf16.mxu0 0
      %417 = vmatmul.mubr.bf16.gmra.mrb[0].mxu0 %v244
      %v418 = vpop.f32.mrb[0].mxu0
      %v419 = vadd.f32 %v349, %v418
      %v420 = vpop.f32.mrb[0].mxu0
      %v421 = vpop.f32.mrb[0].mxu0
      %v422 = vadd.f32 %v351, %v421
      %v423 = vpop.f32.mrb[0].mxu0
      %424 = vmatprep.mubr.bf16.mxu0 0
      %425 = vmatmul.mubr.bf16.gmra.mrb[0].mxu0 %v247
      %v426 = vpop.f32.mrb[0].mxu0
      %v427 = vadd.f32 %v353, %v426
      %v428 = vpop.f32.mrb[0].mxu0
      %v429 = vpop.f32.mrb[0].mxu0
      %v430 = vadd.f32 %v355, %v429
      %v431 = vpop.f32.mrb[0].mxu0
      %432 = vmatprep.mubr.bf16.mxu0 0
      %433 = vmatmul.mubr.bf16.gmra.mrb[0].mxu0 %v250
      %v434 = vpop.f32.mrb[0].mxu0
      %v435 = vadd.f32 %v357, %v434
      %v436 = vpop.f32.mrb[0].mxu0
      %v437 = vpop.f32.mrb[0].mxu0
      %v438 = vadd.f32 %v359, %v437
      %v439 = vpop.f32.mrb[0].mxu0
      %440 = vmatprep.mubr.bf16.mxu0 0
      %441 = vmatmul.mubr.bf16.gmra.mrb[0].mxu0 %v253
      %v442 = vpop.f32.mrb[0].mxu0
      %v443 = vadd.f32 %v361, %v442
      %v444 = vpop.f32.mrb[0].mxu0
      %v445 = vpop.f32.mrb[0].mxu0
      %v446 = vadd.f32 %v372, %v445
      %v447 = vpop.f32.mrb[0].mxu0
      %448 = vdwg.mxu0
      %v449 = vld [vmem:[%s3] sm:$0xf]
      %v451 = vsel %vm255, %v449, 0
      %453 = vmatprep.subr.bf16.mxu0 0
      %454 = vmatpush1.bf16.msra.mxu0 %v451
      %455 = vmatprep.subr.bf16.mxu0 0
      %456 = vmatpush1.bf16.msra.mxu0 0
      %457 = vmatprep.subr.bf16.mxu0 0
      %458 = vmatpush1.bf16.msra.mxu0 0
      %459 = vmatprep.subr.bf16.mxu0 0
      %460 = vmatpush1.bf16.msra.mxu0 0
      %461 = vmatprep.subr.bf16.mxu0 0
      %462 = vmatpush1.bf16.msra.mxu0 0
      %463 = vmatprep.subr.bf16.mxu0 0
      %464 = vmatpush1.bf16.msra.mxu0 0
      %465 = vmatprep.subr.bf16.mxu0 0
      %466 = vmatpush1.bf16.msra.mxu0 0
      %467 = vmatprep.subr.bf16.mxu0 0
      %468 = vmatpush1.bf16.msra.mxu0 0
      %469 = vmatprep.subr.bf16.mxu0 0
      %470 = vmatpush1.bf16.msra.mxu0 0
      %471 = vmatprep.subr.bf16.mxu0 0
      %472 = vmatpush1.bf16.msra.mxu0 0
      %473 = vmatprep.subr.bf16.mxu0 0
      %474 = vmatpush1.bf16.msra.mxu0 0
      %475 = vmatprep.subr.bf16.mxu0 0
      %476 = vmatpush1.bf16.msra.mxu0 0
      %477 = vmatprep.subr.bf16.mxu0 0
      %478 = vmatpush1.bf16.msra.mxu0 0
      %479 = vmatprep.subr.bf16.mxu0 0
      %480 = vmatpush1.bf16.msra.mxu0 0
      %481 = vmatprep.subr.bf16.mxu0 0
      %482 = vmatpush1.bf16.msra.mxu0 0
      %483 = vmatprep.subr.bf16.mxu0 0
      %484 = vmatpush1.bf16.msra.mxu0 0
      %485 = vmatprep.mubr.bf16.mxu0 0
      %486 = vmatmul.mubr.bf16.gmra.mrb[0].mxu0 %v241
      %v487 = vpop.f32.mrb[0].mxu0
      %v488 = vadd.f32 0.0, %v487
      %v489 = vpop.f32.mrb[0].mxu0
      %v490 = vpop.f32.mrb[0].mxu0
      %v491 = vadd.f32 0.0, %v490
      %v492 = vpop.f32.mrb[0].mxu0
      %493 = vmatprep.mubr.bf16.mxu0 0
      %494 = vmatmul.mubr.bf16.gmra.mrb[0].mxu0 %v244
      %v495 = vpop.f32.mrb[0].mxu0
      %v496 = vadd.f32 0.0, %v495
      %v497 = vpop.f32.mrb[0].mxu0
      %v498 = vpop.f32.mrb[0].mxu0
      %v499 = vadd.f32 0.0, %v498
      %v500 = vpop.f32.mrb[0].mxu0
      %501 = vmatprep.mubr.bf16.mxu0 0
      %502 = vmatmul.mubr.bf16.gmra.mrb[0].mxu0 %v247
      %v503 = vpop.f32.mrb[0].mxu0
      %v504 = vadd.f32 0.0, %v503
      %v505 = vpop.f32.mrb[0].mxu0
      %v506 = vpop.f32.mrb[0].mxu0
      %v507 = vadd.f32 0.0, %v506
      %v508 = vpop.f32.mrb[0].mxu0
      %509 = vmatprep.mubr.bf16.mxu0 0
      %510 = vmatmul.mubr.bf16.gmra.mrb[0].mxu0 %v250
      %v511 = vpop.f32.mrb[0].mxu0
      %v512 = vadd.f32 0.0, %v511
      %v513 = vpop.f32.mrb[0].mxu0
      %v514 = vpop.f32.mrb[0].mxu0
      %v515 = vadd.f32 0.0, %v514
      %v516 = vpop.f32.mrb[0].mxu0
      %517 = vmatprep.mubr.bf16.mxu0 0
      %518 = vmatmul.mubr.bf16.gmra.mrb[0].mxu0 %v253
      %v519 = vpop.f32.mrb[0].mxu0
      %v520 = vadd.f32 0.0, %v519
      %v521 = vpop.f32.mrb[0].mxu0
      %v522 = vpop.f32.mrb[0].mxu0
      %v523 = vadd.f32 0.0, %v522
      %v524 = vpop.f32.mrb[0].mxu0
      %525 = vdwg.mxu0
      %vm536 = vcmask 1045504
      %v537 = vrot.slane %v488, 2
      %v538 = vrot.slane %v491, 2
      %v539 = vsel %vm536, %v537, %v538
      %v540 = vrot.slane %v496, 2
      %v541 = vsel %vm536, %v538, %v540
      %v542 = vrot.slane %v499, 2
      %v543 = vsel %vm536, %v540, %v542
      %v544 = vrot.slane %v504, 2
      %v545 = vsel %vm536, %v542, %v544
      %v546 = vrot.slane %v507, 2
      %v547 = vsel %vm536, %v544, %v546
      %v548 = vrot.slane %v512, 2
      %v549 = vsel %vm536, %v546, %v548
      %v550 = vrot.slane %v515, 2
      %v551 = vsel %vm536, %v548, %v550
      %v552 = vrot.slane %v520, 2
      %v553 = vsel %vm536, %v550, %v552
      %v554 = vrot.slane %v523, 2
      %v555 = vsel %vm536, %v552, %v554
      %v566 = vsel %vm536, %v554, 0.0
      %v567 = vadd.f32 %v411, %v539
      %v568 = vadd.f32 %v414, %v541
      %v569 = vadd.f32 %v419, %v543
      %v570 = vadd.f32 %v422, %v545
      %v571 = vadd.f32 %v427, %v547
      %v572 = vadd.f32 %v430, %v549
      %v573 = vadd.f32 %v435, %v551
      %v574 = vadd.f32 %v438, %v553
      %v575 = vadd.f32 %v443, %v555
      %v576 = vadd.f32 %v446, %v566
      %v577 = vpack.c.bf16 %v568, %v567
      %v578 = vpack.c.bf16 %v570, %v569
      %v579 = vpack.c.bf16 %v572, %v571
      %v580 = vpack.c.bf16 %v574, %v573
      %v581 = vpack.c.bf16 %v576, %v575
      %v587 = vunpack.c.l.b16 %v577
      %v588 = vunpack.c.h.b16 %v577
      %v589 = vunpack.c.l.b16 %v578
      %v590 = vunpack.c.h.b16 %v578
      %v591 = vunpack.c.l.b16 %v579
      %v592 = vunpack.c.h.b16 %v579
      %v593 = vunpack.c.l.b16 %v580
      %v594 = vunpack.c.h.b16 %v580
      %v595 = vunpack.c.l.b16 %v581
      %v596 = vunpack.c.h.b16 %v581
      %v597 = vpack.c.b16 %v587, %v587
      %v598 = vpack.c.b16 %v588, %v588
      %v599 = vpack.c.b16 %v589, %v589
      %v600 = vpack.c.b16 %v590, %v590
      %v601 = vpack.c.b16 %v591, %v591
      %v602 = vpack.c.b16 %v592, %v592
      %v603 = vpack.c.b16 %v593, %v593
      %v604 = vpack.c.b16 %v594, %v594
      %v605 = vpack.c.b16 %v595, %v595
      %v606 = vpack.c.b16 %v596, %v596
      %vm617 = vcmask 191488
      %618 = vst.msk [vmem:[%s199] sm:$0xf] %vm617, %v597
      %619 = vst.msk [vmem:[%s199 + $0x4] sm:$0xf] %vm617, %v598
      %620 = vst.msk [vmem:[%s199 + $0x8] sm:$0xf] %vm617, %v599
      %621 = vst.msk [vmem:[%s199 + $0xc] sm:$0xf] %vm617, %v600
      %622 = vst.msk [vmem:[%s199 + $0x10] sm:$0xf] %vm617, %v601
      %623 = vst.msk [vmem:[%s199 + $0x14] sm:$0xf] %vm617, %v602
      %624 = vst.msk [vmem:[%s199 + $0x18] sm:$0xf] %vm617, %v603
      %625 = vst.msk [vmem:[%s199 + $0x1c] sm:$0xf] %vm617, %v604
      %626 = vst.msk [vmem:[%s199 + $0x20] sm:$0xf] %vm617, %v605
      %627 = vst.msk [vmem:[%s199 + $0x24] sm:$0xf] %vm617, %v606
      %s628 = smul.u32 10, %s15
      %p629 = scmp.lt.s32.totalorder %s628, 19
      %s630 = scalar_select %p629, %s628, 19
      %s631 = smul.addr %s630, 4
      %s632 = scalar_lea.vmem %s4, %s631
      // Predicated region
      $region37: #{mask_decoder_forward.15} parent=35 // pred_check
        %p633 = pneg %p122
      $region38: #{mask_decoder_forward.15} parent=35 // pred_check_branch
        %635 = sbr.rel (%p633) target = $region40
      $region39: #{mask_decoder_forward.15} parent=35 // pred_region
        %s636 = smul.u32 10, %s15
      $region40: #{mask_decoder_forward.15} parent=35 // pred_fallthru
        _
    $region36: #{mask_decoder_forward.15} parent=5 // pred_fallthru
      _
    %p637 = scmp.le.s32.totalorder 2, %s10
    // Predicated region
    $region41: #{mask_decoder_forward.15} parent=5 // pred_check
      %p638 = pneg %p637
    $region42: #{mask_decoder_forward.15} parent=5 // pred_check_branch
      %640 = sbr.rel (%p638) target = $region44
    $region43: #{mask_decoder_forward.15} parent=5 // pred_region
      %s641 = ssub.s32 %s10, 2
      // Predicated region
      $region45: #{mask_decoder_forward.15} parent=43 // pred_check
        %p642 = pneg %p128
      $region46: #{mask_decoder_forward.15} parent=43 // pred_check_branch
        %644 = sbr.rel (%p642) target = $region48
      $region47: #{mask_decoder_forward.15} parent=43 // pred_region
        %s645 = smul.u32 10, %s16
        %p646 = scmp.lt.s32.totalorder %s645, 19
        %s647 = scalar_select %p646, %s645, 19
        %s648 = smul.addr %s647, 4
        %s649 = scalar_lea.vmem %s4, %s648
      $region48: #{mask_decoder_forward.15} parent=43 // pred_fallthru
        _
    $region44: #{mask_decoder_forward.15} parent=5 // pred_fallthru
      _
  $region6: #{mask_decoder_forward.15} parent=0 // loop_footer
    %s14 = sadd.s32 1, %s10
  $region7: #{mask_decoder_forward.15} parent=0 // loop_footer_branch
    %9 = sbr.rel target = $region3
  $region8: #{mask_decoder_forward.15} parent=0 // loop_exit
    _

// kernel: mask_decoder_forward.17
$region0: #{mask_decoder_forward.17}
  #allocation0 [shape = 'u32[]', space=smem, size = 0x4, offset = 0x4, fixed_abs, tag = 'smem constant byte address 0x4 - core index']
  #allocation1 [shape = 'u32[144,128]{1,0:T(1,128)}', space=vmem, size = 0x12000, scoped, tag = 'internal scratch']
  %s0 = inlined_call_operand.vmem [shape: bf16[2,32,8], index: 0, kind: input, shape index: {}]
  %s1 = inlined_call_operand.vmem [shape: f32[2,1,8], index: 1, kind: input, shape index: {}]
  %s2 = inlined_call_operand.vmem [shape: f32[2,1,8], index: 2, kind: input, shape index: {}]
  %s3 = inlined_call_operand.vmem [shape: f32[1,1,8], index: 3, kind: input, shape index: {}]
  %s4 = inlined_call_operand.vmem [shape: bf16[2,32,8], index: 4, kind: output, shape index: {}]
  %s5 = sld [smem:[#allocation0]]
  $region49: #{mask_decoder_forward.17} parent=0
    _
  %s7 = ssub.s32 1, %s5
  %s8 = scalar_select 0, %s7, %s5
  loop: start=0, step=1, limit=4
  $region2: #{mask_decoder_forward.17} parent=0 // loop_pre_header
    _
  $region3: #{mask_decoder_forward.17} parent=0 // loop_header
    %s10 = sphi 0, %s14
    %p11 = scmp.ge.s32.totalorder %s10, 4
    %s17 = sphi 0, %s29
    %s18 = sphi 0, %s25
    %s19 = sphi 0, %s17
    %s20 = sphi 0, %s18
    %s21 = sphi 0, %s19
    %s22 = sphi 0, %s20
    %s34 = sphi 0, %s36
    %s37 = sphi 0, %s34
    %s38 = sphi 0, %s37
    %s54 = sphi 0, %s38
    %s60 = sphi 0, %s62
    %s63 = sphi 0, %s60
    %s64 = sphi 0, %s63
    %s80 = sphi 0, %s64
    %s86 = sphi 0, %s88
    %s89 = sphi 0, %s86
    %s90 = sphi 0, %s89
    %s106 = sphi 0, %s90
    %s110 = sphi 0, %s110
    %s112 = sphi 0, %s110
    %s113 = sphi 0, %s112
    %s127 = sphi 0, %s113
    %s135 = sphi 0, %s137
    %s138 = sphi 0, %s135
    %s139 = sphi 0, %s138
    %s155 = sphi 0, %s139
  $region4: #{mask_decoder_forward.17} parent=0 // loop_header_branch
    %13 = sbr.rel (%p11) target = $region8
  $region5: #{mask_decoder_forward.17} parent=0 // loop_body
    %s15 = ssub.s32 %s10, 1
    %s16 = ssub.s32 %s10, 2
    %s23 = sadd.s32 1, %s18
    %p24 = scmp.ge.s32.totalorder %s23, 1
    %s25 = scalar_select %p24, 0, %s23
    %s26 = sadd.s32 1, %s17
    %s27 = scalar_select %p24, %s26, %s17
    %p28 = scmp.ge.s32.totalorder %s27, 2
    %s29 = scalar_select %p28, 0, %s27
    %s30 = ssub.s32 %s17, %s29
    %s31 = ssub.s32 %s18, %s25
    %s32 = sor.u32 %s30, %s31
    %p33 = scmp.eq.s32.totalorder %s32, 0
    %s35 = sadd.s32 %s34, 1
    %s36 = scalar_select %p33, %s34, %s35
    %p39 = pneg %p33
    %p40 = scmp.eq.s32.totalorder %s10, 1
    %p41 = por %p39, %p40
    %p42 = scmp.ne.s32.totalorder %s34, %s37
    %p43 = scmp.eq.s32.totalorder %s10, 0
    %p44 = por %p42, %p43
    %p45 = scmp.ne.s32.totalorder %s34, %s37
    %p46 = scmp.eq.s32.totalorder %s15, 1
    %p47 = por %p45, %p46
    %p48 = scmp.ne.s32.totalorder %s37, %s38
    %p49 = scmp.eq.s32.totalorder %s15, 0
    %p50 = por %p48, %p49
    %p51 = scmp.ne.s32.totalorder %s37, %s38
    %p52 = scmp.eq.s32.totalorder %s16, 1
    %p53 = por %p51, %p52
    %p55 = scmp.ne.s32.totalorder %s38, %s54
    %p56 = scmp.eq.s32.totalorder %s16, 0
    %p57 = por %p55, %p56
    %s58 = ssub.s32 %s17, %s29
    %p59 = scmp.eq.s32.totalorder %s58, 0
    %s61 = sadd.s32 %s60, 1
    %s62 = scalar_select %p59, %s60, %s61
    %p65 = pneg %p59
    %p66 = scmp.eq.s32.totalorder %s10, 1
    %p67 = por %p65, %p66
    %p68 = scmp.ne.s32.totalorder %s60, %s63
    %p69 = scmp.eq.s32.totalorder %s10, 0
    %p70 = por %p68, %p69
    %p71 = scmp.ne.s32.totalorder %s60, %s63
    %p72 = scmp.eq.s32.totalorder %s15, 1
    %p73 = por %p71, %p72
    %p74 = scmp.ne.s32.totalorder %s63, %s64
    %p75 = scmp.eq.s32.totalorder %s15, 0
    %p76 = por %p74, %p75
    %p77 = scmp.ne.s32.totalorder %s63, %s64
    %p78 = scmp.eq.s32.totalorder %s16, 1
    %p79 = por %p77, %p78
    %p81 = scmp.ne.s32.totalorder %s64, %s80
    %p82 = scmp.eq.s32.totalorder %s16, 0
    %p83 = por %p81, %p82
    %s84 = ssub.s32 %s17, %s29
    %p85 = scmp.eq.s32.totalorder %s84, 0
    %s87 = sadd.s32 %s86, 1
    %s88 = scalar_select %p85, %s86, %s87
    %p91 = pneg %p85
    %p92 = scmp.eq.s32.totalorder %s10, 1
    %p93 = por %p91, %p92
    %p94 = scmp.ne.s32.totalorder %s86, %s89
    %p95 = scmp.eq.s32.totalorder %s10, 0
    %p96 = por %p94, %p95
    %p97 = scmp.ne.s32.totalorder %s86, %s89
    %p98 = scmp.eq.s32.totalorder %s15, 1
    %p99 = por %p97, %p98
    %p100 = scmp.ne.s32.totalorder %s89, %s90
    %p101 = scmp.eq.s32.totalorder %s15, 0
    %p102 = por %p100, %p101
    %p103 = scmp.ne.s32.totalorder %s89, %s90
    %p104 = scmp.eq.s32.totalorder %s16, 1
    %p105 = por %p103, %p104
    %p107 = scmp.ne.s32.totalorder %s90, %s106
    %p108 = scmp.eq.s32.totalorder %s16, 0
    %p109 = por %p107, %p108
    %s111 = sadd.s32 %s110, 1
    %p114 = scmp.eq.s32.totalorder %s10, 1
    %p115 = scmp.ne.s32.totalorder %s110, %s112
    %p116 = scmp.eq.s32.totalorder %s10, 0
    %p117 = por %p115, %p116
    %p118 = scmp.ne.s32.totalorder %s110, %s112
    %p119 = scmp.eq.s32.totalorder %s15, 1
    %p120 = por %p118, %p119
    %p121 = scmp.ne.s32.totalorder %s112, %s113
    %p122 = scmp.eq.s32.totalorder %s15, 0
    %p123 = por %p121, %p122
    %p124 = scmp.ne.s32.totalorder %s112, %s113
    %p125 = scmp.eq.s32.totalorder %s16, 1
    %p126 = por %p124, %p125
    %p128 = scmp.ne.s32.totalorder %s113, %s127
    %p129 = scmp.eq.s32.totalorder %s16, 0
    %p130 = por %p128, %p129
    %s131 = ssub.s32 %s17, %s29
    %s132 = ssub.s32 %s18, %s25
    %s133 = sor.u32 %s131, %s132
    %p134 = scmp.eq.s32.totalorder %s133, 0
    %s136 = sadd.s32 %s135, 1
    %s137 = scalar_select %p134, %s135, %s136
    %p140 = pneg %p134
    %p141 = scmp.eq.s32.totalorder %s10, 1
    %p142 = por %p140, %p141
    %p143 = scmp.ne.s32.totalorder %s135, %s138
    %p144 = scmp.eq.s32.totalorder %s10, 0
    %p145 = por %p143, %p144
    %p146 = scmp.ne.s32.totalorder %s135, %s138
    %p147 = scmp.eq.s32.totalorder %s15, 1
    %p148 = por %p146, %p147
    %p149 = scmp.ne.s32.totalorder %s138, %s139
    %p150 = scmp.eq.s32.totalorder %s15, 0
    %p151 = por %p149, %p150
    %p152 = scmp.ne.s32.totalorder %s138, %s139
    %p153 = scmp.eq.s32.totalorder %s16, 1
    %p154 = por %p152, %p153
    %p156 = scmp.ne.s32.totalorder %s139, %s155
    %p157 = scmp.eq.s32.totalorder %s16, 0
    %p158 = por %p156, %p157
    %p159 = scmp.le.s32.totalorder 1, %s10
    %p160 = scmp.lt.s32.totalorder %s10, 3
    %p161 = pnand %p159, %p160
    %p162 = pneg %p161
    // Predicated region
    $region9: #{mask_decoder_forward.17} parent=5 // pred_check
      _
    $region10: #{mask_decoder_forward.17} parent=5 // pred_check_branch
      %164 = sbr.rel (%p161) target = $region12
    $region11: #{mask_decoder_forward.17} parent=5 // pred_region
      %s165 = ssub.s32 %s10, 1
      // Predicated region
      $region13: #{mask_decoder_forward.17} parent=11 // pred_check
        %p166 = pneg %p123
      $region14: #{mask_decoder_forward.17} parent=11 // pred_check_branch
        %168 = sbr.rel (%p166) target = $region16
      $region15: #{mask_decoder_forward.17} parent=11 // pred_region
        _
      $region16: #{mask_decoder_forward.17} parent=11 // pred_fallthru
        _
    $region12: #{mask_decoder_forward.17} parent=5 // pred_fallthru
      _
    %p169 = scmp.lt.s32.totalorder %s10, 2
    // Predicated region
    $region17: #{mask_decoder_forward.17} parent=5 // pred_check
      %p170 = pneg %p169
    $region18: #{mask_decoder_forward.17} parent=5 // pred_check_branch
      %172 = sbr.rel (%p170) target = $region20
    $region19: #{mask_decoder_forward.17} parent=5 // pred_region
      // Predicated region
      $region21: #{mask_decoder_forward.17} parent=19 // pred_check
        %p173 = pneg %p44
      $region22: #{mask_decoder_forward.17} parent=19 // pred_check_branch
        %175 = sbr.rel (%p173) target = $region24
      $region23: #{mask_decoder_forward.17} parent=19 // pred_region
        %s176 = smul.u32 4, %s18
        %p177 = scmp.lt.s32.totalorder %s17, 1
        %s178 = scalar_select %p177, %s17, 1
        %p179 = scmp.lt.s32.totalorder %s176, 3
        %s180 = scalar_select %p179, %s176, 3
        %s181 = smul.addr %s178, 4
        %s182 = sadd.s32 %s180, %s181
        %s183 = smul.addr %s182, 4
        %s184 = scalar_lea.vmem %s0, %s183
        %s185 = smul.u32 4, %s18
      $region24: #{mask_decoder_forward.17} parent=19 // pred_fallthru
        _
      // Predicated region
      $region25: #{mask_decoder_forward.17} parent=19 // pred_check
        %p186 = pneg %p70
      $region26: #{mask_decoder_forward.17} parent=19 // pred_check_branch
        %188 = sbr.rel (%p186) target = $region28
      $region27: #{mask_decoder_forward.17} parent=19 // pred_region
        %p189 = scmp.lt.s32.totalorder %s17, 1
        %s190 = scalar_select %p189, %s17, 1
        %s191 = scalar_lea.vmem %s1, %s190
      $region28: #{mask_decoder_forward.17} parent=19 // pred_fallthru
        _
      // Predicated region
      $region29: #{mask_decoder_forward.17} parent=19 // pred_check
        %p192 = pneg %p96
      $region30: #{mask_decoder_forward.17} parent=19 // pred_check_branch
        %194 = sbr.rel (%p192) target = $region32
      $region31: #{mask_decoder_forward.17} parent=19 // pred_region
        %p195 = scmp.lt.s32.totalorder %s17, 1
        %s196 = scalar_select %p195, %s17, 1
        %s197 = scalar_lea.vmem %s2, %s196
      $region32: #{mask_decoder_forward.17} parent=19 // pred_fallthru
        _
    $region20: #{mask_decoder_forward.17} parent=5 // pred_fallthru
      _
    %p198 = scmp.le.s32.totalorder 1, %s10
    %p199 = scmp.lt.s32.totalorder %s10, 3
    %p200 = pnand %p198, %p199
    %p201 = pneg %p200
    // Predicated region
    $region33: #{mask_decoder_forward.17} parent=5 // pred_check
      _
    $region34: #{mask_decoder_forward.17} parent=5 // pred_check_branch
      %203 = sbr.rel (%p200) target = $region36
    $region35: #{mask_decoder_forward.17} parent=5 // pred_region
      %s204 = ssub.s32 %s10, 1
      %s205 = smul.u32 4, %s20
      %p206 = scmp.lt.s32.totalorder %s19, 1
      %s207 = scalar_select %p206, %s19, 1
      %p208 = scmp.lt.s32.totalorder %s205, 3
      %s209 = scalar_select %p208, %s205, 3
      %s210 = smul.addr %s207, 4
      %s211 = sadd.s32 %s209, %s210
      %s212 = smul.addr %s211, 4
      %s213 = scalar_lea.vmem %s0, %s212
      %p214 = pneg %p50
      %p215 = pneg %p47
      %p216 = scmp.lt.s32.totalorder %s19, 1
      %s217 = scalar_select %p216, %s19, 1
      %s218 = scalar_lea.vmem %s1, %s217
      %p219 = pneg %p76
      %p220 = pneg %p73
      %p221 = scmp.lt.s32.totalorder %s19, 1
      %s222 = scalar_select %p221, %s19, 1
      %s223 = scalar_lea.vmem %s2, %s222
      %p224 = pneg %p102
      %p225 = pneg %p99
      %p226 = pneg %p123
      %p227 = pneg %p120
      %p228 = pneg %p151
      %p229 = pneg %p148
      %s230 = smul.u32 4, %s20
      %p231 = scmp.lt.s32.totalorder %s19, 1
      %s232 = scalar_select %p231, %s19, 1
      %p233 = scmp.lt.s32.totalorder %s230, 3
      %s234 = scalar_select %p233, %s230, 3
      %s235 = smul.addr %s232, 4
      %s236 = sadd.s32 %s234, %s235
      %s237 = smul.addr %s236, 4
      %s238 = scalar_lea.vmem %s4, %s237
      %s239 = smul.u32 4, %s20
      %p240 = scmp.lt.s32.totalorder %s19, 1
      %s241 = scalar_select %p240, %s19, 1
      %p242 = scmp.lt.s32.totalorder %s239, 3
      %s243 = scalar_select %p242, %s239, 3
      %s244 = smul.addr %s241, 4
      %s245 = sadd.s32 %s243, %s244
      %s246 = smul.addr %s245, 4
      %s247 = scalar_lea.vmem %s0, %s246
      %s248 = smul.u32 4, %s20
      %p249 = scmp.lt.s32.totalorder %s19, 1
      %s250 = scalar_select %p249, %s19, 1
      %s251 = scalar_lea.vmem %s1, %s250
      %p252 = scmp.lt.s32.totalorder %s19, 1
      %s253 = scalar_select %p252, %s19, 1
      %s254 = scalar_lea.vmem %s2, %s253
      %s255 = smul.u32 4, %s20
      %p256 = scmp.lt.s32.totalorder %s19, 1
      %s257 = scalar_select %p256, %s19, 1
      %p258 = scmp.lt.s32.totalorder %s255, 3
      %s259 = scalar_select %p258, %s255, 3
      %s260 = smul.addr %s257, 4
      %s261 = sadd.s32 %s259, %s260
      %s262 = smul.addr %s261, 4
      %s263 = scalar_lea.vmem %s4, %s262
      %s264 = smul.u32 4, %s20
      %v265 = vld [vmem:[%s247] sm:$0xf]
      %v266 = vld [vmem:[%s247 + $0x4] sm:$0xf]
      %v267 = vld [vmem:[%s247 + $0x8] sm:$0xf]
      %v268 = vld [vmem:[%s247 + $0xc] sm:$0xf]
      %v269 = vunpack.c.l.bf16 %v265
      %v270 = vunpack.c.l.bf16 %v266
      %v271 = vunpack.c.l.bf16 %v267
      %v272 = vunpack.c.l.bf16 %v268
      %v273 = vld [vmem:[%s251] sm:$0x1]
      %v275 = vlaneseq
      %v276 = vshrl.u32 %v275, 7
      %v277 = vsub.s32 0, %v276
      %v278 = vrot.slane %v273, %v277
      %v280 = vmul.f32 %v269, %v278
      %v281 = vmul.f32 %v270, %v278
      %v282 = vmul.f32 %v271, %v278
      %v283 = vmul.f32 %v272, %v278
      %v284 = vld [vmem:[%s254] sm:$0x1]
      %v286 = vlaneseq
      %v287 = vshrl.u32 %v286, 7
      %v288 = vsub.s32 0, %v287
      %v289 = vrot.slane %v284, %v288
      %v291 = vadd.f32 %v280, %v289
      %v292 = vadd.f32 %v281, %v289
      %v293 = vadd.f32 %v282, %v289
      %v294 = vadd.f32 %v283, %v289
      %v295 = vmax.f32 %v291, 0.0
      %v296 = vmax.f32 %v292, 0.0
      %v297 = vmax.f32 %v293, 0.0
      %v298 = vmax.f32 %v294, 0.0
      %v299 = vld [vmem:[%s3] sm:$0x1]
      %v300 = vmin.f32 %v291, 0.0
      %v301 = vmin.f32 %v292, 0.0
      %v302 = vmin.f32 %v293, 0.0
      %v303 = vmin.f32 %v294, 0.0
      %v305 = vlaneseq
      %v306 = vshrl.u32 %v305, 7
      %v307 = vsub.s32 0, %v306
      %v308 = vrot.slane %v299, %v307
      %v310 = vmul.f32 %v308, %v300
      %v311 = vmul.f32 %v308, %v301
      %v312 = vmul.f32 %v308, %v302
      %v313 = vmul.f32 %v308, %v303
      %v314 = vadd.f32 %v295, %v310
      %v315 = vadd.f32 %v296, %v311
      %v316 = vadd.f32 %v297, %v312
      %v317 = vadd.f32 %v298, %v313
      %v318 = vpack.c.bf16 %v315, %v314
      %v319 = vpack.c.bf16 %v317, %v316
      %v322 = vunpack.c.l.b16 %v318
      %v323 = vunpack.c.h.b16 %v318
      %v324 = vunpack.c.l.b16 %v319
      %v325 = vunpack.c.h.b16 %v319
      %v326 = vpack.c.b16 %v322, %v322
      %v327 = vpack.c.b16 %v323, %v323
      %v328 = vpack.c.b16 %v324, %v324
      %v329 = vpack.c.b16 %v325, %v325
      %vm334 = vcmask 60416
      %335 = vst.msk [vmem:[%s263] sm:$0xf] %vm334, %v326
      %336 = vst.msk [vmem:[%s263 + $0x4] sm:$0xf] %vm334, %v327
      %337 = vst.msk [vmem:[%s263 + $0x8] sm:$0xf] %vm334, %v328
      %338 = vst.msk [vmem:[%s263 + $0xc] sm:$0xf] %vm334, %v329
      %s339 = smul.u32 4, %s20
      %p340 = scmp.lt.s32.totalorder %s19, 1
      %s341 = scalar_select %p340, %s19, 1
      %p342 = scmp.lt.s32.totalorder %s339, 3
      %s343 = scalar_select %p342, %s339, 3
      %s344 = smul.addr %s341, 4
      %s345 = sadd.s32 %s343, %s344
      %s346 = smul.addr %s345, 4
      %s347 = scalar_lea.vmem %s4, %s346
      // Predicated region
      $region37: #{mask_decoder_forward.17} parent=35 // pred_check
        %p348 = pneg %p148
      $region38: #{mask_decoder_forward.17} parent=35 // pred_check_branch
        %350 = sbr.rel (%p348) target = $region40
      $region39: #{mask_decoder_forward.17} parent=35 // pred_region
        %s351 = smul.u32 4, %s20
      $region40: #{mask_decoder_forward.17} parent=35 // pred_fallthru
        _
    $region36: #{mask_decoder_forward.17} parent=5 // pred_fallthru
      _
    %p352 = scmp.le.s32.totalorder 2, %s10
    // Predicated region
    $region41: #{mask_decoder_forward.17} parent=5 // pred_check
      %p353 = pneg %p352
    $region42: #{mask_decoder_forward.17} parent=5 // pred_check_branch
      %355 = sbr.rel (%p353) target = $region44
    $region43: #{mask_decoder_forward.17} parent=5 // pred_region
      %s356 = ssub.s32 %s10, 2
      // Predicated region
      $region45: #{mask_decoder_forward.17} parent=43 // pred_check
        %p357 = pneg %p154
      $region46: #{mask_decoder_forward.17} parent=43 // pred_check_branch
        %359 = sbr.rel (%p357) target = $region48
      $region47: #{mask_decoder_forward.17} parent=43 // pred_region
        %s360 = smul.u32 4, %s22
        %p361 = scmp.lt.s32.totalorder %s21, 1
        %s362 = scalar_select %p361, %s21, 1
        %p363 = scmp.lt.s32.totalorder %s360, 3
        %s364 = scalar_select %p363, %s360, 3
        %s365 = smul.addr %s362, 4
        %s366 = sadd.s32 %s364, %s365
        %s367 = smul.addr %s366, 4
        %s368 = scalar_lea.vmem %s4, %s367
      $region48: #{mask_decoder_forward.17} parent=43 // pred_fallthru
        _
    $region44: #{mask_decoder_forward.17} parent=5 // pred_fallthru
      _
  $region6: #{mask_decoder_forward.17} parent=0 // loop_footer
    %s14 = sadd.s32 1, %s10
  $region7: #{mask_decoder_forward.17} parent=0 // loop_footer_branch
    %9 = sbr.rel target = $region3
  $region8: #{mask_decoder_forward.17} parent=0 // loop_exit
    _

// kernel: mask_decoder_forward.18
$region0: #{mask_decoder_forward.18}
  #allocation0 [shape = 'u32[]', space=smem, size = 0x4, offset = 0x4, fixed_abs, tag = 'smem constant byte address 0x4 - core index']
  #allocation1 [shape = 'u32[144,128]{1,0:T(1,128)}', space=vmem, size = 0x12000, scoped, tag = 'internal scratch']
  %s0 = inlined_call_operand.vmem [shape: bf16[160,16], index: 0, kind: input, shape index: {}]
  %s1 = inlined_call_operand.vmem [shape: bf16[16,24], index: 1, kind: input, shape index: {}]
  %s2 = inlined_call_operand.vmem [shape: bf16[16,24], index: 2, kind: input, shape index: {}]
  %s3 = inlined_call_operand.vmem [shape: bf16[16,24], index: 3, kind: input, shape index: {}]
  %s4 = inlined_call_operand.vmem [shape: bf16[160,24], index: 4, kind: output, shape index: {}]
  %s5 = sld [smem:[#allocation0]]
  $region49: #{mask_decoder_forward.18} parent=0
    _
  %s7 = ssub.s32 1, %s5
  %s8 = scalar_select 0, %s7, %s5
  loop: start=0, step=1, limit=4
  $region2: #{mask_decoder_forward.18} parent=0 // loop_pre_header
    _
  $region3: #{mask_decoder_forward.18} parent=0 // loop_header
    %s10 = sphi 0, %s14
    %p11 = scmp.ge.s32.totalorder %s10, 4
    %s20 = sphi 0, %s22
    %s23 = sphi 0, %s20
    %s24 = sphi 0, %s23
    %s40 = sphi 0, %s24
    %s44 = sphi 0, %s44
    %s46 = sphi 0, %s44
    %s47 = sphi 0, %s46
    %s61 = sphi 0, %s47
    %s65 = sphi 0, %s65
    %s67 = sphi 0, %s65
    %s68 = sphi 0, %s67
    %s82 = sphi 0, %s68
    %s86 = sphi 0, %s86
    %s88 = sphi 0, %s86
    %s89 = sphi 0, %s88
    %s103 = sphi 0, %s89
    %s109 = sphi 0, %s111
    %s112 = sphi 0, %s109
    %s113 = sphi 0, %s112
    %s129 = sphi 0, %s113
  $region4: #{mask_decoder_forward.18} parent=0 // loop_header_branch
    %13 = sbr.rel (%p11) target = $region8
  $region5: #{mask_decoder_forward.18} parent=0 // loop_body
    %s15 = ssub.s32 %s10, 1
    %s16 = ssub.s32 %s10, 2
    %s17 = sadd.s32 %s10, 1
    %s18 = ssub.s32 %s10, %s17
    %p19 = scmp.eq.s32.totalorder %s18, 0
    %s21 = sadd.s32 %s20, 1
    %s22 = scalar_select %p19, %s20, %s21
    %p25 = pneg %p19
    %p26 = scmp.eq.s32.totalorder %s10, 1
    %p27 = por %p25, %p26
    %p28 = scmp.ne.s32.totalorder %s20, %s23
    %p29 = scmp.eq.s32.totalorder %s10, 0
    %p30 = por %p28, %p29
    %p31 = scmp.ne.s32.totalorder %s20, %s23
    %p32 = scmp.eq.s32.totalorder %s15, 1
    %p33 = por %p31, %p32
    %p34 = scmp.ne.s32.totalorder %s23, %s24
    %p35 = scmp.eq.s32.totalorder %s15, 0
    %p36 = por %p34, %p35
    %p37 = scmp.ne.s32.totalorder %s23, %s24
    %p38 = scmp.eq.s32.totalorder %s16, 1
    %p39 = por %p37, %p38
    %p41 = scmp.ne.s32.totalorder %s24, %s40
    %p42 = scmp.eq.s32.totalorder %s16, 0
    %p43 = por %p41, %p42
    %s45 = sadd.s32 %s44, 1
    %p48 = scmp.eq.s32.totalorder %s10, 1
    %p49 = scmp.ne.s32.totalorder %s44, %s46
    %p50 = scmp.eq.s32.totalorder %s10, 0
    %p51 = por %p49, %p50
    %p52 = scmp.ne.s32.totalorder %s44, %s46
    %p53 = scmp.eq.s32.totalorder %s15, 1
    %p54 = por %p52, %p53
    %p55 = scmp.ne.s32.totalorder %s46, %s47
    %p56 = scmp.eq.s32.totalorder %s15, 0
    %p57 = por %p55, %p56
    %p58 = scmp.ne.s32.totalorder %s46, %s47
    %p59 = scmp.eq.s32.totalorder %s16, 1
    %p60 = por %p58, %p59
    %p62 = scmp.ne.s32.totalorder %s47, %s61
    %p63 = scmp.eq.s32.totalorder %s16, 0
    %p64 = por %p62, %p63
    %s66 = sadd.s32 %s65, 1
    %p69 = scmp.eq.s32.totalorder %s10, 1
    %p70 = scmp.ne.s32.totalorder %s65, %s67
    %p71 = scmp.eq.s32.totalorder %s10, 0
    %p72 = por %p70, %p71
    %p73 = scmp.ne.s32.totalorder %s65, %s67
    %p74 = scmp.eq.s32.totalorder %s15, 1
    %p75 = por %p73, %p74
    %p76 = scmp.ne.s32.totalorder %s67, %s68
    %p77 = scmp.eq.s32.totalorder %s15, 0
    %p78 = por %p76, %p77
    %p79 = scmp.ne.s32.totalorder %s67, %s68
    %p80 = scmp.eq.s32.totalorder %s16, 1
    %p81 = por %p79, %p80
    %p83 = scmp.ne.s32.totalorder %s68, %s82
    %p84 = scmp.eq.s32.totalorder %s16, 0
    %p85 = por %p83, %p84
    %s87 = sadd.s32 %s86, 1
    %p90 = scmp.eq.s32.totalorder %s10, 1
    %p91 = scmp.ne.s32.totalorder %s86, %s88
    %p92 = scmp.eq.s32.totalorder %s10, 0
    %p93 = por %p91, %p92
    %p94 = scmp.ne.s32.totalorder %s86, %s88
    %p95 = scmp.eq.s32.totalorder %s15, 1
    %p96 = por %p94, %p95
    %p97 = scmp.ne.s32.totalorder %s88, %s89
    %p98 = scmp.eq.s32.totalorder %s15, 0
    %p99 = por %p97, %p98
    %p100 = scmp.ne.s32.totalorder %s88, %s89
    %p101 = scmp.eq.s32.totalorder %s16, 1
    %p102 = por %p100, %p101
    %p104 = scmp.ne.s32.totalorder %s89, %s103
    %p105 = scmp.eq.s32.totalorder %s16, 0
    %p106 = por %p104, %p105
    %s107 = ssub.s32 %s10, %s17
    %p108 = scmp.eq.s32.totalorder %s107, 0
    %s110 = sadd.s32 %s109, 1
    %s111 = scalar_select %p108, %s109, %s110
    %p114 = pneg %p108
    %p115 = scmp.eq.s32.totalorder %s10, 1
    %p116 = por %p114, %p115
    %p117 = scmp.ne.s32.totalorder %s109, %s112
    %p118 = scmp.eq.s32.totalorder %s10, 0
    %p119 = por %p117, %p118
    %p120 = scmp.ne.s32.totalorder %s109, %s112
    %p121 = scmp.eq.s32.totalorder %s15, 1
    %p122 = por %p120, %p121
    %p123 = scmp.ne.s32.totalorder %s112, %s113
    %p124 = scmp.eq.s32.totalorder %s15, 0
    %p125 = por %p123, %p124
    %p126 = scmp.ne.s32.totalorder %s112, %s113
    %p127 = scmp.eq.s32.totalorder %s16, 1
    %p128 = por %p126, %p127
    %p130 = scmp.ne.s32.totalorder %s113, %s129
    %p131 = scmp.eq.s32.totalorder %s16, 0
    %p132 = por %p130, %p131
    %p133 = scmp.le.s32.totalorder 1, %s10
    %p134 = scmp.lt.s32.totalorder %s10, 3
    %p135 = pnand %p133, %p134
    %p136 = pneg %p135
    // Predicated region
    $region9: #{mask_decoder_forward.18} parent=5 // pred_check
      _
    $region10: #{mask_decoder_forward.18} parent=5 // pred_check_branch
      %138 = sbr.rel (%p135) target = $region12
    $region11: #{mask_decoder_forward.18} parent=5 // pred_region
      %s139 = ssub.s32 %s10, 1
      // Predicated region
      $region13: #{mask_decoder_forward.18} parent=11 // pred_check
        %p140 = pneg %p57
      $region14: #{mask_decoder_forward.18} parent=11 // pred_check_branch
        %142 = sbr.rel (%p140) target = $region16
      $region15: #{mask_decoder_forward.18} parent=11 // pred_region
        _
      $region16: #{mask_decoder_forward.18} parent=11 // pred_fallthru
        _
      // Predicated region
      $region17: #{mask_decoder_forward.18} parent=11 // pred_check
        %p143 = pneg %p78
      $region18: #{mask_decoder_forward.18} parent=11 // pred_check_branch
        %145 = sbr.rel (%p143) target = $region20
      $region19: #{mask_decoder_forward.18} parent=11 // pred_region
        _
      $region20: #{mask_decoder_forward.18} parent=11 // pred_fallthru
        _
      // Predicated region
      $region21: #{mask_decoder_forward.18} parent=11 // pred_check
        %p146 = pneg %p99
      $region22: #{mask_decoder_forward.18} parent=11 // pred_check_branch
        %148 = sbr.rel (%p146) target = $region24
      $region23: #{mask_decoder_forward.18} parent=11 // pred_region
        _
      $region24: #{mask_decoder_forward.18} parent=11 // pred_fallthru
        _
    $region12: #{mask_decoder_forward.18} parent=5 // pred_fallthru
      _
    %p149 = scmp.lt.s32.totalorder %s10, 2
    // Predicated region
    $region25: #{mask_decoder_forward.18} parent=5 // pred_check
      %p150 = pneg %p149
    $region26: #{mask_decoder_forward.18} parent=5 // pred_check_branch
      %152 = sbr.rel (%p150) target = $region28
    $region27: #{mask_decoder_forward.18} parent=5 // pred_region
      // Predicated region
      $region29: #{mask_decoder_forward.18} parent=27 // pred_check
        %p153 = pneg %p30
      $region30: #{mask_decoder_forward.18} parent=27 // pred_check_branch
        %155 = sbr.rel (%p153) target = $region32
      $region31: #{mask_decoder_forward.18} parent=27 // pred_region
        %s156 = smul.u32 10, %s10
        %p157 = scmp.lt.s32.totalorder %s156, 19
        %s158 = scalar_select %p157, %s156, 19
        %s159 = smul.addr %s158, 4
        %s160 = scalar_lea.vmem %s0, %s159
        %s161 = smul.u32 10, %s10
      $region32: #{mask_decoder_forward.18} parent=27 // pred_fallthru
        _
    $region28: #{mask_decoder_forward.18} parent=5 // pred_fallthru
      _
    %p162 = scmp.le.s32.totalorder 1, %s10
    %p163 = scmp.lt.s32.totalorder %s10, 3
    %p164 = pnand %p162, %p163
    %p165 = pneg %p164
    // Predicated region
    $region33: #{mask_decoder_forward.18} parent=5 // pred_check
      _
    $region34: #{mask_decoder_forward.18} parent=5 // pred_check_branch
      %167 = sbr.rel (%p164) target = $region36
    $region35: #{mask_decoder_forward.18} parent=5 // pred_region
      %s168 = ssub.s32 %s10, 1
      %s169 = smul.u32 10, %s15
      %p170 = scmp.lt.s32.totalorder %s169, 19
      %s171 = scalar_select %p170, %s169, 19
      %s172 = smul.addr %s171, 4
      %s173 = scalar_lea.vmem %s0, %s172
      %p174 = pneg %p36
      %p175 = pneg %p33
      %p176 = pneg %p57
      %p177 = pneg %p54
      %p178 = pneg %p78
      %p179 = pneg %p75
      %p180 = pneg %p99
      %p181 = pneg %p96
      %p182 = pneg %p125
      %p183 = pneg %p122
      %s184 = smul.u32 10, %s15
      %p185 = scmp.lt.s32.totalorder %s184, 19
      %s186 = scalar_select %p185, %s184, 19
      %s187 = smul.addr %s186, 4
      %s188 = scalar_lea.vmem %s4, %s187
      %s189 = smul.u32 10, %s15
      %p190 = scmp.lt.s32.totalorder %s189, 19
      %s191 = scalar_select %p190, %s189, 19
      %s192 = smul.addr %s191, 4
      %s193 = scalar_lea.vmem %s0, %s192
      %s194 = smul.u32 10, %s15
      %s195 = smul.u32 10, %s15
      %p196 = scmp.lt.s32.totalorder %s195, 19
      %s197 = scalar_select %p196, %s195, 19
      %s198 = smul.addr %s197, 4
      %s199 = scalar_lea.vmem %s4, %s198
      %s200 = smul.u32 10, %s15
      %v202 = vld [vmem:[%s193] sm:$0xf]
      %v203 = vld [vmem:[%s193 + $0x4] sm:$0xf]
      %v204 = vld [vmem:[%s193 + $0x8] sm:$0xf]
      %v205 = vld [vmem:[%s193 + $0xc] sm:$0xf]
      %v206 = vld [vmem:[%s193 + $0x10] sm:$0xf]
      %v207 = vld [vmem:[%s193 + $0x14] sm:$0xf]
      %v208 = vld [vmem:[%s193 + $0x18] sm:$0xf]
      %v209 = vld [vmem:[%s193 + $0x1c] sm:$0xf]
      %v210 = vld [vmem:[%s193 + $0x20] sm:$0xf]
      %v211 = vld [vmem:[%s193 + $0x24] sm:$0xf]
      %v212 = vld [vmem:[%s1] sm:$0xf]
      %v213 = vld [vmem:[%s1 + $0x4] sm:$0xf]
      %v214 = vld [vmem:[%s2] sm:$0xf]
      %v215 = vld [vmem:[%s2 + $0x4] sm:$0xf]
      %v226 = vunpack.c.l.b16 %v202
      %v227 = vunpack.c.l.b16 %v203
      %v228 = vunpack.c.l.b16 %v204
      %v229 = vunpack.c.l.b16 %v205
      %v230 = vunpack.c.l.b16 %v206
      %v231 = vunpack.c.l.b16 %v207
      %v232 = vunpack.c.l.b16 %v208
      %v233 = vunpack.c.l.b16 %v209
      %v234 = vunpack.c.l.b16 %v210
      %v235 = vunpack.c.l.b16 %v211
      %v236 = vpack.c.b16 %v227, %v226
      %v237 = vpack.c.b16 %v229, %v228
      %v238 = vpack.c.b16 %v231, %v230
      %v239 = vpack.c.b16 %v233, %v232
      %v240 = vpack.c.b16 %v235, %v234
      %v243 = vunpack.c.l.b16 %v214
      %v244 = vunpack.c.l.b16 %v215
      %v245 = vpack.c.b16 %v244, %v243
      %vm247 = vcmask 130048
      %v249 = vsel %vm247, %v236, 0
      %v252 = vsel %vm247, %v237, 0
      %v255 = vsel %vm247, %v238, 0
      %v258 = vsel %vm247, %v239, 0
      %v261 = vsel %vm247, %v240, 0
      %263 = vmatprep.subr.bf16.mxu0 0
      %264 = vmatpush1.bf16.msra.mxu0 %v245
      %265 = vmatprep.subr.bf16.mxu0 0
      %266 = vmatpush1.bf16.msra.mxu0 0
      %267 = vmatprep.subr.bf16.mxu0 0
      %268 = vmatpush1.bf16.msra.mxu0 0
      %269 = vmatprep.subr.bf16.mxu0 0
      %270 = vmatpush1.bf16.msra.mxu0 0
      %271 = vmatprep.subr.bf16.mxu0 0
      %272 = vmatpush1.bf16.msra.mxu0 0
      %273 = vmatprep.subr.bf16.mxu0 0
      %274 = vmatpush1.bf16.msra.mxu0 0
      %275 = vmatprep.subr.bf16.mxu0 0
      %276 = vmatpush1.bf16.msra.mxu0 0
      %277 = vmatprep.subr.bf16.mxu0 0
      %278 = vmatpush1.bf16.msra.mxu0 0
      %279 = vmatprep.subr.bf16.mxu0 0
      %280 = vmatpush1.bf16.msra.mxu0 0
      %281 = vmatprep.subr.bf16.mxu0 0
      %282 = vmatpush1.bf16.msra.mxu0 0
      %283 = vmatprep.subr.bf16.mxu0 0
      %284 = vmatpush1.bf16.msra.mxu0 0
      %285 = vmatprep.subr.bf16.mxu0 0
      %286 = vmatpush1.bf16.msra.mxu0 0
      %287 = vmatprep.subr.bf16.mxu0 0
      %288 = vmatpush1.bf16.msra.mxu0 0
      %289 = vmatprep.subr.bf16.mxu0 0
      %290 = vmatpush1.bf16.msra.mxu0 0
      %291 = vmatprep.subr.bf16.mxu0 0
      %292 = vmatpush1.bf16.msra.mxu0 0
      %293 = vmatprep.subr.bf16.mxu0 0
      %294 = vmatpush1.bf16.msra.mxu0 0
      %295 = vmatprep.mubr.bf16.mxu0 0
      %296 = vmatmul.mubr.bf16.gmra.mrb[0].mxu0 %v249
      %v297 = vpop.f32.mrb[0].mxu0
      %v298 = vadd.f32 0.0, %v297
      %v299 = vpop.f32.mrb[0].mxu0
      %v300 = vpop.f32.mrb[0].mxu0
      %v301 = vadd.f32 0.0, %v300
      %v302 = vpop.f32.mrb[0].mxu0
      %303 = vmatprep.mubr.bf16.mxu0 0
      %304 = vmatmul.mubr.bf16.gmra.mrb[0].mxu0 %v252
      %v305 = vpop.f32.mrb[0].mxu0
      %v306 = vadd.f32 0.0, %v305
      %v307 = vpop.f32.mrb[0].mxu0
      %v308 = vpop.f32.mrb[0].mxu0
      %v309 = vadd.f32 0.0, %v308
      %v310 = vpop.f32.mrb[0].mxu0
      %311 = vmatprep.mubr.bf16.mxu0 0
      %312 = vmatmul.mubr.bf16.gmra.mrb[0].mxu0 %v255
      %v313 = vpop.f32.mrb[0].mxu0
      %v314 = vadd.f32 0.0, %v313
      %v315 = vpop.f32.mrb[0].mxu0
      %v316 = vpop.f32.mrb[0].mxu0
      %v317 = vadd.f32 0.0, %v316
      %v318 = vpop.f32.mrb[0].mxu0
      %319 = vmatprep.mubr.bf16.mxu0 0
      %320 = vmatmul.mubr.bf16.gmra.mrb[0].mxu0 %v258
      %v321 = vpop.f32.mrb[0].mxu0
      %v322 = vadd.f32 0.0, %v321
      %v323 = vpop.f32.mrb[0].mxu0
      %v324 = vpop.f32.mrb[0].mxu0
      %v325 = vadd.f32 0.0, %v324
      %v326 = vpop.f32.mrb[0].mxu0
      %327 = vmatprep.mubr.bf16.mxu0 0
      %328 = vmatmul.mubr.bf16.gmra.mrb[0].mxu0 %v261
      %v329 = vpop.f32.mrb[0].mxu0
      %v330 = vadd.f32 0.0, %v329
      %v331 = vpop.f32.mrb[0].mxu0
      %v332 = vpop.f32.mrb[0].mxu0
      %v333 = vadd.f32 0.0, %v332
      %v334 = vpop.f32.mrb[0].mxu0
      %335 = vdwg.mxu0
      %vm346 = vcmask 1046528
      %v347 = vrot.slane %v298, 1
      %v348 = vrot.slane %v301, 1
      %v349 = vsel %vm346, %v347, %v348
      %v350 = vrot.slane %v306, 1
      %v351 = vsel %vm346, %v348, %v350
      %v352 = vrot.slane %v309, 1
      %v353 = vsel %vm346, %v350, %v352
      %v354 = vrot.slane %v314, 1
      %v355 = vsel %vm346, %v352, %v354
      %v356 = vrot.slane %v317, 1
      %v357 = vsel %vm346, %v354, %v356
      %v358 = vrot.slane %v322, 1
      %v359 = vsel %vm346, %v356, %v358
      %v360 = vrot.slane %v325, 1
      %v361 = vsel %vm346, %v358, %v360
      %v362 = vrot.slane %v330, 1
      %v363 = vsel %vm346, %v360, %v362
      %v364 = vrot.slane %v333, 1
      %v365 = vsel %vm346, %v362, %v364
      %v376 = vsel %vm346, %v364, 0.0
      %v379 = vunpack.c.l.b16 %v212
      %v380 = vunpack.c.l.b16 %v213
      %v381 = vpack.c.b16 %v380, %v379
      %383 = vmatprep.subr.bf16.mxu0 0
      %384 = vmatpush1.bf16.msra.mxu0 %v381
      %385 = vmatprep.subr.bf16.mxu0 0
      %386 = vmatpush1.bf16.msra.mxu0 0
      %387 = vmatprep.subr.bf16.mxu0 0
      %388 = vmatpush1.bf16.msra.mxu0 0
      %389 = vmatprep.subr.bf16.mxu0 0
      %390 = vmatpush1.bf16.msra.mxu0 0
      %391 = vmatprep.subr.bf16.mxu0 0
      %392 = vmatpush1.bf16.msra.mxu0 0
      %393 = vmatprep.subr.bf16.mxu0 0
      %394 = vmatpush1.bf16.msra.mxu0 0
      %395 = vmatprep.subr.bf16.mxu0 0
      %396 = vmatpush1.bf16.msra.mxu0 0
      %397 = vmatprep.subr.bf16.mxu0 0
      %398 = vmatpush1.bf16.msra.mxu0 0
      %399 = vmatprep.subr.bf16.mxu0 0
      %400 = vmatpush1.bf16.msra.mxu0 0
      %401 = vmatprep.subr.bf16.mxu0 0
      %402 = vmatpush1.bf16.msra.mxu0 0
      %403 = vmatprep.subr.bf16.mxu0 0
      %404 = vmatpush1.bf16.msra.mxu0 0
      %405 = vmatprep.subr.bf16.mxu0 0
      %406 = vmatpush1.bf16.msra.mxu0 0
      %407 = vmatprep.subr.bf16.mxu0 0
      %408 = vmatpush1.bf16.msra.mxu0 0
      %409 = vmatprep.subr.bf16.mxu0 0
      %410 = vmatpush1.bf16.msra.mxu0 0
      %411 = vmatprep.subr.bf16.mxu0 0
      %412 = vmatpush1.bf16.msra.mxu0 0
      %413 = vmatprep.subr.bf16.mxu0 0
      %414 = vmatpush1.bf16.msra.mxu0 0
      %415 = vmatprep.mubr.bf16.mxu0 0
      %416 = vmatmul.mubr.bf16.gmra.mrb[0].mxu0 %v249
      %v417 = vpop.f32.mrb[0].mxu0
      %v418 = vadd.f32 %v349, %v417
      %v419 = vpop.f32.mrb[0].mxu0
      %v420 = vpop.f32.mrb[0].mxu0
      %v421 = vadd.f32 %v351, %v420
      %v422 = vpop.f32.mrb[0].mxu0
      %423 = vmatprep.mubr.bf16.mxu0 0
      %424 = vmatmul.mubr.bf16.gmra.mrb[0].mxu0 %v252
      %v425 = vpop.f32.mrb[0].mxu0
      %v426 = vadd.f32 %v353, %v425
      %v427 = vpop.f32.mrb[0].mxu0
      %v428 = vpop.f32.mrb[0].mxu0
      %v429 = vadd.f32 %v355, %v428
      %v430 = vpop.f32.mrb[0].mxu0
      %431 = vmatprep.mubr.bf16.mxu0 0
      %432 = vmatmul.mubr.bf16.gmra.mrb[0].mxu0 %v255
      %v433 = vpop.f32.mrb[0].mxu0
      %v434 = vadd.f32 %v357, %v433
      %v435 = vpop.f32.mrb[0].mxu0
      %v436 = vpop.f32.mrb[0].mxu0
      %v437 = vadd.f32 %v359, %v436
      %v438 = vpop.f32.mrb[0].mxu0
      %439 = vmatprep.mubr.bf16.mxu0 0
      %440 = vmatmul.mubr.bf16.gmra.mrb[0].mxu0 %v258
      %v441 = vpop.f32.mrb[0].mxu0
      %v442 = vadd.f32 %v361, %v441
      %v443 = vpop.f32.mrb[0].mxu0
      %v444 = vpop.f32.mrb[0].mxu0
      %v445 = vadd.f32 %v363, %v444
      %v446 = vpop.f32.mrb[0].mxu0
      %447 = vmatprep.mubr.bf16.mxu0 0
      %448 = vmatmul.mubr.bf16.gmra.mrb[0].mxu0 %v261
      %v449 = vpop.f32.mrb[0].mxu0
      %v450 = vadd.f32 %v365, %v449
      %v451 = vpop.f32.mrb[0].mxu0
      %v452 = vpop.f32.mrb[0].mxu0
      %v453 = vadd.f32 %v376, %v452
      %v454 = vpop.f32.mrb[0].mxu0
      %455 = vdwg.mxu0
      %v456 = vld [vmem:[%s3] sm:$0xf]
      %v457 = vld [vmem:[%s3 + $0x4] sm:$0xf]
      %v460 = vunpack.c.l.b16 %v456
      %v461 = vunpack.c.l.b16 %v457
      %v462 = vpack.c.b16 %v461, %v460
      %464 = vmatprep.subr.bf16.mxu0 0
      %465 = vmatpush1.bf16.msra.mxu0 %v462
      %466 = vmatprep.subr.bf16.mxu0 0
      %467 = vmatpush1.bf16.msra.mxu0 0
      %468 = vmatprep.subr.bf16.mxu0 0
      %469 = vmatpush1.bf16.msra.mxu0 0
      %470 = vmatprep.subr.bf16.mxu0 0
      %471 = vmatpush1.bf16.msra.mxu0 0
      %472 = vmatprep.subr.bf16.mxu0 0
      %473 = vmatpush1.bf16.msra.mxu0 0
      %474 = vmatprep.subr.bf16.mxu0 0
      %475 = vmatpush1.bf16.msra.mxu0 0
      %476 = vmatprep.subr.bf16.mxu0 0
      %477 = vmatpush1.bf16.msra.mxu0 0
      %478 = vmatprep.subr.bf16.mxu0 0
      %479 = vmatpush1.bf16.msra.mxu0 0
      %480 = vmatprep.subr.bf16.mxu0 0
      %481 = vmatpush1.bf16.msra.mxu0 0
      %482 = vmatprep.subr.bf16.mxu0 0
      %483 = vmatpush1.bf16.msra.mxu0 0
      %484 = vmatprep.subr.bf16.mxu0 0
      %485 = vmatpush1.bf16.msra.mxu0 0
      %486 = vmatprep.subr.bf16.mxu0 0
      %487 = vmatpush1.bf16.msra.mxu0 0
      %488 = vmatprep.subr.bf16.mxu0 0
      %489 = vmatpush1.bf16.msra.mxu0 0
      %490 = vmatprep.subr.bf16.mxu0 0
      %491 = vmatpush1.bf16.msra.mxu0 0
      %492 = vmatprep.subr.bf16.mxu0 0
      %493 = vmatpush1.bf16.msra.mxu0 0
      %494 = vmatprep.subr.bf16.mxu0 0
      %495 = vmatpush1.bf16.msra.mxu0 0
      %496 = vmatprep.mubr.bf16.mxu0 0
      %497 = vmatmul.mubr.bf16.gmra.mrb[0].mxu0 %v249
      %v498 = vpop.f32.mrb[0].mxu0
      %v499 = vadd.f32 0.0, %v498
      %v500 = vpop.f32.mrb[0].mxu0
      %v501 = vpop.f32.mrb[0].mxu0
      %v502 = vadd.f32 0.0, %v501
      %v503 = vpop.f32.mrb[0].mxu0
      %504 = vmatprep.mubr.bf16.mxu0 0
      %505 = vmatmul.mubr.bf16.gmra.mrb[0].mxu0 %v252
      %v506 = vpop.f32.mrb[0].mxu0
      %v507 = vadd.f32 0.0, %v506
      %v508 = vpop.f32.mrb[0].mxu0
      %v509 = vpop.f32.mrb[0].mxu0
      %v510 = vadd.f32 0.0, %v509
      %v511 = vpop.f32.mrb[0].mxu0
      %512 = vmatprep.mubr.bf16.mxu0 0
      %513 = vmatmul.mubr.bf16.gmra.mrb[0].mxu0 %v255
      %v514 = vpop.f32.mrb[0].mxu0
      %v515 = vadd.f32 0.0, %v514
      %v516 = vpop.f32.mrb[0].mxu0
      %v517 = vpop.f32.mrb[0].mxu0
      %v518 = vadd.f32 0.0, %v517
      %v519 = vpop.f32.mrb[0].mxu0
      %520 = vmatprep.mubr.bf16.mxu0 0
      %521 = vmatmul.mubr.bf16.gmra.mrb[0].mxu0 %v258
      %v522 = vpop.f32.mrb[0].mxu0
      %v523 = vadd.f32 0.0, %v522
      %v524 = vpop.f32.mrb[0].mxu0
      %v525 = vpop.f32.mrb[0].mxu0
      %v526 = vadd.f32 0.0, %v525
      %v527 = vpop.f32.mrb[0].mxu0
      %528 = vmatprep.mubr.bf16.mxu0 0
      %529 = vmatmul.mubr.bf16.gmra.mrb[0].mxu0 %v261
      %v530 = vpop.f32.mrb[0].mxu0
      %v531 = vadd.f32 0.0, %v530
      %v532 = vpop.f32.mrb[0].mxu0
      %v533 = vpop.f32.mrb[0].mxu0
      %v534 = vadd.f32 0.0, %v533
      %v535 = vpop.f32.mrb[0].mxu0
      %536 = vdwg.mxu0
      %vm547 = vcmask 1045504
      %v548 = vrot.slane %v499, 2
      %v549 = vrot.slane %v502, 2
      %v550 = vsel %vm547, %v548, %v549
      %v551 = vrot.slane %v507, 2
      %v552 = vsel %vm547, %v549, %v551
      %v553 = vrot.slane %v510, 2
      %v554 = vsel %vm547, %v551, %v553
      %v555 = vrot.slane %v515, 2
      %v556 = vsel %vm547, %v553, %v555
      %v557 = vrot.slane %v518, 2
      %v558 = vsel %vm547, %v555, %v557
      %v559 = vrot.slane %v523, 2
      %v560 = vsel %vm547, %v557, %v559
      %v561 = vrot.slane %v526, 2
      %v562 = vsel %vm547, %v559, %v561
      %v563 = vrot.slane %v531, 2
      %v564 = vsel %vm547, %v561, %v563
      %v565 = vrot.slane %v534, 2
      %v566 = vsel %vm547, %v563, %v565
      %v577 = vsel %vm547, %v565, 0.0
      %v578 = vadd.f32 %v418, %v550
      %v579 = vadd.f32 %v421, %v552
      %v580 = vadd.f32 %v426, %v554
      %v581 = vadd.f32 %v429, %v556
      %v582 = vadd.f32 %v434, %v558
      %v583 = vadd.f32 %v437, %v560
      %v584 = vadd.f32 %v442, %v562
      %v585 = vadd.f32 %v445, %v564
      %v586 = vadd.f32 %v450, %v566
      %v587 = vadd.f32 %v453, %v577
      %v588 = vpack.c.bf16 %v579, %v578
      %v589 = vpack.c.bf16 %v581, %v580
      %v590 = vpack.c.bf16 %v583, %v582
      %v591 = vpack.c.bf16 %v585, %v584
      %v592 = vpack.c.bf16 %v587, %v586
      %v598 = vunpack.c.l.b16 %v588
      %v599 = vunpack.c.h.b16 %v588
      %v600 = vunpack.c.l.b16 %v589
      %v601 = vunpack.c.h.b16 %v589
      %v602 = vunpack.c.l.b16 %v590
      %v603 = vunpack.c.h.b16 %v590
      %v604 = vunpack.c.l.b16 %v591
      %v605 = vunpack.c.h.b16 %v591
      %v606 = vunpack.c.l.b16 %v592
      %v607 = vunpack.c.h.b16 %v592
      %v608 = vpack.c.b16 %v598, %v598
      %v609 = vpack.c.b16 %v599, %v599
      %v610 = vpack.c.b16 %v600, %v600
      %v611 = vpack.c.b16 %v601, %v601
      %v612 = vpack.c.b16 %v602, %v602
      %v613 = vpack.c.b16 %v603, %v603
      %v614 = vpack.c.b16 %v604, %v604
      %v615 = vpack.c.b16 %v605, %v605
      %v616 = vpack.c.b16 %v606, %v606
      %v617 = vpack.c.b16 %v607, %v607
      %vm628 = vcmask 191488
      %629 = vst.msk [vmem:[%s199] sm:$0xf] %vm628, %v608
      %630 = vst.msk [vmem:[%s199 + $0x4] sm:$0xf] %vm628, %v609
      %631 = vst.msk [vmem:[%s199 + $0x8] sm:$0xf] %vm628, %v610
      %632 = vst.msk [vmem:[%s199 + $0xc] sm:$0xf] %vm628, %v611
      %633 = vst.msk [vmem:[%s199 + $0x10] sm:$0xf] %vm628, %v612
      %634 = vst.msk [vmem:[%s199 + $0x14] sm:$0xf] %vm628, %v613
      %635 = vst.msk [vmem:[%s199 + $0x18] sm:$0xf] %vm628, %v614
      %636 = vst.msk [vmem:[%s199 + $0x1c] sm:$0xf] %vm628, %v615
      %637 = vst.msk [vmem:[%s199 + $0x20] sm:$0xf] %vm628, %v616
      %638 = vst.msk [vmem:[%s199 + $0x24] sm:$0xf] %vm628, %v617
      %s639 = smul.u32 10, %s15
      %p640 = scmp.lt.s32.totalorder %s639, 19
      %s641 = scalar_select %p640, %s639, 19
      %s642 = smul.addr %s641, 4
      %s643 = scalar_lea.vmem %s4, %s642
      // Predicated region
      $region37: #{mask_decoder_forward.18} parent=35 // pred_check
        %p644 = pneg %p122
      $region38: #{mask_decoder_forward.18} parent=35 // pred_check_branch
        %646 = sbr.rel (%p644) target = $region40
      $region39: #{mask_decoder_forward.18} parent=35 // pred_region
        %s647 = smul.u32 10, %s15
      $region40: #{mask_decoder_forward.18} parent=35 // pred_fallthru
        _
    $region36: #{mask_decoder_forward.18} parent=5 // pred_fallthru
      _
    %p648 = scmp.le.s32.totalorder 2, %s10
    // Predicated region
    $region41: #{mask_decoder_forward.18} parent=5 // pred_check
      %p649 = pneg %p648
    $region42: #{mask_decoder_forward.18} parent=5 // pred_check_branch
      %651 = sbr.rel (%p649) target = $region44
    $region43: #{mask_decoder_forward.18} parent=5 // pred_region
      %s652 = ssub.s32 %s10, 2
      // Predicated region
      $region45: #{mask_decoder_forward.18} parent=43 // pred_check
        %p653 = pneg %p128
      $region46: #{mask_decoder_forward.18} parent=43 // pred_check_branch
        %655 = sbr.rel (%p653) target = $region48
      $region47: #{mask_decoder_forward.18} parent=43 // pred_region
        %s656 = smul.u32 10, %s16
        %p657 = scmp.lt.s32.totalorder %s656, 19
        %s658 = scalar_select %p657, %s656, 19
        %s659 = smul.addr %s658, 4
        %s660 = scalar_lea.vmem %s4, %s659
      $region48: #{mask_decoder_forward.18} parent=43 // pred_fallthru
        _
    $region44: #{mask_decoder_forward.18} parent=5 // pred_fallthru
      _
  $region6: #{mask_decoder_forward.18} parent=0 // loop_footer
    %s14 = sadd.s32 1, %s10
  $region7: #{mask_decoder_forward.18} parent=0 // loop_footer_branch
    %9 = sbr.rel target = $region3
  $region8: #{mask_decoder_forward.18} parent=0 // loop_exit
    _

// kernel: mask_decoder_forward.21
$region0: #{mask_decoder_forward.21}
  #allocation0 [shape = 'u32[]', space=smem, size = 0x4, offset = 0x4, fixed_abs, tag = 'smem constant byte address 0x4 - core index']
  #allocation1 [shape = 'u32[144,128]{1,0:T(1,128)}', space=vmem, size = 0x12000, scoped, tag = 'internal scratch']
  %s0 = inlined_call_operand.vmem [shape: bf16[320,24], index: 0, kind: input, shape index: {}]
  %s1 = inlined_call_operand.vmem [shape: bf16[24,24], index: 1, kind: input, shape index: {}]
  %s2 = inlined_call_operand.vmem [shape: bf16[24,24], index: 2, kind: input, shape index: {}]
  %s3 = inlined_call_operand.vmem [shape: bf16[24,24], index: 3, kind: input, shape index: {}]
  %s4 = inlined_call_operand.vmem [shape: bf16[320,24], index: 4, kind: output, shape index: {}]
  %s5 = sld [smem:[#allocation0]]
  $region49: #{mask_decoder_forward.21} parent=0
    _
  %s7 = ssub.s32 1, %s5
  %s8 = scalar_select 0, %s7, %s5
  loop: start=0, step=1, limit=6
  $region2: #{mask_decoder_forward.21} parent=0 // loop_pre_header
    _
  $region3: #{mask_decoder_forward.21} parent=0 // loop_header
    %s10 = sphi 0, %s14
    %p11 = scmp.ge.s32.totalorder %s10, 6
    %s20 = sphi 0, %s22
    %s23 = sphi 0, %s20
    %s24 = sphi 0, %s23
    %s40 = sphi 0, %s24
    %s44 = sphi 0, %s44
    %s46 = sphi 0, %s44
    %s47 = sphi 0, %s46
    %s61 = sphi 0, %s47
    %s65 = sphi 0, %s65
    %s67 = sphi 0, %s65
    %s68 = sphi 0, %s67
    %s82 = sphi 0, %s68
    %s86 = sphi 0, %s86
    %s88 = sphi 0, %s86
    %s89 = sphi 0, %s88
    %s103 = sphi 0, %s89
    %s109 = sphi 0, %s111
    %s112 = sphi 0, %s109
    %s113 = sphi 0, %s112
    %s129 = sphi 0, %s113
  $region4: #{mask_decoder_forward.21} parent=0 // loop_header_branch
    %13 = sbr.rel (%p11) target = $region8
  $region5: #{mask_decoder_forward.21} parent=0 // loop_body
    %s15 = ssub.s32 %s10, 1
    %s16 = ssub.s32 %s10, 2
    %s17 = sadd.s32 %s10, 1
    %s18 = ssub.s32 %s10, %s17
    %p19 = scmp.eq.s32.totalorder %s18, 0
    %s21 = sadd.s32 %s20, 1
    %s22 = scalar_select %p19, %s20, %s21
    %p25 = pneg %p19
    %p26 = scmp.eq.s32.totalorder %s10, 3
    %p27 = por %p25, %p26
    %p28 = scmp.ne.s32.totalorder %s20, %s23
    %p29 = scmp.eq.s32.totalorder %s10, 0
    %p30 = por %p28, %p29
    %p31 = scmp.ne.s32.totalorder %s20, %s23
    %p32 = scmp.eq.s32.totalorder %s15, 3
    %p33 = por %p31, %p32
    %p34 = scmp.ne.s32.totalorder %s23, %s24
    %p35 = scmp.eq.s32.totalorder %s15, 0
    %p36 = por %p34, %p35
    %p37 = scmp.ne.s32.totalorder %s23, %s24
    %p38 = scmp.eq.s32.totalorder %s16, 3
    %p39 = por %p37, %p38
    %p41 = scmp.ne.s32.totalorder %s24, %s40
    %p42 = scmp.eq.s32.totalorder %s16, 0
    %p43 = por %p41, %p42
    %s45 = sadd.s32 %s44, 1
    %p48 = scmp.eq.s32.totalorder %s10, 3
    %p49 = scmp.ne.s32.totalorder %s44, %s46
    %p50 = scmp.eq.s32.totalorder %s10, 0
    %p51 = por %p49, %p50
    %p52 = scmp.ne.s32.totalorder %s44, %s46
    %p53 = scmp.eq.s32.totalorder %s15, 3
    %p54 = por %p52, %p53
    %p55 = scmp.ne.s32.totalorder %s46, %s47
    %p56 = scmp.eq.s32.totalorder %s15, 0
    %p57 = por %p55, %p56
    %p58 = scmp.ne.s32.totalorder %s46, %s47
    %p59 = scmp.eq.s32.totalorder %s16, 3
    %p60 = por %p58, %p59
    %p62 = scmp.ne.s32.totalorder %s47, %s61
    %p63 = scmp.eq.s32.totalorder %s16, 0
    %p64 = por %p62, %p63
    %s66 = sadd.s32 %s65, 1
    %p69 = scmp.eq.s32.totalorder %s10, 3
    %p70 = scmp.ne.s32.totalorder %s65, %s67
    %p71 = scmp.eq.s32.totalorder %s10, 0
    %p72 = por %p70, %p71
    %p73 = scmp.ne.s32.totalorder %s65, %s67
    %p74 = scmp.eq.s32.totalorder %s15, 3
    %p75 = por %p73, %p74
    %p76 = scmp.ne.s32.totalorder %s67, %s68
    %p77 = scmp.eq.s32.totalorder %s15, 0
    %p78 = por %p76, %p77
    %p79 = scmp.ne.s32.totalorder %s67, %s68
    %p80 = scmp.eq.s32.totalorder %s16, 3
    %p81 = por %p79, %p80
    %p83 = scmp.ne.s32.totalorder %s68, %s82
    %p84 = scmp.eq.s32.totalorder %s16, 0
    %p85 = por %p83, %p84
    %s87 = sadd.s32 %s86, 1
    %p90 = scmp.eq.s32.totalorder %s10, 3
    %p91 = scmp.ne.s32.totalorder %s86, %s88
    %p92 = scmp.eq.s32.totalorder %s10, 0
    %p93 = por %p91, %p92
    %p94 = scmp.ne.s32.totalorder %s86, %s88
    %p95 = scmp.eq.s32.totalorder %s15, 3
    %p96 = por %p94, %p95
    %p97 = scmp.ne.s32.totalorder %s88, %s89
    %p98 = scmp.eq.s32.totalorder %s15, 0
    %p99 = por %p97, %p98
    %p100 = scmp.ne.s32.totalorder %s88, %s89
    %p101 = scmp.eq.s32.totalorder %s16, 3
    %p102 = por %p100, %p101
    %p104 = scmp.ne.s32.totalorder %s89, %s103
    %p105 = scmp.eq.s32.totalorder %s16, 0
    %p106 = por %p104, %p105
    %s107 = ssub.s32 %s10, %s17
    %p108 = scmp.eq.s32.totalorder %s107, 0
    %s110 = sadd.s32 %s109, 1
    %s111 = scalar_select %p108, %s109, %s110
    %p114 = pneg %p108
    %p115 = scmp.eq.s32.totalorder %s10, 3
    %p116 = por %p114, %p115
    %p117 = scmp.ne.s32.totalorder %s109, %s112
    %p118 = scmp.eq.s32.totalorder %s10, 0
    %p119 = por %p117, %p118
    %p120 = scmp.ne.s32.totalorder %s109, %s112
    %p121 = scmp.eq.s32.totalorder %s15, 3
    %p122 = por %p120, %p121
    %p123 = scmp.ne.s32.totalorder %s112, %s113
    %p124 = scmp.eq.s32.totalorder %s15, 0
    %p125 = por %p123, %p124
    %p126 = scmp.ne.s32.totalorder %s112, %s113
    %p127 = scmp.eq.s32.totalorder %s16, 3
    %p128 = por %p126, %p127
    %p130 = scmp.ne.s32.totalorder %s113, %s129
    %p131 = scmp.eq.s32.totalorder %s16, 0
    %p132 = por %p130, %p131
    %p133 = scmp.le.s32.totalorder 1, %s10
    %p134 = scmp.lt.s32.totalorder %s10, 5
    %p135 = pnand %p133, %p134
    %p136 = pneg %p135
    // Predicated region
    $region9: #{mask_decoder_forward.21} parent=5 // pred_check
      _
    $region10: #{mask_decoder_forward.21} parent=5 // pred_check_branch
      %138 = sbr.rel (%p135) target = $region12
    $region11: #{mask_decoder_forward.21} parent=5 // pred_region
      %s139 = ssub.s32 %s10, 1
      // Predicated region
      $region13: #{mask_decoder_forward.21} parent=11 // pred_check
        %p140 = pneg %p57
      $region14: #{mask_decoder_forward.21} parent=11 // pred_check_branch
        %142 = sbr.rel (%p140) target = $region16
      $region15: #{mask_decoder_forward.21} parent=11 // pred_region
        _
      $region16: #{mask_decoder_forward.21} parent=11 // pred_fallthru
        _
      // Predicated region
      $region17: #{mask_decoder_forward.21} parent=11 // pred_check
        %p143 = pneg %p78
      $region18: #{mask_decoder_forward.21} parent=11 // pred_check_branch
        %145 = sbr.rel (%p143) target = $region20
      $region19: #{mask_decoder_forward.21} parent=11 // pred_region
        _
      $region20: #{mask_decoder_forward.21} parent=11 // pred_fallthru
        _
      // Predicated region
      $region21: #{mask_decoder_forward.21} parent=11 // pred_check
        %p146 = pneg %p99
      $region22: #{mask_decoder_forward.21} parent=11 // pred_check_branch
        %148 = sbr.rel (%p146) target = $region24
      $region23: #{mask_decoder_forward.21} parent=11 // pred_region
        _
      $region24: #{mask_decoder_forward.21} parent=11 // pred_fallthru
        _
    $region12: #{mask_decoder_forward.21} parent=5 // pred_fallthru
      _
    %p149 = scmp.lt.s32.totalorder %s10, 4
    // Predicated region
    $region25: #{mask_decoder_forward.21} parent=5 // pred_check
      %p150 = pneg %p149
    $region26: #{mask_decoder_forward.21} parent=5 // pred_check_branch
      %152 = sbr.rel (%p150) target = $region28
    $region27: #{mask_decoder_forward.21} parent=5 // pred_region
      // Predicated region
      $region29: #{mask_decoder_forward.21} parent=27 // pred_check
        %p153 = pneg %p30
      $region30: #{mask_decoder_forward.21} parent=27 // pred_check_branch
        %155 = sbr.rel (%p153) target = $region32
      $region31: #{mask_decoder_forward.21} parent=27 // pred_region
        %s156 = smul.u32 10, %s10
        %p157 = scmp.lt.s32.totalorder %s156, 39
        %s158 = scalar_select %p157, %s156, 39
        %s159 = smul.addr %s158, 4
        %s160 = scalar_lea.vmem %s0, %s159
        %s161 = smul.u32 10, %s10
      $region32: #{mask_decoder_forward.21} parent=27 // pred_fallthru
        _
    $region28: #{mask_decoder_forward.21} parent=5 // pred_fallthru
      _
    %p162 = scmp.le.s32.totalorder 1, %s10
    %p163 = scmp.lt.s32.totalorder %s10, 5
    %p164 = pnand %p162, %p163
    %p165 = pneg %p164
    // Predicated region
    $region33: #{mask_decoder_forward.21} parent=5 // pred_check
      _
    $region34: #{mask_decoder_forward.21} parent=5 // pred_check_branch
      %167 = sbr.rel (%p164) target = $region36
    $region35: #{mask_decoder_forward.21} parent=5 // pred_region
      %s168 = ssub.s32 %s10, 1
      %s169 = smul.u32 10, %s15
      %p170 = scmp.lt.s32.totalorder %s169, 39
      %s171 = scalar_select %p170, %s169, 39
      %s172 = smul.addr %s171, 4
      %s173 = scalar_lea.vmem %s0, %s172
      %p174 = pneg %p36
      %p175 = pneg %p33
      %p176 = pneg %p57
      %p177 = pneg %p54
      %p178 = pneg %p78
      %p179 = pneg %p75
      %p180 = pneg %p99
      %p181 = pneg %p96
      %p182 = pneg %p125
      %p183 = pneg %p122
      %s184 = smul.u32 10, %s15
      %p185 = scmp.lt.s32.totalorder %s184, 39
      %s186 = scalar_select %p185, %s184, 39
      %s187 = smul.addr %s186, 4
      %s188 = scalar_lea.vmem %s4, %s187
      %s189 = smul.u32 10, %s15
      %p190 = scmp.lt.s32.totalorder %s189, 39
      %s191 = scalar_select %p190, %s189, 39
      %s192 = smul.addr %s191, 4
      %s193 = scalar_lea.vmem %s0, %s192
      %s194 = smul.u32 10, %s15
      %s195 = smul.u32 10, %s15
      %p196 = scmp.lt.s32.totalorder %s195, 39
      %s197 = scalar_select %p196, %s195, 39
      %s198 = smul.addr %s197, 4
      %s199 = scalar_lea.vmem %s4, %s198
      %s200 = smul.u32 10, %s15
      %v202 = vld [vmem:[%s193] sm:$0xf]
      %v203 = vld [vmem:[%s193 + $0x4] sm:$0xf]
      %v204 = vld [vmem:[%s193 + $0x8] sm:$0xf]
      %v205 = vld [vmem:[%s193 + $0xc] sm:$0xf]
      %v206 = vld [vmem:[%s193 + $0x10] sm:$0xf]
      %v207 = vld [vmem:[%s193 + $0x14] sm:$0xf]
      %v208 = vld [vmem:[%s193 + $0x18] sm:$0xf]
      %v209 = vld [vmem:[%s193 + $0x1c] sm:$0xf]
      %v210 = vld [vmem:[%s193 + $0x20] sm:$0xf]
      %v211 = vld [vmem:[%s193 + $0x24] sm:$0xf]
      %v212 = vld [vmem:[%s1] sm:$0xf]
      %v213 = vld [vmem:[%s1 + $0x4] sm:$0xf]
      %v214 = vld [vmem:[%s1 + $0x8] sm:$0xf]
      %v215 = vld [vmem:[%s2] sm:$0xf]
      %v216 = vld [vmem:[%s2 + $0x4] sm:$0xf]
      %v217 = vld [vmem:[%s2 + $0x8] sm:$0xf]
      %v228 = vunpack.c.l.b16 %v202
      %v229 = vunpack.c.l.b16 %v203
      %v230 = vunpack.c.l.b16 %v204
      %v231 = vunpack.c.l.b16 %v205
      %v232 = vunpack.c.l.b16 %v206
      %v233 = vunpack.c.l.b16 %v207
      %v234 = vunpack.c.l.b16 %v208
      %v235 = vunpack.c.l.b16 %v209
      %v236 = vunpack.c.l.b16 %v210
      %v237 = vunpack.c.l.b16 %v211
      %v238 = vpack.c.b16 %v229, %v228
      %v239 = vpack.c.b16 %v231, %v230
      %v240 = vpack.c.b16 %v233, %v232
      %v241 = vpack.c.b16 %v235, %v234
      %v242 = vpack.c.b16 %v237, %v236
      %v246 = vunpack.c.l.b16 %v215
      %v247 = vunpack.c.l.b16 %v216
      %v248 = vunpack.c.l.b16 %v217
      %v249 = vpack.c.b16 %v247, %v246
      %v250 = vpack.c.b16 %v248, %v248
      %vm252 = vcmask 195584
      %v254 = vsel %vm252, %v238, 0
      %v257 = vsel %vm252, %v239, 0
      %v260 = vsel %vm252, %v240, 0
      %v263 = vsel %vm252, %v241, 0
      %v266 = vsel %vm252, %v242, 0
      %vm268 = vcmask 1043456
      %v270 = vsel %vm268, %v250, 0
      %272 = vmatprep.subr.bf16.mxu0 0
      %273 = vmatpush1.bf16.msra.mxu0 %v249
      %274 = vmatprep.subr.bf16.mxu0 0
      %275 = vmatpush1.bf16.msra.mxu0 %v270
      %276 = vmatprep.subr.bf16.mxu0 0
      %277 = vmatpush1.bf16.msra.mxu0 0
      %278 = vmatprep.subr.bf16.mxu0 0
      %279 = vmatpush1.bf16.msra.mxu0 0
      %280 = vmatprep.subr.bf16.mxu0 0
      %281 = vmatpush1.bf16.msra.mxu0 0
      %282 = vmatprep.subr.bf16.mxu0 0
      %283 = vmatpush1.bf16.msra.mxu0 0
      %284 = vmatprep.subr.bf16.mxu0 0
      %285 = vmatpush1.bf16.msra.mxu0 0
      %286 = vmatprep.subr.bf16.mxu0 0
      %287 = vmatpush1.bf16.msra.mxu0 0
      %288 = vmatprep.subr.bf16.mxu0 0
      %289 = vmatpush1.bf16.msra.mxu0 0
      %290 = vmatprep.subr.bf16.mxu0 0
      %291 = vmatpush1.bf16.msra.mxu0 0
      %292 = vmatprep.subr.bf16.mxu0 0
      %293 = vmatpush1.bf16.msra.mxu0 0
      %294 = vmatprep.subr.bf16.mxu0 0
      %295 = vmatpush1.bf16.msra.mxu0 0
      %296 = vmatprep.subr.bf16.mxu0 0
      %297 = vmatpush1.bf16.msra.mxu0 0
      %298 = vmatprep.subr.bf16.mxu0 0
      %299 = vmatpush1.bf16.msra.mxu0 0
      %300 = vmatprep.subr.bf16.mxu0 0
      %301 = vmatpush1.bf16.msra.mxu0 0
      %302 = vmatprep.subr.bf16.mxu0 0
      %303 = vmatpush1.bf16.msra.mxu0 0
      %304 = vmatprep.mubr.bf16.mxu0 0
      %305 = vmatmul.mubr.bf16.gmra.mrb[0].mxu0 %v254
      %v306 = vpop.f32.mrb[0].mxu0
      %v307 = vadd.f32 0.0, %v306
      %v308 = vpop.f32.mrb[0].mxu0
      %v309 = vpop.f32.mrb[0].mxu0
      %v310 = vadd.f32 0.0, %v309
      %v311 = vpop.f32.mrb[0].mxu0
      %312 = vmatprep.mubr.bf16.mxu0 0
      %313 = vmatmul.mubr.bf16.gmra.mrb[0].mxu0 %v257
      %v314 = vpop.f32.mrb[0].mxu0
      %v315 = vadd.f32 0.0, %v314
      %v316 = vpop.f32.mrb[0].mxu0
      %v317 = vpop.f32.mrb[0].mxu0
      %v318 = vadd.f32 0.0, %v317
      %v319 = vpop.f32.mrb[0].mxu0
      %320 = vmatprep.mubr.bf16.mxu0 0
      %321 = vmatmul.mubr.bf16.gmra.mrb[0].mxu0 %v260
      %v322 = vpop.f32.mrb[0].mxu0
      %v323 = vadd.f32 0.0, %v322
      %v324 = vpop.f32.mrb[0].mxu0
      %v325 = vpop.f32.mrb[0].mxu0
      %v326 = vadd.f32 0.0, %v325
      %v327 = vpop.f32.mrb[0].mxu0
      %328 = vmatprep.mubr.bf16.mxu0 0
      %329 = vmatmul.mubr.bf16.gmra.mrb[0].mxu0 %v263
      %v330 = vpop.f32.mrb[0].mxu0
      %v331 = vadd.f32 0.0, %v330
      %v332 = vpop.f32.mrb[0].mxu0
      %v333 = vpop.f32.mrb[0].mxu0
      %v334 = vadd.f32 0.0, %v333
      %v335 = vpop.f32.mrb[0].mxu0
      %336 = vmatprep.mubr.bf16.mxu0 0
      %337 = vmatmul.mubr.bf16.gmra.mrb[0].mxu0 %v266
      %v338 = vpop.f32.mrb[0].mxu0
      %v339 = vadd.f32 0.0, %v338
      %v340 = vpop.f32.mrb[0].mxu0
      %v341 = vpop.f32.mrb[0].mxu0
      %v342 = vadd.f32 0.0, %v341
      %v343 = vpop.f32.mrb[0].mxu0
      %344 = vdwg.mxu0
      %vm355 = vcmask 1046528
      %v356 = vrot.slane %v307, 1
      %v357 = vrot.slane %v310, 1
      %v358 = vsel %vm355, %v356, %v357
      %v359 = vrot.slane %v315, 1
      %v360 = vsel %vm355, %v357, %v359
      %v361 = vrot.slane %v318, 1
      %v362 = vsel %vm355, %v359, %v361
      %v363 = vrot.slane %v323, 1
      %v364 = vsel %vm355, %v361, %v363
      %v365 = vrot.slane %v326, 1
      %v366 = vsel %vm355, %v363, %v365
      %v367 = vrot.slane %v331, 1
      %v368 = vsel %vm355, %v365, %v367
      %v369 = vrot.slane %v334, 1
      %v370 = vsel %vm355, %v367, %v369
      %v371 = vrot.slane %v339, 1
      %v372 = vsel %vm355, %v369, %v371
      %v373 = vrot.slane %v342, 1
      %v374 = vsel %vm355, %v371, %v373
      %v385 = vsel %vm355, %v373, 0.0
      %v389 = vunpack.c.l.b16 %v212
      %v390 = vunpack.c.l.b16 %v213
      %v391 = vunpack.c.l.b16 %v214
      %v392 = vpack.c.b16 %v390, %v389
      %v393 = vpack.c.b16 %v391, %v391
      %v396 = vsel %vm268, %v393, 0
      %398 = vmatprep.subr.bf16.mxu0 0
      %399 = vmatpush1.bf16.msra.mxu0 %v392
      %400 = vmatprep.subr.bf16.mxu0 0
      %401 = vmatpush1.bf16.msra.mxu0 %v396
      %402 = vmatprep.subr.bf16.mxu0 0
      %403 = vmatpush1.bf16.msra.mxu0 0
      %404 = vmatprep.subr.bf16.mxu0 0
      %405 = vmatpush1.bf16.msra.mxu0 0
      %406 = vmatprep.subr.bf16.mxu0 0
      %407 = vmatpush1.bf16.msra.mxu0 0
      %408 = vmatprep.subr.bf16.mxu0 0
      %409 = vmatpush1.bf16.msra.mxu0 0
      %410 = vmatprep.subr.bf16.mxu0 0
      %411 = vmatpush1.bf16.msra.mxu0 0
      %412 = vmatprep.subr.bf16.mxu0 0
      %413 = vmatpush1.bf16.msra.mxu0 0
      %414 = vmatprep.subr.bf16.mxu0 0
      %415 = vmatpush1.bf16.msra.mxu0 0
      %416 = vmatprep.subr.bf16.mxu0 0
      %417 = vmatpush1.bf16.msra.mxu0 0
      %418 = vmatprep.subr.bf16.mxu0 0
      %419 = vmatpush1.bf16.msra.mxu0 0
      %420 = vmatprep.subr.bf16.mxu0 0
      %421 = vmatpush1.bf16.msra.mxu0 0
      %422 = vmatprep.subr.bf16.mxu0 0
      %423 = vmatpush1.bf16.msra.mxu0 0
      %424 = vmatprep.subr.bf16.mxu0 0
      %425 = vmatpush1.bf16.msra.mxu0 0
      %426 = vmatprep.subr.bf16.mxu0 0
      %427 = vmatpush1.bf16.msra.mxu0 0
      %428 = vmatprep.subr.bf16.mxu0 0
      %429 = vmatpush1.bf16.msra.mxu0 0
      %430 = vmatprep.mubr.bf16.mxu0 0
      %431 = vmatmul.mubr.bf16.gmra.mrb[0].mxu0 %v254
      %v432 = vpop.f32.mrb[0].mxu0
      %v433 = vadd.f32 %v358, %v432
      %v434 = vpop.f32.mrb[0].mxu0
      %v435 = vpop.f32.mrb[0].mxu0
      %v436 = vadd.f32 %v360, %v435
      %v437 = vpop.f32.mrb[0].mxu0
      %438 = vmatprep.mubr.bf16.mxu0 0
      %439 = vmatmul.mubr.bf16.gmra.mrb[0].mxu0 %v257
      %v440 = vpop.f32.mrb[0].mxu0
      %v441 = vadd.f32 %v362, %v440
      %v442 = vpop.f32.mrb[0].mxu0
      %v443 = vpop.f32.mrb[0].mxu0
      %v444 = vadd.f32 %v364, %v443
      %v445 = vpop.f32.mrb[0].mxu0
      %446 = vmatprep.mubr.bf16.mxu0 0
      %447 = vmatmul.mubr.bf16.gmra.mrb[0].mxu0 %v260
      %v448 = vpop.f32.mrb[0].mxu0
      %v449 = vadd.f32 %v366, %v448
      %v450 = vpop.f32.mrb[0].mxu0
      %v451 = vpop.f32.mrb[0].mxu0
      %v452 = vadd.f32 %v368, %v451
      %v453 = vpop.f32.mrb[0].mxu0
      %454 = vmatprep.mubr.bf16.mxu0 0
      %455 = vmatmul.mubr.bf16.gmra.mrb[0].mxu0 %v263
      %v456 = vpop.f32.mrb[0].mxu0
      %v457 = vadd.f32 %v370, %v456
      %v458 = vpop.f32.mrb[0].mxu0
      %v459 = vpop.f32.mrb[0].mxu0
      %v460 = vadd.f32 %v372, %v459
      %v461 = vpop.f32.mrb[0].mxu0
      %462 = vmatprep.mubr.bf16.mxu0 0
      %463 = vmatmul.mubr.bf16.gmra.mrb[0].mxu0 %v266
      %v464 = vpop.f32.mrb[0].mxu0
      %v465 = vadd.f32 %v374, %v464
      %v466 = vpop.f32.mrb[0].mxu0
      %v467 = vpop.f32.mrb[0].mxu0
      %v468 = vadd.f32 %v385, %v467
      %v469 = vpop.f32.mrb[0].mxu0
      %470 = vdwg.mxu0
      %v471 = vld [vmem:[%s3] sm:$0xf]
      %v472 = vld [vmem:[%s3 + $0x4] sm:$0xf]
      %v473 = vld [vmem:[%s3 + $0x8] sm:$0xf]
      %v477 = vunpack.c.l.b16 %v471
      %v478 = vunpack.c.l.b16 %v472
      %v479 = vunpack.c.l.b16 %v473
      %v480 = vpack.c.b16 %v478, %v477
      %v481 = vpack.c.b16 %v479, %v479
      %v484 = vsel %vm268, %v481, 0
      %486 = vmatprep.subr.bf16.mxu0 0
      %487 = vmatpush1.bf16.msra.mxu0 %v480
      %488 = vmatprep.subr.bf16.mxu0 0
      %489 = vmatpush1.bf16.msra.mxu0 %v484
      %490 = vmatprep.subr.bf16.mxu0 0
      %491 = vmatpush1.bf16.msra.mxu0 0
      %492 = vmatprep.subr.bf16.mxu0 0
      %493 = vmatpush1.bf16.msra.mxu0 0
      %494 = vmatprep.subr.bf16.mxu0 0
      %495 = vmatpush1.bf16.msra.mxu0 0
      %496 = vmatprep.subr.bf16.mxu0 0
      %497 = vmatpush1.bf16.msra.mxu0 0
      %498 = vmatprep.subr.bf16.mxu0 0
      %499 = vmatpush1.bf16.msra.mxu0 0
      %500 = vmatprep.subr.bf16.mxu0 0
      %501 = vmatpush1.bf16.msra.mxu0 0
      %502 = vmatprep.subr.bf16.mxu0 0
      %503 = vmatpush1.bf16.msra.mxu0 0
      %504 = vmatprep.subr.bf16.mxu0 0
      %505 = vmatpush1.bf16.msra.mxu0 0
      %506 = vmatprep.subr.bf16.mxu0 0
      %507 = vmatpush1.bf16.msra.mxu0 0
      %508 = vmatprep.subr.bf16.mxu0 0
      %509 = vmatpush1.bf16.msra.mxu0 0
      %510 = vmatprep.subr.bf16.mxu0 0
      %511 = vmatpush1.bf16.msra.mxu0 0
      %512 = vmatprep.subr.bf16.mxu0 0
      %513 = vmatpush1.bf16.msra.mxu0 0
      %514 = vmatprep.subr.bf16.mxu0 0
      %515 = vmatpush1.bf16.msra.mxu0 0
      %516 = vmatprep.subr.bf16.mxu0 0
      %517 = vmatpush1.bf16.msra.mxu0 0
      %518 = vmatprep.mubr.bf16.mxu0 0
      %519 = vmatmul.mubr.bf16.gmra.mrb[0].mxu0 %v254
      %v520 = vpop.f32.mrb[0].mxu0
      %v521 = vadd.f32 0.0, %v520
      %v522 = vpop.f32.mrb[0].mxu0
      %v523 = vpop.f32.mrb[0].mxu0
      %v524 = vadd.f32 0.0, %v523
      %v525 = vpop.f32.mrb[0].mxu0
      %526 = vmatprep.mubr.bf16.mxu0 0
      %527 = vmatmul.mubr.bf16.gmra.mrb[0].mxu0 %v257
      %v528 = vpop.f32.mrb[0].mxu0
      %v529 = vadd.f32 0.0, %v528
      %v530 = vpop.f32.mrb[0].mxu0
      %v531 = vpop.f32.mrb[0].mxu0
      %v532 = vadd.f32 0.0, %v531
      %v533 = vpop.f32.mrb[0].mxu0
      %534 = vmatprep.mubr.bf16.mxu0 0
      %535 = vmatmul.mubr.bf16.gmra.mrb[0].mxu0 %v260
      %v536 = vpop.f32.mrb[0].mxu0
      %v537 = vadd.f32 0.0, %v536
      %v538 = vpop.f32.mrb[0].mxu0
      %v539 = vpop.f32.mrb[0].mxu0
      %v540 = vadd.f32 0.0, %v539
      %v541 = vpop.f32.mrb[0].mxu0
      %542 = vmatprep.mubr.bf16.mxu0 0
      %543 = vmatmul.mubr.bf16.gmra.mrb[0].mxu0 %v263
      %v544 = vpop.f32.mrb[0].mxu0
      %v545 = vadd.f32 0.0, %v544
      %v546 = vpop.f32.mrb[0].mxu0
      %v547 = vpop.f32.mrb[0].mxu0
      %v548 = vadd.f32 0.0, %v547
      %v549 = vpop.f32.mrb[0].mxu0
      %550 = vmatprep.mubr.bf16.mxu0 0
      %551 = vmatmul.mubr.bf16.gmra.mrb[0].mxu0 %v266
      %v552 = vpop.f32.mrb[0].mxu0
      %v553 = vadd.f32 0.0, %v552
      %v554 = vpop.f32.mrb[0].mxu0
      %v555 = vpop.f32.mrb[0].mxu0
      %v556 = vadd.f32 0.0, %v555
      %v557 = vpop.f32.mrb[0].mxu0
      %558 = vdwg.mxu0
      %vm569 = vcmask 1045504
      %v570 = vrot.slane %v521, 2
      %v571 = vrot.slane %v524, 2
      %v572 = vsel %vm569, %v570, %v571
      %v573 = vrot.slane %v529, 2
      %v574 = vsel %vm569, %v571, %v573
      %v575 = vrot.slane %v532, 2
      %v576 = vsel %vm569, %v573, %v575
      %v577 = vrot.slane %v537, 2
      %v578 = vsel %vm569, %v575, %v577
      %v579 = vrot.slane %v540, 2
      %v580 = vsel %vm569, %v577, %v579
      %v581 = vrot.slane %v545, 2
      %v582 = vsel %vm569, %v579, %v581
      %v583 = vrot.slane %v548, 2
      %v584 = vsel %vm569, %v581, %v583
      %v585 = vrot.slane %v553, 2
      %v586 = vsel %vm569, %v583, %v585
      %v587 = vrot.slane %v556, 2
      %v588 = vsel %vm569, %v585, %v587
      %v599 = vsel %vm569, %v587, 0.0
      %v600 = vadd.f32 %v433, %v572
      %v601 = vadd.f32 %v436, %v574
      %v602 = vadd.f32 %v441, %v576
      %v603 = vadd.f32 %v444, %v578
      %v604 = vadd.f32 %v449, %v580
      %v605 = vadd.f32 %v452, %v582
      %v606 = vadd.f32 %v457, %v584
      %v607 = vadd.f32 %v460, %v586
      %v608 = vadd.f32 %v465, %v588
      %v609 = vadd.f32 %v468, %v599
      %v610 = vpack.c.bf16 %v601, %v600
      %v611 = vpack.c.bf16 %v603, %v602
      %v612 = vpack.c.bf16 %v605, %v604
      %v613 = vpack.c.bf16 %v607, %v606
      %v614 = vpack.c.bf16 %v609, %v608
      %v620 = vunpack.c.l.b16 %v610
      %v621 = vunpack.c.h.b16 %v610
      %v622 = vunpack.c.l.b16 %v611
      %v623 = vunpack.c.h.b16 %v611
      %v624 = vunpack.c.l.b16 %v612
      %v625 = vunpack.c.h.b16 %v612
      %v626 = vunpack.c.l.b16 %v613
      %v627 = vunpack.c.h.b16 %v613
      %v628 = vunpack.c.l.b16 %v614
      %v629 = vunpack.c.h.b16 %v614
      %v630 = vpack.c.b16 %v620, %v620
      %v631 = vpack.c.b16 %v621, %v621
      %v632 = vpack.c.b16 %v622, %v622
      %v633 = vpack.c.b16 %v623, %v623
      %v634 = vpack.c.b16 %v624, %v624
      %v635 = vpack.c.b16 %v625, %v625
      %v636 = vpack.c.b16 %v626, %v626
      %v637 = vpack.c.b16 %v627, %v627
      %v638 = vpack.c.b16 %v628, %v628
      %v639 = vpack.c.b16 %v629, %v629
      %vm650 = vcmask 191488
      %651 = vst.msk [vmem:[%s199] sm:$0xf] %vm650, %v630
      %652 = vst.msk [vmem:[%s199 + $0x4] sm:$0xf] %vm650, %v631
      %653 = vst.msk [vmem:[%s199 + $0x8] sm:$0xf] %vm650, %v632
      %654 = vst.msk [vmem:[%s199 + $0xc] sm:$0xf] %vm650, %v633
      %655 = vst.msk [vmem:[%s199 + $0x10] sm:$0xf] %vm650, %v634
      %656 = vst.msk [vmem:[%s199 + $0x14] sm:$0xf] %vm650, %v635
      %657 = vst.msk [vmem:[%s199 + $0x18] sm:$0xf] %vm650, %v636
      %658 = vst.msk [vmem:[%s199 + $0x1c] sm:$0xf] %vm650, %v637
      %659 = vst.msk [vmem:[%s199 + $0x20] sm:$0xf] %vm650, %v638
      %660 = vst.msk [vmem:[%s199 + $0x24] sm:$0xf] %vm650, %v639
      %s661 = smul.u32 10, %s15
      %p662 = scmp.lt.s32.totalorder %s661, 39
      %s663 = scalar_select %p662, %s661, 39
      %s664 = smul.addr %s663, 4
      %s665 = scalar_lea.vmem %s4, %s664
      // Predicated region
      $region37: #{mask_decoder_forward.21} parent=35 // pred_check
        %p666 = pneg %p122
      $region38: #{mask_decoder_forward.21} parent=35 // pred_check_branch
        %668 = sbr.rel (%p666) target = $region40
      $region39: #{mask_decoder_forward.21} parent=35 // pred_region
        %s669 = smul.u32 10, %s15
      $region40: #{mask_decoder_forward.21} parent=35 // pred_fallthru
        _
    $region36: #{mask_decoder_forward.21} parent=5 // pred_fallthru
      _
    %p670 = scmp.le.s32.totalorder 2, %s10
    // Predicated region
    $region41: #{mask_decoder_forward.21} parent=5 // pred_check
      %p671 = pneg %p670
    $region42: #{mask_decoder_forward.21} parent=5 // pred_check_branch
      %673 = sbr.rel (%p671) target = $region44
    $region43: #{mask_decoder_forward.21} parent=5 // pred_region
      %s674 = ssub.s32 %s10, 2
      // Predicated region
      $region45: #{mask_decoder_forward.21} parent=43 // pred_check
        %p675 = pneg %p128
      $region46: #{mask_decoder_forward.21} parent=43 // pred_check_branch
        %677 = sbr.rel (%p675) target = $region48
      $region47: #{mask_decoder_forward.21} parent=43 // pred_region
        %s678 = smul.u32 10, %s16
        %p679 = scmp.lt.s32.totalorder %s678, 39
        %s680 = scalar_select %p679, %s678, 39
        %s681 = smul.addr %s680, 4
        %s682 = scalar_lea.vmem %s4, %s681
      $region48: #{mask_decoder_forward.21} parent=43 // pred_fallthru
        _
    $region44: #{mask_decoder_forward.21} parent=5 // pred_fallthru
      _
  $region6: #{mask_decoder_forward.21} parent=0 // loop_footer
    %s14 = sadd.s32 1, %s10
  $region7: #{mask_decoder_forward.21} parent=0 // loop_footer_branch
    %9 = sbr.rel target = $region3
  $region8: #{mask_decoder_forward.21} parent=0 // loop_exit
    _

// kernel: mask_decoder_forward.24
$region0: #{mask_decoder_forward.24}
  #allocation0 [shape = 'u32[]', space=smem, size = 0x4, offset = 0x4, fixed_abs, tag = 'smem constant byte address 0x4 - core index']
  #allocation1 [shape = 'u32[144,128]{1,0:T(1,128)}', space=vmem, size = 0x12000, scoped, tag = 'internal scratch']
  %s0 = inlined_call_operand.vmem [shape: bf16[640,32], index: 0, kind: input, shape index: {}]
  %s1 = inlined_call_operand.vmem [shape: bf16[32,24], index: 1, kind: input, shape index: {}]
  %s2 = inlined_call_operand.vmem [shape: bf16[32,24], index: 2, kind: input, shape index: {}]
  %s3 = inlined_call_operand.vmem [shape: bf16[32,24], index: 3, kind: input, shape index: {}]
  %s4 = inlined_call_operand.vmem [shape: bf16[640,24], index: 4, kind: output, shape index: {}]
  %s5 = sld [smem:[#allocation0]]
  $region49: #{mask_decoder_forward.24} parent=0
    _
  %s7 = ssub.s32 1, %s5
  %s8 = scalar_select 0, %s7, %s5
  loop: start=0, step=1, limit=6
  $region2: #{mask_decoder_forward.24} parent=0 // loop_pre_header
    _
  $region3: #{mask_decoder_forward.24} parent=0 // loop_header
    %s10 = sphi 0, %s14
    %p11 = scmp.ge.s32.totalorder %s10, 6
    %s20 = sphi 0, %s22
    %s23 = sphi 0, %s20
    %s24 = sphi 0, %s23
    %s40 = sphi 0, %s24
    %s44 = sphi 0, %s44
    %s46 = sphi 0, %s44
    %s47 = sphi 0, %s46
    %s61 = sphi 0, %s47
    %s65 = sphi 0, %s65
    %s67 = sphi 0, %s65
    %s68 = sphi 0, %s67
    %s82 = sphi 0, %s68
    %s86 = sphi 0, %s86
    %s88 = sphi 0, %s86
    %s89 = sphi 0, %s88
    %s103 = sphi 0, %s89
    %s109 = sphi 0, %s111
    %s112 = sphi 0, %s109
    %s113 = sphi 0, %s112
    %s129 = sphi 0, %s113
  $region4: #{mask_decoder_forward.24} parent=0 // loop_header_branch
    %13 = sbr.rel (%p11) target = $region8
  $region5: #{mask_decoder_forward.24} parent=0 // loop_body
    %s15 = ssub.s32 %s10, 1
    %s16 = ssub.s32 %s10, 2
    %s17 = sadd.s32 %s10, 1
    %s18 = ssub.s32 %s10, %s17
    %p19 = scmp.eq.s32.totalorder %s18, 0
    %s21 = sadd.s32 %s20, 1
    %s22 = scalar_select %p19, %s20, %s21
    %p25 = pneg %p19
    %p26 = scmp.eq.s32.totalorder %s10, 3
    %p27 = por %p25, %p26
    %p28 = scmp.ne.s32.totalorder %s20, %s23
    %p29 = scmp.eq.s32.totalorder %s10, 0
    %p30 = por %p28, %p29
    %p31 = scmp.ne.s32.totalorder %s20, %s23
    %p32 = scmp.eq.s32.totalorder %s15, 3
    %p33 = por %p31, %p32
    %p34 = scmp.ne.s32.totalorder %s23, %s24
    %p35 = scmp.eq.s32.totalorder %s15, 0
    %p36 = por %p34, %p35
    %p37 = scmp.ne.s32.totalorder %s23, %s24
    %p38 = scmp.eq.s32.totalorder %s16, 3
    %p39 = por %p37, %p38
    %p41 = scmp.ne.s32.totalorder %s24, %s40
    %p42 = scmp.eq.s32.totalorder %s16, 0
    %p43 = por %p41, %p42
    %s45 = sadd.s32 %s44, 1
    %p48 = scmp.eq.s32.totalorder %s10, 3
    %p49 = scmp.ne.s32.totalorder %s44, %s46
    %p50 = scmp.eq.s32.totalorder %s10, 0
    %p51 = por %p49, %p50
    %p52 = scmp.ne.s32.totalorder %s44, %s46
    %p53 = scmp.eq.s32.totalorder %s15, 3
    %p54 = por %p52, %p53
    %p55 = scmp.ne.s32.totalorder %s46, %s47
    %p56 = scmp.eq.s32.totalorder %s15, 0
    %p57 = por %p55, %p56
    %p58 = scmp.ne.s32.totalorder %s46, %s47
    %p59 = scmp.eq.s32.totalorder %s16, 3
    %p60 = por %p58, %p59
    %p62 = scmp.ne.s32.totalorder %s47, %s61
    %p63 = scmp.eq.s32.totalorder %s16, 0
    %p64 = por %p62, %p63
    %s66 = sadd.s32 %s65, 1
    %p69 = scmp.eq.s32.totalorder %s10, 3
    %p70 = scmp.ne.s32.totalorder %s65, %s67
    %p71 = scmp.eq.s32.totalorder %s10, 0
    %p72 = por %p70, %p71
    %p73 = scmp.ne.s32.totalorder %s65, %s67
    %p74 = scmp.eq.s32.totalorder %s15, 3
    %p75 = por %p73, %p74
    %p76 = scmp.ne.s32.totalorder %s67, %s68
    %p77 = scmp.eq.s32.totalorder %s15, 0
    %p78 = por %p76, %p77
    %p79 = scmp.ne.s32.totalorder %s67, %s68
    %p80 = scmp.eq.s32.totalorder %s16, 3
    %p81 = por %p79, %p80
    %p83 = scmp.ne.s32.totalorder %s68, %s82
    %p84 = scmp.eq.s32.totalorder %s16, 0
    %p85 = por %p83, %p84
    %s87 = sadd.s32 %s86, 1
    %p90 = scmp.eq.s32.totalorder %s10, 3
    %p91 = scmp.ne.s32.totalorder %s86, %s88
    %p92 = scmp.eq.s32.totalorder %s10, 0
    %p93 = por %p91, %p92
    %p94 = scmp.ne.s32.totalorder %s86, %s88
    %p95 = scmp.eq.s32.totalorder %s15, 3
    %p96 = por %p94, %p95
    %p97 = scmp.ne.s32.totalorder %s88, %s89
    %p98 = scmp.eq.s32.totalorder %s15, 0
    %p99 = por %p97, %p98
    %p100 = scmp.ne.s32.totalorder %s88, %s89
    %p101 = scmp.eq.s32.totalorder %s16, 3
    %p102 = por %p100, %p101
    %p104 = scmp.ne.s32.totalorder %s89, %s103
    %p105 = scmp.eq.s32.totalorder %s16, 0
    %p106 = por %p104, %p105
    %s107 = ssub.s32 %s10, %s17
    %p108 = scmp.eq.s32.totalorder %s107, 0
    %s110 = sadd.s32 %s109, 1
    %s111 = scalar_select %p108, %s109, %s110
    %p114 = pneg %p108
    %p115 = scmp.eq.s32.totalorder %s10, 3
    %p116 = por %p114, %p115
    %p117 = scmp.ne.s32.totalorder %s109, %s112
    %p118 = scmp.eq.s32.totalorder %s10, 0
    %p119 = por %p117, %p118
    %p120 = scmp.ne.s32.totalorder %s109, %s112
    %p121 = scmp.eq.s32.totalorder %s15, 3
    %p122 = por %p120, %p121
    %p123 = scmp.ne.s32.totalorder %s112, %s113
    %p124 = scmp.eq.s32.totalorder %s15, 0
    %p125 = por %p123, %p124
    %p126 = scmp.ne.s32.totalorder %s112, %s113
    %p127 = scmp.eq.s32.totalorder %s16, 3
    %p128 = por %p126, %p127
    %p130 = scmp.ne.s32.totalorder %s113, %s129
    %p131 = scmp.eq.s32.totalorder %s16, 0
    %p132 = por %p130, %p131
    %p133 = scmp.le.s32.totalorder 1, %s10
    %p134 = scmp.lt.s32.totalorder %s10, 5
    %p135 = pnand %p133, %p134
    %p136 = pneg %p135
    // Predicated region
    $region9: #{mask_decoder_forward.24} parent=5 // pred_check
      _
    $region10: #{mask_decoder_forward.24} parent=5 // pred_check_branch
      %138 = sbr.rel (%p135) target = $region12
    $region11: #{mask_decoder_forward.24} parent=5 // pred_region
      %s139 = ssub.s32 %s10, 1
      // Predicated region
      $region13: #{mask_decoder_forward.24} parent=11 // pred_check
        %p140 = pneg %p57
      $region14: #{mask_decoder_forward.24} parent=11 // pred_check_branch
        %142 = sbr.rel (%p140) target = $region16
      $region15: #{mask_decoder_forward.24} parent=11 // pred_region
        _
      $region16: #{mask_decoder_forward.24} parent=11 // pred_fallthru
        _
      // Predicated region
      $region17: #{mask_decoder_forward.24} parent=11 // pred_check
        %p143 = pneg %p78
      $region18: #{mask_decoder_forward.24} parent=11 // pred_check_branch
        %145 = sbr.rel (%p143) target = $region20
      $region19: #{mask_decoder_forward.24} parent=11 // pred_region
        _
      $region20: #{mask_decoder_forward.24} parent=11 // pred_fallthru
        _
      // Predicated region
      $region21: #{mask_decoder_forward.24} parent=11 // pred_check
        %p146 = pneg %p99
      $region22: #{mask_decoder_forward.24} parent=11 // pred_check_branch
        %148 = sbr.rel (%p146) target = $region24
      $region23: #{mask_decoder_forward.24} parent=11 // pred_region
        _
      $region24: #{mask_decoder_forward.24} parent=11 // pred_fallthru
        _
    $region12: #{mask_decoder_forward.24} parent=5 // pred_fallthru
      _
    %p149 = scmp.lt.s32.totalorder %s10, 4
    // Predicated region
    $region25: #{mask_decoder_forward.24} parent=5 // pred_check
      %p150 = pneg %p149
    $region26: #{mask_decoder_forward.24} parent=5 // pred_check_branch
      %152 = sbr.rel (%p150) target = $region28
    $region27: #{mask_decoder_forward.24} parent=5 // pred_region
      // Predicated region
      $region29: #{mask_decoder_forward.24} parent=27 // pred_check
        %p153 = pneg %p30
      $region30: #{mask_decoder_forward.24} parent=27 // pred_check_branch
        %155 = sbr.rel (%p153) target = $region32
      $region31: #{mask_decoder_forward.24} parent=27 // pred_region
        %s156 = smul.u32 20, %s10
        %p157 = scmp.lt.s32.totalorder %s156, 79
        %s158 = scalar_select %p157, %s156, 79
        %s159 = smul.addr %s158, 4
        %s160 = scalar_lea.vmem %s0, %s159
        %s161 = smul.u32 20, %s10
      $region32: #{mask_decoder_forward.24} parent=27 // pred_fallthru
        _
    $region28: #{mask_decoder_forward.24} parent=5 // pred_fallthru
      _
    %p162 = scmp.le.s32.totalorder 1, %s10
    %p163 = scmp.lt.s32.totalorder %s10, 5
    %p164 = pnand %p162, %p163
    %p165 = pneg %p164
    // Predicated region
    $region33: #{mask_decoder_forward.24} parent=5 // pred_check
      _
    $region34: #{mask_decoder_forward.24} parent=5 // pred_check_branch
      %167 = sbr.rel (%p164) target = $region36
    $region35: #{mask_decoder_forward.24} parent=5 // pred_region
      %s168 = ssub.s32 %s10, 1
      %s169 = smul.u32 20, %s15
      %p170 = scmp.lt.s32.totalorder %s169, 79
      %s171 = scalar_select %p170, %s169, 79
      %s172 = smul.addr %s171, 4
      %s173 = scalar_lea.vmem %s0, %s172
      %p174 = pneg %p36
      %p175 = pneg %p33
      %p176 = pneg %p57
      %p177 = pneg %p54
      %p178 = pneg %p78
      %p179 = pneg %p75
      %p180 = pneg %p99
      %p181 = pneg %p96
      %p182 = pneg %p125
      %p183 = pneg %p122
      %s184 = smul.u32 20, %s15
      %p185 = scmp.lt.s32.totalorder %s184, 79
      %s186 = scalar_select %p185, %s184, 79
      %s187 = smul.addr %s186, 4
      %s188 = scalar_lea.vmem %s4, %s187
      %s189 = smul.u32 20, %s15
      %p190 = scmp.lt.s32.totalorder %s189, 79
      %s191 = scalar_select %p190, %s189, 79
      %s192 = smul.addr %s191, 4
      %s193 = scalar_lea.vmem %s0, %s192
      %s194 = smul.u32 20, %s15
      %s195 = smul.u32 20, %s15
      %p196 = scmp.lt.s32.totalorder %s195, 79
      %s197 = scalar_select %p196, %s195, 79
      %s198 = smul.addr %s197, 4
      %s199 = scalar_lea.vmem %s4, %s198
      %s200 = smul.u32 20, %s15
      %v202 = vld [vmem:[%s193] sm:$0xf]
      %v203 = vld [vmem:[%s193 + $0x4] sm:$0xf]
      %v204 = vld [vmem:[%s193 + $0x8] sm:$0xf]
      %v205 = vld [vmem:[%s193 + $0xc] sm:$0xf]
      %v206 = vld [vmem:[%s193 + $0x10] sm:$0xf]
      %v207 = vld [vmem:[%s193 + $0x14] sm:$0xf]
      %v208 = vld [vmem:[%s193 + $0x18] sm:$0xf]
      %v209 = vld [vmem:[%s193 + $0x1c] sm:$0xf]
      %v210 = vld [vmem:[%s193 + $0x20] sm:$0xf]
      %v211 = vld [vmem:[%s193 + $0x24] sm:$0xf]
      %v212 = vld [vmem:[%s193 + $0x28] sm:$0xf]
      %v213 = vld [vmem:[%s193 + $0x2c] sm:$0xf]
      %v214 = vld [vmem:[%s193 + $0x30] sm:$0xf]
      %v215 = vld [vmem:[%s193 + $0x34] sm:$0xf]
      %v216 = vld [vmem:[%s193 + $0x38] sm:$0xf]
      %v217 = vld [vmem:[%s193 + $0x3c] sm:$0xf]
      %v218 = vld [vmem:[%s193 + $0x40] sm:$0xf]
      %v219 = vld [vmem:[%s193 + $0x44] sm:$0xf]
      %v220 = vld [vmem:[%s193 + $0x48] sm:$0xf]
      %v221 = vld [vmem:[%s193 + $0x4c] sm:$0xf]
      %v222 = vld [vmem:[%s1] sm:$0xf]
      %v223 = vld [vmem:[%s1 + $0x4] sm:$0xf]
      %v224 = vld [vmem:[%s1 + $0x8] sm:$0xf]
      %v225 = vld [vmem:[%s1 + $0xc] sm:$0xf]
      %v226 = vld [vmem:[%s2] sm:$0xf]
      %v227 = vld [vmem:[%s2 + $0x4] sm:$0xf]
      %v228 = vld [vmem:[%s2 + $0x8] sm:$0xf]
      %v229 = vld [vmem:[%s2 + $0xc] sm:$0xf]
      %v250 = vunpack.c.l.b16 %v202
      %v251 = vunpack.c.l.b16 %v203
      %v252 = vunpack.c.l.b16 %v204
      %v253 = vunpack.c.l.b16 %v205
      %v254 = vunpack.c.l.b16 %v206
      %v255 = vunpack.c.l.b16 %v207
      %v256 = vunpack.c.l.b16 %v208
      %v257 = vunpack.c.l.b16 %v209
      %v258 = vunpack.c.l.b16 %v210
      %v259 = vunpack.c.l.b16 %v211
      %v260 = vunpack.c.l.b16 %v212
      %v261 = vunpack.c.l.b16 %v213
      %v262 = vunpack.c.l.b16 %v214
      %v263 = vunpack.c.l.b16 %v215
      %v264 = vunpack.c.l.b16 %v216
      %v265 = vunpack.c.l.b16 %v217
      %v266 = vunpack.c.l.b16 %v218
      %v267 = vunpack.c.l.b16 %v219
      %v268 = vunpack.c.l.b16 %v220
      %v269 = vunpack.c.l.b16 %v221
      %v270 = vpack.c.b16 %v251, %v250
      %v271 = vpack.c.b16 %v253, %v252
      %v272 = vpack.c.b16 %v255, %v254
      %v273 = vpack.c.b16 %v257, %v256
      %v274 = vpack.c.b16 %v259, %v258
      %v275 = vpack.c.b16 %v261, %v260
      %v276 = vpack.c.b16 %v263, %v262
      %v277 = vpack.c.b16 %v265, %v264
      %v278 = vpack.c.b16 %v267, %v266
      %v279 = vpack.c.b16 %v269, %v268
      %v284 = vunpack.c.l.b16 %v226
      %v285 = vunpack.c.l.b16 %v227
      %v286 = vunpack.c.l.b16 %v228
      %v287 = vunpack.c.l.b16 %v229
      %v288 = vpack.c.b16 %v285, %v284
      %v289 = vpack.c.b16 %v287, %v286
      %vm292 = vcmask 261120
      %v294 = vsel %vm292, %v270, 0
      %v297 = vsel %vm292, %v271, 0
      %v300 = vsel %vm292, %v272, 0
      %v303 = vsel %vm292, %v273, 0
      %v306 = vsel %vm292, %v274, 0
      %v309 = vsel %vm292, %v275, 0
      %v312 = vsel %vm292, %v276, 0
      %v315 = vsel %vm292, %v277, 0
      %v318 = vsel %vm292, %v278, 0
      %v321 = vsel %vm292, %v279, 0
      %323 = vmatprep.subr.bf16.mxu0 0
      %324 = vmatpush1.bf16.msra.mxu0 %v288
      %325 = vmatprep.subr.bf16.mxu0 0
      %326 = vmatpush1.bf16.msra.mxu0 %v289
      %327 = vmatprep.subr.bf16.mxu0 0
      %328 = vmatpush1.bf16.msra.mxu0 0
      %329 = vmatprep.subr.bf16.mxu0 0
      %330 = vmatpush1.bf16.msra.mxu0 0
      %331 = vmatprep.subr.bf16.mxu0 0
      %332 = vmatpush1.bf16.msra.mxu0 0
      %333 = vmatprep.subr.bf16.mxu0 0
      %334 = vmatpush1.bf16.msra.mxu0 0
      %335 = vmatprep.subr.bf16.mxu0 0
      %336 = vmatpush1.bf16.msra.mxu0 0
      %337 = vmatprep.subr.bf16.mxu0 0
      %338 = vmatpush1.bf16.msra.mxu0 0
      %339 = vmatprep.subr.bf16.mxu0 0
      %340 = vmatpush1.bf16.msra.mxu0 0
      %341 = vmatprep.subr.bf16.mxu0 0
      %342 = vmatpush1.bf16.msra.mxu0 0
      %343 = vmatprep.subr.bf16.mxu0 0
      %344 = vmatpush1.bf16.msra.mxu0 0
      %345 = vmatprep.subr.bf16.mxu0 0
      %346 = vmatpush1.bf16.msra.mxu0 0
      %347 = vmatprep.subr.bf16.mxu0 0
      %348 = vmatpush1.bf16.msra.mxu0 0
      %349 = vmatprep.subr.bf16.mxu0 0
      %350 = vmatpush1.bf16.msra.mxu0 0
      %351 = vmatprep.subr.bf16.mxu0 0
      %352 = vmatpush1.bf16.msra.mxu0 0
      %353 = vmatprep.subr.bf16.mxu0 0
      %354 = vmatpush1.bf16.msra.mxu0 0
      %355 = vmatprep.mubr.bf16.mxu0 0
      %356 = vmatmul.mubr.bf16.gmra.mrb[0].mxu0 %v294
      %v357 = vpop.f32.mrb[0].mxu0
      %v358 = vadd.f32 0.0, %v357
      %v359 = vpop.f32.mrb[0].mxu0
      %v360 = vpop.f32.mrb[0].mxu0
      %v361 = vadd.f32 0.0, %v360
      %v362 = vpop.f32.mrb[0].mxu0
      %363 = vmatprep.mubr.bf16.mxu0 0
      %364 = vmatmul.mubr.bf16.gmra.mrb[0].mxu0 %v297
      %v365 = vpop.f32.mrb[0].mxu0
      %v366 = vadd.f32 0.0, %v365
      %v367 = vpop.f32.mrb[0].mxu0
      %v368 = vpop.f32.mrb[0].mxu0
      %v369 = vadd.f32 0.0, %v368
      %v370 = vpop.f32.mrb[0].mxu0
      %371 = vmatprep.mubr.bf16.mxu0 0
      %372 = vmatmul.mubr.bf16.gmra.mrb[0].mxu0 %v300
      %v373 = vpop.f32.mrb[0].mxu0
      %v374 = vadd.f32 0.0, %v373
      %v375 = vpop.f32.mrb[0].mxu0
      %v376 = vpop.f32.mrb[0].mxu0
      %v377 = vadd.f32 0.0, %v376
      %v378 = vpop.f32.mrb[0].mxu0
      %379 = vmatprep.mubr.bf16.mxu0 0
      %380 = vmatmul.mubr.bf16.gmra.mrb[0].mxu0 %v303
      %v381 = vpop.f32.mrb[0].mxu0
      %v382 = vadd.f32 0.0, %v381
      %v383 = vpop.f32.mrb[0].mxu0
      %v384 = vpop.f32.mrb[0].mxu0
      %v385 = vadd.f32 0.0, %v384
      %v386 = vpop.f32.mrb[0].mxu0
      %387 = vmatprep.mubr.bf16.mxu0 0
      %388 = vmatmul.mubr.bf16.gmra.mrb[0].mxu0 %v306
      %v389 = vpop.f32.mrb[0].mxu0
      %v390 = vadd.f32 0.0, %v389
      %v391 = vpop.f32.mrb[0].mxu0
      %v392 = vpop.f32.mrb[0].mxu0
      %v393 = vadd.f32 0.0, %v392
      %v394 = vpop.f32.mrb[0].mxu0
      %395 = vmatprep.mubr.bf16.mxu0 0
      %396 = vmatmul.mubr.bf16.gmra.mrb[0].mxu0 %v309
      %v397 = vpop.f32.mrb[0].mxu0
      %v398 = vadd.f32 0.0, %v397
      %v399 = vpop.f32.mrb[0].mxu0
      %v400 = vpop.f32.mrb[0].mxu0
      %v401 = vadd.f32 0.0, %v400
      %v402 = vpop.f32.mrb[0].mxu0
      %403 = vmatprep.mubr.bf16.mxu0 0
      %404 = vmatmul.mubr.bf16.gmra.mrb[0].mxu0 %v312
      %v405 = vpop.f32.mrb[0].mxu0
      %v406 = vadd.f32 0.0, %v405
      %v407 = vpop.f32.mrb[0].mxu0
      %v408 = vpop.f32.mrb[0].mxu0
      %v409 = vadd.f32 0.0, %v408
      %v410 = vpop.f32.mrb[0].mxu0
      %411 = vmatprep.mubr.bf16.mxu0 0
      %412 = vmatmul.mubr.bf16.gmra.mrb[0].mxu0 %v315
      %v413 = vpop.f32.mrb[0].mxu0
      %v414 = vadd.f32 0.0, %v413
      %v415 = vpop.f32.mrb[0].mxu0
      %v416 = vpop.f32.mrb[0].mxu0
      %v417 = vadd.f32 0.0, %v416
      %v418 = vpop.f32.mrb[0].mxu0
      %419 = vmatprep.mubr.bf16.mxu0 0
      %420 = vmatmul.mubr.bf16.gmra.mrb[0].mxu0 %v318
      %v421 = vpop.f32.mrb[0].mxu0
      %v422 = vadd.f32 0.0, %v421
      %v423 = vpop.f32.mrb[0].mxu0
      %v424 = vpop.f32.mrb[0].mxu0
      %v425 = vadd.f32 0.0, %v424
      %v426 = vpop.f32.mrb[0].mxu0
      %427 = vmatprep.mubr.bf16.mxu0 0
      %428 = vmatmul.mubr.bf16.gmra.mrb[0].mxu0 %v321
      %v429 = vpop.f32.mrb[0].mxu0
      %v430 = vadd.f32 0.0, %v429
      %v431 = vpop.f32.mrb[0].mxu0
      %v432 = vpop.f32.mrb[0].mxu0
      %v433 = vadd.f32 0.0, %v432
      %v434 = vpop.f32.mrb[0].mxu0
      %435 = vdwg.mxu0
      %vm456 = vcmask 1046528
      %v457 = vrot.slane %v358, 1
      %v458 = vrot.slane %v361, 1
      %v459 = vsel %vm456, %v457, %v458
      %v460 = vrot.slane %v366, 1
      %v461 = vsel %vm456, %v458, %v460
      %v462 = vrot.slane %v369, 1
      %v463 = vsel %vm456, %v460, %v462
      %v464 = vrot.slane %v374, 1
      %v465 = vsel %vm456, %v462, %v464
      %v466 = vrot.slane %v377, 1
      %v467 = vsel %vm456, %v464, %v466
      %v468 = vrot.slane %v382, 1
      %v469 = vsel %vm456, %v466, %v468
      %v470 = vrot.slane %v385, 1
      %v471 = vsel %vm456, %v468, %v470
      %v472 = vrot.slane %v390, 1
      %v473 = vsel %vm456, %v470, %v472
      %v474 = vrot.slane %v393, 1
      %v475 = vsel %vm456, %v472, %v474
      %v476 = vrot.slane %v398, 1
      %v477 = vsel %vm456, %v474, %v476
      %v478 = vrot.slane %v401, 1
      %v479 = vsel %vm456, %v476, %v478
      %v480 = vrot.slane %v406, 1
      %v481 = vsel %vm456, %v478, %v480
      %v482 = vrot.slane %v409, 1
      %v483 = vsel %vm456, %v480, %v482
      %v484 = vrot.slane %v414, 1
      %v485 = vsel %vm456, %v482, %v484
      %v486 = vrot.slane %v417, 1
      %v487 = vsel %vm456, %v484, %v486
      %v488 = vrot.slane %v422, 1
      %v489 = vsel %vm456, %v486, %v488
      %v490 = vrot.slane %v425, 1
      %v491 = vsel %vm456, %v488, %v490
      %v492 = vrot.slane %v430, 1
      %v493 = vsel %vm456, %v490, %v492
      %v494 = vrot.slane %v433, 1
      %v495 = vsel %vm456, %v492, %v494
      %v516 = vsel %vm456, %v494, 0.0
      %v521 = vunpack.c.l.b16 %v222
      %v522 = vunpack.c.l.b16 %v223
      %v523 = vunpack.c.l.b16 %v224
      %v524 = vunpack.c.l.b16 %v225
      %v525 = vpack.c.b16 %v522, %v521
      %v526 = vpack.c.b16 %v524, %v523
      %529 = vmatprep.subr.bf16.mxu0 0
      %530 = vmatpush1.bf16.msra.mxu0 %v525
      %531 = vmatprep.subr.bf16.mxu0 0
      %532 = vmatpush1.bf16.msra.mxu0 %v526
      %533 = vmatprep.subr.bf16.mxu0 0
      %534 = vmatpush1.bf16.msra.mxu0 0
      %535 = vmatprep.subr.bf16.mxu0 0
      %536 = vmatpush1.bf16.msra.mxu0 0
      %537 = vmatprep.subr.bf16.mxu0 0
      %538 = vmatpush1.bf16.msra.mxu0 0
      %539 = vmatprep.subr.bf16.mxu0 0
      %540 = vmatpush1.bf16.msra.mxu0 0
      %541 = vmatprep.subr.bf16.mxu0 0
      %542 = vmatpush1.bf16.msra.mxu0 0
      %543 = vmatprep.subr.bf16.mxu0 0
      %544 = vmatpush1.bf16.msra.mxu0 0
      %545 = vmatprep.subr.bf16.mxu0 0
      %546 = vmatpush1.bf16.msra.mxu0 0
      %547 = vmatprep.subr.bf16.mxu0 0
      %548 = vmatpush1.bf16.msra.mxu0 0
      %549 = vmatprep.subr.bf16.mxu0 0
      %550 = vmatpush1.bf16.msra.mxu0 0
      %551 = vmatprep.subr.bf16.mxu0 0
      %552 = vmatpush1.bf16.msra.mxu0 0
      %553 = vmatprep.subr.bf16.mxu0 0
      %554 = vmatpush1.bf16.msra.mxu0 0
      %555 = vmatprep.subr.bf16.mxu0 0
      %556 = vmatpush1.bf16.msra.mxu0 0
      %557 = vmatprep.subr.bf16.mxu0 0
      %558 = vmatpush1.bf16.msra.mxu0 0
      %559 = vmatprep.subr.bf16.mxu0 0
      %560 = vmatpush1.bf16.msra.mxu0 0
      %561 = vmatprep.mubr.bf16.mxu0 0
      %562 = vmatmul.mubr.bf16.gmra.mrb[0].mxu0 %v294
      %v563 = vpop.f32.mrb[0].mxu0
      %v564 = vadd.f32 %v459, %v563
      %v565 = vpop.f32.mrb[0].mxu0
      %v566 = vpop.f32.mrb[0].mxu0
      %v567 = vadd.f32 %v461, %v566
      %v568 = vpop.f32.mrb[0].mxu0
      %569 = vmatprep.mubr.bf16.mxu0 0
      %570 = vmatmul.mubr.bf16.gmra.mrb[0].mxu0 %v297
      %v571 = vpop.f32.mrb[0].mxu0
      %v572 = vadd.f32 %v463, %v571
      %v573 = vpop.f32.mrb[0].mxu0
      %v574 = vpop.f32.mrb[0].mxu0
      %v575 = vadd.f32 %v465, %v574
      %v576 = vpop.f32.mrb[0].mxu0
      %577 = vmatprep.mubr.bf16.mxu0 0
      %578 = vmatmul.mubr.bf16.gmra.mrb[0].mxu0 %v300
      %v579 = vpop.f32.mrb[0].mxu0
      %v580 = vadd.f32 %v467, %v579
      %v581 = vpop.f32.mrb[0].mxu0
      %v582 = vpop.f32.mrb[0].mxu0
      %v583 = vadd.f32 %v469, %v582
      %v584 = vpop.f32.mrb[0].mxu0
      %585 = vmatprep.mubr.bf16.mxu0 0
      %586 = vmatmul.mubr.bf16.gmra.mrb[0].mxu0 %v303
      %v587 = vpop.f32.mrb[0].mxu0
      %v588 = vadd.f32 %v471, %v587
      %v589 = vpop.f32.mrb[0].mxu0
      %v590 = vpop.f32.mrb[0].mxu0
      %v591 = vadd.f32 %v473, %v590
      %v592 = vpop.f32.mrb[0].mxu0
      %593 = vmatprep.mubr.bf16.mxu0 0
      %594 = vmatmul.mubr.bf16.gmra.mrb[0].mxu0 %v306
      %v595 = vpop.f32.mrb[0].mxu0
      %v596 = vadd.f32 %v475, %v595
      %v597 = vpop.f32.mrb[0].mxu0
      %v598 = vpop.f32.mrb[0].mxu0
      %v599 = vadd.f32 %v477, %v598
      %v600 = vpop.f32.mrb[0].mxu0
      %601 = vmatprep.mubr.bf16.mxu0 0
      %602 = vmatmul.mubr.bf16.gmra.mrb[0].mxu0 %v309
      %v603 = vpop.f32.mrb[0].mxu0
      %v604 = vadd.f32 %v479, %v603
      %v605 = vpop.f32.mrb[0].mxu0
      %v606 = vpop.f32.mrb[0].mxu0
      %v607 = vadd.f32 %v481, %v606
      %v608 = vpop.f32.mrb[0].mxu0
      %609 = vmatprep.mubr.bf16.mxu0 0
      %610 = vmatmul.mubr.bf16.gmra.mrb[0].mxu0 %v312
      %v611 = vpop.f32.mrb[0].mxu0
      %v612 = vadd.f32 %v483, %v611
      %v613 = vpop.f32.mrb[0].mxu0
      %v614 = vpop.f32.mrb[0].mxu0
      %v615 = vadd.f32 %v485, %v614
      %v616 = vpop.f32.mrb[0].mxu0
      %617 = vmatprep.mubr.bf16.mxu0 0
      %618 = vmatmul.mubr.bf16.gmra.mrb[0].mxu0 %v315
      %v619 = vpop.f32.mrb[0].mxu0
      %v620 = vadd.f32 %v487, %v619
      %v621 = vpop.f32.mrb[0].mxu0
      %v622 = vpop.f32.mrb[0].mxu0
      %v623 = vadd.f32 %v489, %v622
      %v624 = vpop.f32.mrb[0].mxu0
      %625 = vmatprep.mubr.bf16.mxu0 0
      %626 = vmatmul.mubr.bf16.gmra.mrb[0].mxu0 %v318
      %v627 = vpop.f32.mrb[0].mxu0
      %v628 = vadd.f32 %v491, %v627
      %v629 = vpop.f32.mrb[0].mxu0
      %v630 = vpop.f32.mrb[0].mxu0
      %v631 = vadd.f32 %v493, %v630
      %v632 = vpop.f32.mrb[0].mxu0
      %633 = vmatprep.mubr.bf16.mxu0 0
      %634 = vmatmul.mubr.bf16.gmra.mrb[0].mxu0 %v321
      %v635 = vpop.f32.mrb[0].mxu0
      %v636 = vadd.f32 %v495, %v635
      %v637 = vpop.f32.mrb[0].mxu0
      %v638 = vpop.f32.mrb[0].mxu0
      %v639 = vadd.f32 %v516, %v638
      %v640 = vpop.f32.mrb[0].mxu0
      %641 = vdwg.mxu0
      %v642 = vld [vmem:[%s3] sm:$0xf]
      %v643 = vld [vmem:[%s3 + $0x4] sm:$0xf]
      %v644 = vld [vmem:[%s3 + $0x8] sm:$0xf]
      %v645 = vld [vmem:[%s3 + $0xc] sm:$0xf]
      %v650 = vunpack.c.l.b16 %v642
      %v651 = vunpack.c.l.b16 %v643
      %v652 = vunpack.c.l.b16 %v644
      %v653 = vunpack.c.l.b16 %v645
      %v654 = vpack.c.b16 %v651, %v650
      %v655 = vpack.c.b16 %v653, %v652
      %658 = vmatprep.subr.bf16.mxu0 0
      %659 = vmatpush1.bf16.msra.mxu0 %v654
      %660 = vmatprep.subr.bf16.mxu0 0
      %661 = vmatpush1.bf16.msra.mxu0 %v655
      %662 = vmatprep.subr.bf16.mxu0 0
      %663 = vmatpush1.bf16.msra.mxu0 0
      %664 = vmatprep.subr.bf16.mxu0 0
      %665 = vmatpush1.bf16.msra.mxu0 0
      %666 = vmatprep.subr.bf16.mxu0 0
      %667 = vmatpush1.bf16.msra.mxu0 0
      %668 = vmatprep.subr.bf16.mxu0 0
      %669 = vmatpush1.bf16.msra.mxu0 0
      %670 = vmatprep.subr.bf16.mxu0 0
      %671 = vmatpush1.bf16.msra.mxu0 0
      %672 = vmatprep.subr.bf16.mxu0 0
      %673 = vmatpush1.bf16.msra.mxu0 0
      %674 = vmatprep.subr.bf16.mxu0 0
      %675 = vmatpush1.bf16.msra.mxu0 0
      %676 = vmatprep.subr.bf16.mxu0 0
      %677 = vmatpush1.bf16.msra.mxu0 0
      %678 = vmatprep.subr.bf16.mxu0 0
      %679 = vmatpush1.bf16.msra.mxu0 0
      %680 = vmatprep.subr.bf16.mxu0 0
      %681 = vmatpush1.bf16.msra.mxu0 0
      %682 = vmatprep.subr.bf16.mxu0 0
      %683 = vmatpush1.bf16.msra.mxu0 0
      %684 = vmatprep.subr.bf16.mxu0 0
      %685 = vmatpush1.bf16.msra.mxu0 0
      %686 = vmatprep.subr.bf16.mxu0 0
      %687 = vmatpush1.bf16.msra.mxu0 0
      %688 = vmatprep.subr.bf16.mxu0 0
      %689 = vmatpush1.bf16.msra.mxu0 0
      %690 = vmatprep.mubr.bf16.mxu0 0
      %691 = vmatmul.mubr.bf16.gmra.mrb[0].mxu0 %v294
      %v692 = vpop.f32.mrb[0].mxu0
      %v693 = vadd.f32 0.0, %v692
      %v694 = vpop.f32.mrb[0].mxu0
      %v695 = vpop.f32.mrb[0].mxu0
      %v696 = vadd.f32 0.0, %v695
      %v697 = vpop.f32.mrb[0].mxu0
      %698 = vmatprep.mubr.bf16.mxu0 0
      %699 = vmatmul.mubr.bf16.gmra.mrb[0].mxu0 %v297
      %v700 = vpop.f32.mrb[0].mxu0
      %v701 = vadd.f32 0.0, %v700
      %v702 = vpop.f32.mrb[0].mxu0
      %v703 = vpop.f32.mrb[0].mxu0
      %v704 = vadd.f32 0.0, %v703
      %v705 = vpop.f32.mrb[0].mxu0
      %706 = vmatprep.mubr.bf16.mxu0 0
      %707 = vmatmul.mubr.bf16.gmra.mrb[0].mxu0 %v300
      %v708 = vpop.f32.mrb[0].mxu0
      %v709 = vadd.f32 0.0, %v708
      %v710 = vpop.f32.mrb[0].mxu0
      %v711 = vpop.f32.mrb[0].mxu0
      %v712 = vadd.f32 0.0, %v711
      %v713 = vpop.f32.mrb[0].mxu0
      %714 = vmatprep.mubr.bf16.mxu0 0
      %715 = vmatmul.mubr.bf16.gmra.mrb[0].mxu0 %v303
      %v716 = vpop.f32.mrb[0].mxu0
      %v717 = vadd.f32 0.0, %v716
      %v718 = vpop.f32.mrb[0].mxu0
      %v719 = vpop.f32.mrb[0].mxu0
      %v720 = vadd.f32 0.0, %v719
      %v721 = vpop.f32.mrb[0].mxu0
      %722 = vmatprep.mubr.bf16.mxu0 0
      %723 = vmatmul.mubr.bf16.gmra.mrb[0].mxu0 %v306
      %v724 = vpop.f32.mrb[0].mxu0
      %v725 = vadd.f32 0.0, %v724
      %v726 = vpop.f32.mrb[0].mxu0
      %v727 = vpop.f32.mrb[0].mxu0
      %v728 = vadd.f32 0.0, %v727
      %v729 = vpop.f32.mrb[0].mxu0
      %730 = vmatprep.mubr.bf16.mxu0 0
      %731 = vmatmul.mubr.bf16.gmra.mrb[0].mxu0 %v309
      %v732 = vpop.f32.mrb[0].mxu0
      %v733 = vadd.f32 0.0, %v732
      %v734 = vpop.f32.mrb[0].mxu0
      %v735 = vpop.f32.mrb[0].mxu0
      %v736 = vadd.f32 0.0, %v735
      %v737 = vpop.f32.mrb[0].mxu0
      %738 = vmatprep.mubr.bf16.mxu0 0
      %739 = vmatmul.mubr.bf16.gmra.mrb[0].mxu0 %v312
      %v740 = vpop.f32.mrb[0].mxu0
      %v741 = vadd.f32 0.0, %v740
      %v742 = vpop.f32.mrb[0].mxu0
      %v743 = vpop.f32.mrb[0].mxu0
      %v744 = vadd.f32 0.0, %v743
      %v745 = vpop.f32.mrb[0].mxu0
      %746 = vmatprep.mubr.bf16.mxu0 0
      %747 = vmatmul.mubr.bf16.gmra.mrb[0].mxu0 %v315
      %v748 = vpop.f32.mrb[0].mxu0
      %v749 = vadd.f32 0.0, %v748
      %v750 = vpop.f32.mrb[0].mxu0
      %v751 = vpop.f32.mrb[0].mxu0
      %v752 = vadd.f32 0.0, %v751
      %v753 = vpop.f32.mrb[0].mxu0
      %754 = vmatprep.mubr.bf16.mxu0 0
      %755 = vmatmul.mubr.bf16.gmra.mrb[0].mxu0 %v318
      %v756 = vpop.f32.mrb[0].mxu0
      %v757 = vadd.f32 0.0, %v756
      %v758 = vpop.f32.mrb[0].mxu0
      %v759 = vpop.f32.mrb[0].mxu0
      %v760 = vadd.f32 0.0, %v759
      %v761 = vpop.f32.mrb[0].mxu0
      %762 = vmatprep.mubr.bf16.mxu0 0
      %763 = vmatmul.mubr.bf16.gmra.mrb[0].mxu0 %v321
      %v764 = vpop.f32.mrb[0].mxu0
      %v765 = vadd.f32 0.0, %v764
      %v766 = vpop.f32.mrb[0].mxu0
      %v767 = vpop.f32.mrb[0].mxu0
      %v768 = vadd.f32 0.0, %v767
      %v769 = vpop.f32.mrb[0].mxu0
      %770 = vdwg.mxu0
      %vm791 = vcmask 1045504
      %v792 = vrot.slane %v693, 2
      %v793 = vrot.slane %v696, 2
      %v794 = vsel %vm791, %v792, %v793
      %v795 = vrot.slane %v701, 2
      %v796 = vsel %vm791, %v793, %v795
      %v797 = vrot.slane %v704, 2
      %v798 = vsel %vm791, %v795, %v797
      %v799 = vrot.slane %v709, 2
      %v800 = vsel %vm791, %v797, %v799
      %v801 = vrot.slane %v712, 2
      %v802 = vsel %vm791, %v799, %v801
      %v803 = vrot.slane %v717, 2
      %v804 = vsel %vm791, %v801, %v803
      %v805 = vrot.slane %v720, 2
      %v806 = vsel %vm791, %v803, %v805
      %v807 = vrot.slane %v725, 2
      %v808 = vsel %vm791, %v805, %v807
      %v809 = vrot.slane %v728, 2
      %v810 = vsel %vm791, %v807, %v809
      %v811 = vrot.slane %v733, 2
      %v812 = vsel %vm791, %v809, %v811
      %v813 = vrot.slane %v736, 2
      %v814 = vsel %vm791, %v811, %v813
      %v815 = vrot.slane %v741, 2
      %v816 = vsel %vm791, %v813, %v815
      %v817 = vrot.slane %v744, 2
      %v818 = vsel %vm791, %v815, %v817
      %v819 = vrot.slane %v749, 2
      %v820 = vsel %vm791, %v817, %v819
      %v821 = vrot.slane %v752, 2
      %v822 = vsel %vm791, %v819, %v821
      %v823 = vrot.slane %v757, 2
      %v824 = vsel %vm791, %v821, %v823
      %v825 = vrot.slane %v760, 2
      %v826 = vsel %vm791, %v823, %v825
      %v827 = vrot.slane %v765, 2
      %v828 = vsel %vm791, %v825, %v827
      %v829 = vrot.slane %v768, 2
      %v830 = vsel %vm791, %v827, %v829
      %v851 = vsel %vm791, %v829, 0.0
      %v852 = vadd.f32 %v564, %v794
      %v853 = vadd.f32 %v567, %v796
      %v854 = vadd.f32 %v572, %v798
      %v855 = vadd.f32 %v575, %v800
      %v856 = vadd.f32 %v580, %v802
      %v857 = vadd.f32 %v583, %v804
      %v858 = vadd.f32 %v588, %v806
      %v859 = vadd.f32 %v591, %v808
      %v860 = vadd.f32 %v596, %v810
      %v861 = vadd.f32 %v599, %v812
      %v862 = vadd.f32 %v604, %v814
      %v863 = vadd.f32 %v607, %v816
      %v864 = vadd.f32 %v612, %v818
      %v865 = vadd.f32 %v615, %v820
      %v866 = vadd.f32 %v620, %v822
      %v867 = vadd.f32 %v623, %v824
      %v868 = vadd.f32 %v628, %v826
      %v869 = vadd.f32 %v631, %v828
      %v870 = vadd.f32 %v636, %v830
      %v871 = vadd.f32 %v639, %v851
      %v872 = vpack.c.bf16 %v853, %v852
      %v873 = vpack.c.bf16 %v855, %v854
      %v874 = vpack.c.bf16 %v857, %v856
      %v875 = vpack.c.bf16 %v859, %v858
      %v876 = vpack.c.bf16 %v861, %v860
      %v877 = vpack.c.bf16 %v863, %v862
      %v878 = vpack.c.bf16 %v865, %v864
      %v879 = vpack.c.bf16 %v867, %v866
      %v880 = vpack.c.bf16 %v869, %v868
      %v881 = vpack.c.bf16 %v871, %v870
      %v892 = vunpack.c.l.b16 %v872
      %v893 = vunpack.c.h.b16 %v872
      %v894 = vunpack.c.l.b16 %v873
      %v895 = vunpack.c.h.b16 %v873
      %v896 = vunpack.c.l.b16 %v874
      %v897 = vunpack.c.h.b16 %v874
      %v898 = vunpack.c.l.b16 %v875
      %v899 = vunpack.c.h.b16 %v875
      %v900 = vunpack.c.l.b16 %v876
      %v901 = vunpack.c.h.b16 %v876
      %v902 = vunpack.c.l.b16 %v877
      %v903 = vunpack.c.h.b16 %v877
      %v904 = vunpack.c.l.b16 %v878
      %v905 = vunpack.c.h.b16 %v878
      %v906 = vunpack.c.l.b16 %v879
      %v907 = vunpack.c.h.b16 %v879
      %v908 = vunpack.c.l.b16 %v880
      %v909 = vunpack.c.h.b16 %v880
      %v910 = vunpack.c.l.b16 %v881
      %v911 = vunpack.c.h.b16 %v881
      %v912 = vpack.c.b16 %v892, %v892
      %v913 = vpack.c.b16 %v893, %v893
      %v914 = vpack.c.b16 %v894, %v894
      %v915 = vpack.c.b16 %v895, %v895
      %v916 = vpack.c.b16 %v896, %v896
      %v917 = vpack.c.b16 %v897, %v897
      %v918 = vpack.c.b16 %v898, %v898
      %v919 = vpack.c.b16 %v899, %v899
      %v920 = vpack.c.b16 %v900, %v900
      %v921 = vpack.c.b16 %v901, %v901
      %v922 = vpack.c.b16 %v902, %v902
      %v923 = vpack.c.b16 %v903, %v903
      %v924 = vpack.c.b16 %v904, %v904
      %v925 = vpack.c.b16 %v905, %v905
      %v926 = vpack.c.b16 %v906, %v906
      %v927 = vpack.c.b16 %v907, %v907
      %v928 = vpack.c.b16 %v908, %v908
      %v929 = vpack.c.b16 %v909, %v909
      %v930 = vpack.c.b16 %v910, %v910
      %v931 = vpack.c.b16 %v911, %v911
      %vm952 = vcmask 191488
      %953 = vst.msk [vmem:[%s199] sm:$0xf] %vm952, %v912
      %954 = vst.msk [vmem:[%s199 + $0x4] sm:$0xf] %vm952, %v913
      %955 = vst.msk [vmem:[%s199 + $0x8] sm:$0xf] %vm952, %v914
      %956 = vst.msk [vmem:[%s199 + $0xc] sm:$0xf] %vm952, %v915
      %957 = vst.msk [vmem:[%s199 + $0x10] sm:$0xf] %vm952, %v916
      %958 = vst.msk [vmem:[%s199 + $0x14] sm:$0xf] %vm952, %v917
      %959 = vst.msk [vmem:[%s199 + $0x18] sm:$0xf] %vm952, %v918
      %960 = vst.msk [vmem:[%s199 + $0x1c] sm:$0xf] %vm952, %v919
      %961 = vst.msk [vmem:[%s199 + $0x20] sm:$0xf] %vm952, %v920
      %962 = vst.msk [vmem:[%s199 + $0x24] sm:$0xf] %vm952, %v921
      %963 = vst.msk [vmem:[%s199 + $0x28] sm:$0xf] %vm952, %v922
      %964 = vst.msk [vmem:[%s199 + $0x2c] sm:$0xf] %vm952, %v923
      %965 = vst.msk [vmem:[%s199 + $0x30] sm:$0xf] %vm952, %v924
      %966 = vst.msk [vmem:[%s199 + $0x34] sm:$0xf] %vm952, %v925
      %967 = vst.msk [vmem:[%s199 + $0x38] sm:$0xf] %vm952, %v926
      %968 = vst.msk [vmem:[%s199 + $0x3c] sm:$0xf] %vm952, %v927
      %969 = vst.msk [vmem:[%s199 + $0x40] sm:$0xf] %vm952, %v928
      %970 = vst.msk [vmem:[%s199 + $0x44] sm:$0xf] %vm952, %v929
      %971 = vst.msk [vmem:[%s199 + $0x48] sm:$0xf] %vm952, %v930
      %972 = vst.msk [vmem:[%s199 + $0x4c] sm:$0xf] %vm952, %v931
      %s973 = smul.u32 20, %s15
      %p974 = scmp.lt.s32.totalorder %s973, 79
      %s975 = scalar_select %p974, %s973, 79
      %s976 = smul.addr %s975, 4
      %s977 = scalar_lea.vmem %s4, %s976
      // Predicated region
      $region37: #{mask_decoder_forward.24} parent=35 // pred_check
        %p978 = pneg %p122
      $region38: #{mask_decoder_forward.24} parent=35 // pred_check_branch
        %980 = sbr.rel (%p978) target = $region40
      $region39: #{mask_decoder_forward.24} parent=35 // pred_region
        %s981 = smul.u32 20, %s15
      $region40: #{mask_decoder_forward.24} parent=35 // pred_fallthru
        _
    $region36: #{mask_decoder_forward.24} parent=5 // pred_fallthru
      _
    %p982 = scmp.le.s32.totalorder 2, %s10
    // Predicated region
    $region41: #{mask_decoder_forward.24} parent=5 // pred_check
      %p983 = pneg %p982
    $region42: #{mask_decoder_forward.24} parent=5 // pred_check_branch
      %985 = sbr.rel (%p983) target = $region44
    $region43: #{mask_decoder_forward.24} parent=5 // pred_region
      %s986 = ssub.s32 %s10, 2
      // Predicated region
      $region45: #{mask_decoder_forward.24} parent=43 // pred_check
        %p987 = pneg %p128
      $region46: #{mask_decoder_forward.24} parent=43 // pred_check_branch
        %989 = sbr.rel (%p987) target = $region48
      $region47: #{mask_decoder_forward.24} parent=43 // pred_region
        %s990 = smul.u32 20, %s16
        %p991 = scmp.lt.s32.totalorder %s990, 79
        %s992 = scalar_select %p991, %s990, 79
        %s993 = smul.addr %s992, 4
        %s994 = scalar_lea.vmem %s4, %s993
      $region48: #{mask_decoder_forward.24} parent=43 // pred_fallthru
        _
    $region44: #{mask_decoder_forward.24} parent=5 // pred_fallthru
      _
  $region6: #{mask_decoder_forward.24} parent=0 // loop_footer
    %s14 = sadd.s32 1, %s10
  $region7: #{mask_decoder_forward.24} parent=0 // loop_footer_branch
    %9 = sbr.rel target = $region3
  $region8: #{mask_decoder_forward.24} parent=0 // loop_exit
    _

// kernel: mask_decoder_forward.28
$region0: #{mask_decoder_forward.28}
  #allocation0 [shape = 'u32[]', space=smem, size = 0x4, offset = 0x4, fixed_abs, tag = 'smem constant byte address 0x4 - core index']
  #allocation1 [shape = 'u32[144,128]{1,0:T(1,128)}', space=vmem, size = 0x12000, scoped, tag = 'internal scratch']
  %s0 = inlined_call_operand.vmem [shape: f32[5], index: 0, kind: input, shape index: {}]
  %s1 = inlined_call_operand.vmem [shape: f32[2,4,16], index: 1, kind: input, shape index: {}]
  %s2 = inlined_call_operand.vmem [shape: bf16[2,4,16], index: 2, kind: output, shape index: {}]
  %s3 = sld [smem:[#allocation0]]
  $region45: #{mask_decoder_forward.28} parent=0
    _
  %s5 = ssub.s32 1, %s3
  %s6 = scalar_select 0, %s5, %s3
  $region1: #{mask_decoder_forward.28} parent=0
    #allocation2 [shape = 'u8[512]{0}', space=smem, size = 0x200, scoped, tag = 'input window, operand 0, single buffered']
    #allocation3 [shape = 's32[2]{0}', space=sflag, size = 0x8, scoped, tag = 'scoped memory for mask_decoder_forward.28']
    %7 = vsyncpa [#allocation3], 0
    loop: start=0, step=1, limit=4
    $region2: #{mask_decoder_forward.28} parent=1 // loop_pre_header
      _
    $region3: #{mask_decoder_forward.28} parent=1 // loop_header
      %s9 = sphi 0, %s13
      %p10 = scmp.ge.s32.totalorder %s9, 4
      %s17 = sphi 0, %s17
      %s19 = sphi 0, %s17
      %s20 = sphi 0, %s19
      %s34 = sphi 0, %s20
      %s40 = sphi 0, %s42
      %s43 = sphi 0, %s40
      %s44 = sphi 0, %s43
      %s60 = sphi 0, %s44
      %s66 = sphi 0, %s68
      %s69 = sphi 0, %s66
      %s70 = sphi 0, %s69
      %s86 = sphi 0, %s70
    $region4: #{mask_decoder_forward.28} parent=1 // loop_header_branch
      %12 = sbr.rel (%p10) target = $region8
    $region5: #{mask_decoder_forward.28} parent=1 // loop_body
      %s14 = ssub.s32 %s9, 1
      %s15 = ssub.s32 %s9, 2
      %s16 = sadd.s32 %s9, 1
      %s18 = sadd.s32 %s17, 1
      %p21 = scmp.eq.s32.totalorder %s9, 1
      %p22 = scmp.ne.s32.totalorder %s17, %s19
      %p23 = scmp.eq.s32.totalorder %s9, 0
      %p24 = por %p22, %p23
      %p25 = scmp.ne.s32.totalorder %s17, %s19
      %p26 = scmp.eq.s32.totalorder %s14, 1
      %p27 = por %p25, %p26
      %p28 = scmp.ne.s32.totalorder %s19, %s20
      %p29 = scmp.eq.s32.totalorder %s14, 0
      %p30 = por %p28, %p29
      %p31 = scmp.ne.s32.totalorder %s19, %s20
      %p32 = scmp.eq.s32.totalorder %s15, 1
      %p33 = por %p31, %p32
      %p35 = scmp.ne.s32.totalorder %s20, %s34
      %p36 = scmp.eq.s32.totalorder %s15, 0
      %p37 = por %p35, %p36
      %s38 = ssub.s32 %s9, %s16
      %p39 = scmp.eq.s32.totalorder %s38, 0
      %s41 = sadd.s32 %s40, 1
      %s42 = scalar_select %p39, %s40, %s41
      %p45 = pneg %p39
      %p46 = scmp.eq.s32.totalorder %s9, 1
      %p47 = por %p45, %p46
      %p48 = scmp.ne.s32.totalorder %s40, %s43
      %p49 = scmp.eq.s32.totalorder %s9, 0
      %p50 = por %p48, %p49
      %p51 = scmp.ne.s32.totalorder %s40, %s43
      %p52 = scmp.eq.s32.totalorder %s14, 1
      %p53 = por %p51, %p52
      %p54 = scmp.ne.s32.totalorder %s43, %s44
      %p55 = scmp.eq.s32.totalorder %s14, 0
      %p56 = por %p54, %p55
      %p57 = scmp.ne.s32.totalorder %s43, %s44
      %p58 = scmp.eq.s32.totalorder %s15, 1
      %p59 = por %p57, %p58
      %p61 = scmp.ne.s32.totalorder %s44, %s60
      %p62 = scmp.eq.s32.totalorder %s15, 0
      %p63 = por %p61, %p62
      %s64 = ssub.s32 %s9, %s16
      %p65 = scmp.eq.s32.totalorder %s64, 0
      %s67 = sadd.s32 %s66, 1
      %s68 = scalar_select %p65, %s66, %s67
      %p71 = pneg %p65
      %p72 = scmp.eq.s32.totalorder %s9, 1
      %p73 = por %p71, %p72
      %p74 = scmp.ne.s32.totalorder %s66, %s69
      %p75 = scmp.eq.s32.totalorder %s9, 0
      %p76 = por %p74, %p75
      %p77 = scmp.ne.s32.totalorder %s66, %s69
      %p78 = scmp.eq.s32.totalorder %s14, 1
      %p79 = por %p77, %p78
      %p80 = scmp.ne.s32.totalorder %s69, %s70
      %p81 = scmp.eq.s32.totalorder %s14, 0
      %p82 = por %p80, %p81
      %p83 = scmp.ne.s32.totalorder %s69, %s70
      %p84 = scmp.eq.s32.totalorder %s15, 1
      %p85 = por %p83, %p84
      %p87 = scmp.ne.s32.totalorder %s70, %s86
      %p88 = scmp.eq.s32.totalorder %s15, 0
      %p89 = por %p87, %p88
      %p90 = scmp.le.s32.totalorder 1, %s9
      %p91 = scmp.lt.s32.totalorder %s9, 3
      %p92 = pnand %p90, %p91
      %p93 = pneg %p92
      // Predicated region
      $region9: #{mask_decoder_forward.28} parent=5 // pred_check
        _
      $region10: #{mask_decoder_forward.28} parent=5 // pred_check_branch
        %95 = sbr.rel (%p92) target = $region12
      $region11: #{mask_decoder_forward.28} parent=5 // pred_region
        %s96 = ssub.s32 %s9, 1
        // Predicated region
        $region13: #{mask_decoder_forward.28} parent=11 // pred_check
          %p97 = pneg %p30
        $region14: #{mask_decoder_forward.28} parent=11 // pred_check_branch
          %99 = sbr.rel (%p97) target = $region16
        $region15: #{mask_decoder_forward.28} parent=11 // pred_region
          %s101 = ssub.s32 16, 16
          %102 = vsyncadd [#allocation3], %s101
          %s104 = sshll.u32 %s0, 4
          %s105 = int_to_ptr.vmem [resolvable:$true] %s104
          %107 = dma.vmem_to_smem %s105, 16, [#allocation2], [#allocation3]
        $region16: #{mask_decoder_forward.28} parent=11 // pred_fallthru
          _
      $region12: #{mask_decoder_forward.28} parent=5 // pred_fallthru
        _
      %p108 = scmp.lt.s32.totalorder %s9, 2
      // Predicated region
      $region17: #{mask_decoder_forward.28} parent=5 // pred_check
        %p109 = pneg %p108
      $region18: #{mask_decoder_forward.28} parent=5 // pred_check_branch
        %111 = sbr.rel (%p109) target = $region20
      $region19: #{mask_decoder_forward.28} parent=5 // pred_region
        // Predicated region
        $region21: #{mask_decoder_forward.28} parent=19 // pred_check
          %p112 = pneg %p50
        $region22: #{mask_decoder_forward.28} parent=19 // pred_check_branch
          %114 = sbr.rel (%p112) target = $region24
        $region23: #{mask_decoder_forward.28} parent=19 // pred_region
          %p115 = scmp.lt.s32.totalorder %s9, 1
          %s116 = scalar_select %p115, %s9, 1
          %s117 = smul.addr %s116, 4
          %s118 = scalar_lea.vmem %s1, %s117
        $region24: #{mask_decoder_forward.28} parent=19 // pred_fallthru
          _
      $region20: #{mask_decoder_forward.28} parent=5 // pred_fallthru
        _
      %p119 = scmp.le.s32.totalorder 1, %s9
      %p120 = scmp.lt.s32.totalorder %s9, 3
      %p121 = pnand %p119, %p120
      %p122 = pneg %p121
      // Predicated region
      $region25: #{mask_decoder_forward.28} parent=5 // pred_check
        _
      $region26: #{mask_decoder_forward.28} parent=5 // pred_check_branch
        %124 = sbr.rel (%p121) target = $region28
      $region27: #{mask_decoder_forward.28} parent=5 // pred_region
        %s125 = ssub.s32 %s9, 1
        // Predicated region
        $region29: #{mask_decoder_forward.28} parent=27 // pred_check
          %p126 = pneg %p30
        $region30: #{mask_decoder_forward.28} parent=27 // pred_check_branch
          %128 = sbr.rel (%p126) target = $region32
        $region31: #{mask_decoder_forward.28} parent=27 // pred_region
          %129 = dma.done [#allocation3], 16
        $region32: #{mask_decoder_forward.28} parent=27 // pred_fallthru
          _
        %130 = sfence
        %p131 = pneg %p30
        %p132 = pneg %p27
        %p133 = scmp.lt.s32.totalorder %s14, 1
        %s134 = scalar_select %p133, %s14, 1
        %s135 = smul.addr %s134, 4
        %s136 = scalar_lea.vmem %s1, %s135
        %p137 = pneg %p56
        %p138 = pneg %p53
        %p139 = pneg %p82
        %p140 = pneg %p79
        %p141 = scmp.lt.s32.totalorder %s14, 1
        %s142 = scalar_select %p141, %s14, 1
        %s143 = smul.addr %s142, 2
        %s144 = scalar_lea.vmem %s2, %s143
        %p145 = scmp.lt.s32.totalorder %s14, 1
        %s146 = scalar_select %p145, %s14, 1
        %s147 = smul.addr %s146, 4
        %s148 = scalar_lea.vmem %s1, %s147
        %p149 = scmp.lt.s32.totalorder %s14, 1
        %s150 = scalar_select %p149, %s14, 1
        %s151 = smul.addr %s150, 2
        %s152 = scalar_lea.vmem %s2, %s151
        %v153 = vld [vmem:[%s148] sm:$0xf]
        %vm154 = vcmask 125952
        %v155 = vsel %vm154, %v153, 0.0
        %156 = vadd.xlane.f32.xlu0 %v155
        %v157 = vpop.xlane.xlu0 %156
        %v158 = vrot.slane %v157, 4
        %v159 = vadd.f32 %v157, %v158
        %v160 = vrot.slane %v159, 2
        %v161 = vadd.f32 %v159, %v160
        %v162 = vrot.slane %v161, 1
        %v163 = vadd.f32 %v161, %v162
        %v164 = vrcp.pop 64.0
        %v165 = vmul.f32 %v163, %v164
        %v166 = vsub.f32 %v153, %v165
        %v167 = vmul.f32 %v166, %v166
        %v168 = vsel %vm154, %v167, 0.0
        %169 = vadd.xlane.f32.xlu0 %v168
        %v170 = vpop.xlane.xlu0 %169
        %v171 = vrot.slane %v170, 4
        %v172 = vadd.f32 %v170, %v171
        %v173 = vrot.slane %v172, 2
        %v174 = vadd.f32 %v172, %v173
        %v175 = vrot.slane %v174, 1
        %v176 = vadd.f32 %v174, %v175
        %v177 = vmul.f32 %v176, %v164
        %v178 = vadd.f32 %v177, 1e-05
        %v179 = vrsqrt.pop %v178
        %v180 = vmul.f32 %v166, %v179
        %s181 = sld [smem:[#allocation2]]
        %v182 = vstv %s181
        %v183 = vmul.f32 %v180, %v182
        %s184 = sld [smem:[#allocation2 + $0x1]]
        %v185 = vstv %s184
        %v186 = vadd.f32 %v183, %v185
        %v187 = vmax.f32 %v186, 0.0
        %s188 = sld [smem:[#allocation2 + $0x2]]
        %v189 = vmin.f32 %v186, 0.0
        %v190 = vstv %s188
        %v191 = vmul.f32 %v190, %v189
        %v192 = vadd.f32 %v187, %v191
        %s193 = sld [smem:[#allocation2 + $0x3]]
        %v194 = vstv %s193
        %v195 = vmul.f32 %v194, %v192
        %s196 = sld [smem:[#allocation2 + $0x4]]
        %v197 = vstv %s196
        %v198 = vadd.f32 %v195, %v197
        %v199 = vpack.c.bf16 %v198, %v198
        %vm200 = vcmask 123904
        %201 = vst.msk [vmem:[%s152] sm:$0x3] %vm200, %v199
        %p202 = scmp.lt.s32.totalorder %s14, 1
        %s203 = scalar_select %p202, %s14, 1
        %s204 = smul.addr %s203, 2
        %s205 = scalar_lea.vmem %s2, %s204
        // Predicated region
        $region33: #{mask_decoder_forward.28} parent=27 // pred_check
          %p206 = pneg %p79
        $region34: #{mask_decoder_forward.28} parent=27 // pred_check_branch
          %208 = sbr.rel (%p206) target = $region36
        $region35: #{mask_decoder_forward.28} parent=27 // pred_region
          _
        $region36: #{mask_decoder_forward.28} parent=27 // pred_fallthru
          _
      $region28: #{mask_decoder_forward.28} parent=5 // pred_fallthru
        _
      %p209 = scmp.le.s32.totalorder 2, %s9
      // Predicated region
      $region37: #{mask_decoder_forward.28} parent=5 // pred_check
        %p210 = pneg %p209
      $region38: #{mask_decoder_forward.28} parent=5 // pred_check_branch
        %212 = sbr.rel (%p210) target = $region40
      $region39: #{mask_decoder_forward.28} parent=5 // pred_region
        %s213 = ssub.s32 %s9, 2
        // Predicated region
        $region41: #{mask_decoder_forward.28} parent=39 // pred_check
          %p214 = pneg %p85
        $region42: #{mask_decoder_forward.28} parent=39 // pred_check_branch
          %216 = sbr.rel (%p214) target = $region44
        $region43: #{mask_decoder_forward.28} parent=39 // pred_region
          %p217 = scmp.lt.s32.totalorder %s15, 1
          %s218 = scalar_select %p217, %s15, 1
          %s219 = smul.addr %s218, 2
          %s220 = scalar_lea.vmem %s2, %s219
        $region44: #{mask_decoder_forward.28} parent=39 // pred_fallthru
          _
      $region40: #{mask_decoder_forward.28} parent=5 // pred_fallthru
        _
    $region6: #{mask_decoder_forward.28} parent=1 // loop_footer
      %s13 = sadd.s32 1, %s9
    $region7: #{mask_decoder_forward.28} parent=1 // loop_footer_branch
      %8 = sbr.rel target = $region3
    $region8: #{mask_decoder_forward.28} parent=1 // loop_exit
      _
    %221 = vsyncpa [#allocation3], 1
    %s222 = scalar_lea.sflag [#allocation3], 1
    %223 = vsyncpa %s222, 1

// kernel: mask_decoder_forward.29
$region0: #{mask_decoder_forward.29}
  #allocation0 [shape = 'u32[]', space=smem, size = 0x4, offset = 0x4, fixed_abs, tag = 'smem constant byte address 0x4 - core index']
  #allocation1 [shape = 'u32[144,128]{1,0:T(1,128)}', space=vmem, size = 0x12000, scoped, tag = 'internal scratch']
  %s0 = inlined_call_operand.vmem [shape: bf16[8,16], index: 0, kind: input, shape index: {}]
  %s1 = inlined_call_operand.vmem [shape: bf16[16,16], index: 1, kind: input, shape index: {}]
  %s2 = inlined_call_operand.vmem [shape: f32[1,16], index: 2, kind: input, shape index: {}]
  %s3 = inlined_call_operand.hbm [shape: f32[8,16], index: 3, kind: output, shape index: {}]
  %s4 = sld [smem:[#allocation0]]
  $region22: #{mask_decoder_forward.29} parent=0
    _
  %s6 = ssub.s32 1, %s4
  %s7 = scalar_select 0, %s6, %s4
  $region1: #{mask_decoder_forward.29} parent=0
    #allocation2 [shape = 'u8[4096]{0}', space=vmem, size = 0x1000, scoped, tag = 'output window, operand 0, single buffered']
    #allocation3 [shape = 's32[1]{0}', space=sflag, size = 0x4, scoped, tag = 'scoped memory for mask_decoder_forward.29']
    %8 = vsyncpa [#allocation3], 0
    // Predicated region
    $region2: #{mask_decoder_forward.29} parent=1 // pred_check
      _
    $region3: #{mask_decoder_forward.29} parent=1 // pred_check_branch
      %10 = sbr.rel (0) target = $region5
    $region4: #{mask_decoder_forward.29} parent=1 // pred_region
      _
    $region5: #{mask_decoder_forward.29} parent=1 // pred_fallthru
      _
    // Predicated region
    $region6: #{mask_decoder_forward.29} parent=1 // pred_check
      _
    $region7: #{mask_decoder_forward.29} parent=1 // pred_check_branch
      %12 = sbr.rel (0) target = $region9
    $region8: #{mask_decoder_forward.29} parent=1 // pred_region
      _
    $region9: #{mask_decoder_forward.29} parent=1 // pred_fallthru
      _
    // Predicated region
    $region10: #{mask_decoder_forward.29} parent=1 // pred_check
      _
    $region11: #{mask_decoder_forward.29} parent=1 // pred_check_branch
      %14 = sbr.rel (0) target = $region13
    $region12: #{mask_decoder_forward.29} parent=1 // pred_region
      _
    $region13: #{mask_decoder_forward.29} parent=1 // pred_fallthru
      _
    %v16 = vld [vmem:[%s0] sm:$0xf]
    %v17 = vld [vmem:[%s1] sm:$0xf]
    %v18 = vld [vmem:[%s1 + $0x4] sm:$0xf]
    %v19 = vld [vmem:[%s2] sm:$0x1]
    %v21 = vlaneseq
    %v22 = vshrl.u32 %v21, 7
    %v23 = vsub.s32 0, %v22
    %v24 = vrot.slane %v19, %v23
    %v28 = vunpack.c.l.b16 %v17
    %v29 = vunpack.c.l.b16 %v18
    %v30 = vpack.c.b16 %v29, %v28
    %vm32 = vcmask 130048
    %v34 = vsel %vm32, %v16, 0
    %36 = vmatprep.subr.bf16.mxu0 0
    %37 = vmatpush1.bf16.msra.mxu0 %v30
    %38 = vmatprep.subr.bf16.mxu0 0
    %39 = vmatpush1.bf16.msra.mxu0 0
    %40 = vmatprep.subr.bf16.mxu0 0
    %41 = vmatpush1.bf16.msra.mxu0 0
    %42 = vmatprep.subr.bf16.mxu0 0
    %43 = vmatpush1.bf16.msra.mxu0 0
    %44 = vmatprep.subr.bf16.mxu0 0
    %45 = vmatpush1.bf16.msra.mxu0 0
    %46 = vmatprep.subr.bf16.mxu0 0
    %47 = vmatpush1.bf16.msra.mxu0 0
    %48 = vmatprep.subr.bf16.mxu0 0
    %49 = vmatpush1.bf16.msra.mxu0 0
    %50 = vmatprep.subr.bf16.mxu0 0
    %51 = vmatpush1.bf16.msra.mxu0 0
    %52 = vmatprep.subr.bf16.mxu0 0
    %53 = vmatpush1.bf16.msra.mxu0 0
    %54 = vmatprep.subr.bf16.mxu0 0
    %55 = vmatpush1.bf16.msra.mxu0 0
    %56 = vmatprep.subr.bf16.mxu0 0
    %57 = vmatpush1.bf16.msra.mxu0 0
    %58 = vmatprep.subr.bf16.mxu0 0
    %59 = vmatpush1.bf16.msra.mxu0 0
    %60 = vmatprep.subr.bf16.mxu0 0
    %61 = vmatpush1.bf16.msra.mxu0 0
    %62 = vmatprep.subr.bf16.mxu0 0
    %63 = vmatpush1.bf16.msra.mxu0 0
    %64 = vmatprep.subr.bf16.mxu0 0
    %65 = vmatpush1.bf16.msra.mxu0 0
    %66 = vmatprep.subr.bf16.mxu0 0
    %67 = vmatpush1.bf16.msra.mxu0 0
    %68 = vmatprep.mubr.bf16.mxu0 0
    %69 = vmatmul.mubr.bf16.gmra.mrb[0].mxu0 %v34
    %v70 = vpop.f32.mrb[0].mxu0
    %v71 = vadd.f32 %v24, %v70
    %v72 = vpop.f32.mrb[0].mxu0
    %v73 = vpop.f32.mrb[0].mxu0
    %v74 = vpop.f32.mrb[0].mxu0
    %75 = vdwg.mxu0
    %76 = vst.msk [vmem:[#allocation2] sm:$0xff] %vm32, %v71
    // Predicated region
    $region14: #{mask_decoder_forward.29} parent=1 // pred_check
      _
    $region15: #{mask_decoder_forward.29} parent=1 // pred_check_branch
      %78 = sbr.rel (0) target = $region17
    $region16: #{mask_decoder_forward.29} parent=1 // pred_region
      %s80 = ssub.s32 128, 128
      %81 = vsyncadd [#allocation3], %s80
      %s83 = sshll.u32 [#allocation2], 4
      %s84 = int_to_ptr.vmem [resolvable:$true] %s83
      %86 = dma.vmem_to_hbm [thread:$0]  %s84, 128, %s3, [#allocation3]
    $region17: #{mask_decoder_forward.29} parent=1 // pred_fallthru
      _
    // Predicated region
    $region18: #{mask_decoder_forward.29} parent=1 // pred_check
      _
    $region19: #{mask_decoder_forward.29} parent=1 // pred_check_branch
      %88 = sbr.rel (0) target = $region21
    $region20: #{mask_decoder_forward.29} parent=1 // pred_region
      %89 = dma.done [#allocation3], 128
    $region21: #{mask_decoder_forward.29} parent=1 // pred_fallthru
      _
    %90 = vsyncpa [#allocation3], 1

// kernel: mask_decoder_forward.27
$region0: #{mask_decoder_forward.27}
  #allocation0 [shape = 'u32[]', space=smem, size = 0x4, offset = 0x4, fixed_abs, tag = 'smem constant byte address 0x4 - core index']
  #allocation1 [shape = 'u32[144,128]{1,0:T(1,128)}', space=vmem, size = 0x12000, scoped, tag = 'internal scratch']
  #allocation2 [shape = 'f32[1]{0:T(128)S(6)}', space=smem, size = 0x200, scoped, tag = 'scoped memory for mask_decoder_forward.27']
  %s0 = inlined_call_operand.<no memory space> [shape: f32[1], index: 0, kind: input, shape index: {}]
  %s1 = inlined_call_operand.vmem [shape: f32[8,4], index: 1, kind: input, shape index: {}]
  %s2 = inlined_call_operand.vmem [shape: bf16[2,4,8,8], index: 2, kind: input, shape index: {}]
  %s3 = inlined_call_operand.vmem [shape: f32[2,4,16], index: 3, kind: output, shape index: {}]
  %s4 = sld [smem:[#allocation0]]
  $region45: #{mask_decoder_forward.27} parent=0
    _
  %s6 = ssub.s32 1, %s4
  %s7 = scalar_select 0, %s6, %s4
  %8 = sst [smem:[#allocation2]] %s0
  loop: start=0, step=1, limit=4
  $region2: #{mask_decoder_forward.27} parent=0 // loop_pre_header
    _
  $region3: #{mask_decoder_forward.27} parent=0 // loop_header
    %s10 = sphi 0, %s14
    %p11 = scmp.ge.s32.totalorder %s10, 4
    %s17 = sphi 0, %s29
    %s18 = sphi 0, %s25
    %s19 = sphi 0, %s17
    %s20 = sphi 0, %s18
    %s21 = sphi 0, %s19
    %s22 = sphi 0, %s20
    %s30 = sphi 0, %s30
    %s32 = sphi 0, %s30
    %s33 = sphi 0, %s32
    %s47 = sphi 0, %s33
    %s51 = sphi 0, %s51
    %s53 = sphi 0, %s51
    %s54 = sphi 0, %s53
    %s68 = sphi 0, %s54
    %s76 = sphi 0, %s78
    %s79 = sphi 0, %s76
    %s80 = sphi 0, %s79
    %s96 = sphi 0, %s80
    %s104 = sphi 0, %s106
    %s107 = sphi 0, %s104
    %s108 = sphi 0, %s107
    %s124 = sphi 0, %s108
  $region4: #{mask_decoder_forward.27} parent=0 // loop_header_branch
    %13 = sbr.rel (%p11) target = $region8
  $region5: #{mask_decoder_forward.27} parent=0 // loop_body
    %s15 = ssub.s32 %s10, 1
    %s16 = ssub.s32 %s10, 2
    %s23 = sadd.s32 1, %s18
    %p24 = scmp.ge.s32.totalorder %s23, 1
    %s25 = scalar_select %p24, 0, %s23
    %s26 = sadd.s32 1, %s17
    %s27 = scalar_select %p24, %s26, %s17
    %p28 = scmp.ge.s32.totalorder %s27, 2
    %s29 = scalar_select %p28, 0, %s27
    %s31 = sadd.s32 %s30, 1
    %p34 = scmp.eq.s32.totalorder %s10, 1
    %p35 = scmp.ne.s32.totalorder %s30, %s32
    %p36 = scmp.eq.s32.totalorder %s10, 0
    %p37 = por %p35, %p36
    %p38 = scmp.ne.s32.totalorder %s30, %s32
    %p39 = scmp.eq.s32.totalorder %s15, 1
    %p40 = por %p38, %p39
    %p41 = scmp.ne.s32.totalorder %s32, %s33
    %p42 = scmp.eq.s32.totalorder %s15, 0
    %p43 = por %p41, %p42
    %p44 = scmp.ne.s32.totalorder %s32, %s33
    %p45 = scmp.eq.s32.totalorder %s16, 1
    %p46 = por %p44, %p45
    %p48 = scmp.ne.s32.totalorder %s33, %s47
    %p49 = scmp.eq.s32.totalorder %s16, 0
    %p50 = por %p48, %p49
    %s52 = sadd.s32 %s51, 1
    %p55 = scmp.eq.s32.totalorder %s10, 1
    %p56 = scmp.ne.s32.totalorder %s51, %s53
    %p57 = scmp.eq.s32.totalorder %s10, 0
    %p58 = por %p56, %p57
    %p59 = scmp.ne.s32.totalorder %s51, %s53
    %p60 = scmp.eq.s32.totalorder %s15, 1
    %p61 = por %p59, %p60
    %p62 = scmp.ne.s32.totalorder %s53, %s54
    %p63 = scmp.eq.s32.totalorder %s15, 0
    %p64 = por %p62, %p63
    %p65 = scmp.ne.s32.totalorder %s53, %s54
    %p66 = scmp.eq.s32.totalorder %s16, 1
    %p67 = por %p65, %p66
    %p69 = scmp.ne.s32.totalorder %s54, %s68
    %p70 = scmp.eq.s32.totalorder %s16, 0
    %p71 = por %p69, %p70
    %s72 = ssub.s32 %s17, %s29
    %s73 = ssub.s32 %s18, %s25
    %s74 = sor.u32 %s72, %s73
    %p75 = scmp.eq.s32.totalorder %s74, 0
    %s77 = sadd.s32 %s76, 1
    %s78 = scalar_select %p75, %s76, %s77
    %p81 = pneg %p75
    %p82 = scmp.eq.s32.totalorder %s10, 1
    %p83 = por %p81, %p82
    %p84 = scmp.ne.s32.totalorder %s76, %s79
    %p85 = scmp.eq.s32.totalorder %s10, 0
    %p86 = por %p84, %p85
    %p87 = scmp.ne.s32.totalorder %s76, %s79
    %p88 = scmp.eq.s32.totalorder %s15, 1
    %p89 = por %p87, %p88
    %p90 = scmp.ne.s32.totalorder %s79, %s80
    %p91 = scmp.eq.s32.totalorder %s15, 0
    %p92 = por %p90, %p91
    %p93 = scmp.ne.s32.totalorder %s79, %s80
    %p94 = scmp.eq.s32.totalorder %s16, 1
    %p95 = por %p93, %p94
    %p97 = scmp.ne.s32.totalorder %s80, %s96
    %p98 = scmp.eq.s32.totalorder %s16, 0
    %p99 = por %p97, %p98
    %s100 = ssub.s32 %s17, %s29
    %s101 = ssub.s32 %s18, %s25
    %s102 = sor.u32 %s100, %s101
    %p103 = scmp.eq.s32.totalorder %s102, 0
    %s105 = sadd.s32 %s104, 1
    %s106 = scalar_select %p103, %s104, %s105
    %p109 = pneg %p103
    %p110 = scmp.eq.s32.totalorder %s10, 1
    %p111 = por %p109, %p110
    %p112 = scmp.ne.s32.totalorder %s104, %s107
    %p113 = scmp.eq.s32.totalorder %s10, 0
    %p114 = por %p112, %p113
    %p115 = scmp.ne.s32.totalorder %s104, %s107
    %p116 = scmp.eq.s32.totalorder %s15, 1
    %p117 = por %p115, %p116
    %p118 = scmp.ne.s32.totalorder %s107, %s108
    %p119 = scmp.eq.s32.totalorder %s15, 0
    %p120 = por %p118, %p119
    %p121 = scmp.ne.s32.totalorder %s107, %s108
    %p122 = scmp.eq.s32.totalorder %s16, 1
    %p123 = por %p121, %p122
    %p125 = scmp.ne.s32.totalorder %s108, %s124
    %p126 = scmp.eq.s32.totalorder %s16, 0
    %p127 = por %p125, %p126
    %p128 = scmp.le.s32.totalorder 1, %s10
    %p129 = scmp.lt.s32.totalorder %s10, 3
    %p130 = pnand %p128, %p129
    %p131 = pneg %p130
    // Predicated region
    $region9: #{mask_decoder_forward.27} parent=5 // pred_check
      _
    $region10: #{mask_decoder_forward.27} parent=5 // pred_check_branch
      %133 = sbr.rel (%p130) target = $region12
    $region11: #{mask_decoder_forward.27} parent=5 // pred_region
      %s134 = ssub.s32 %s10, 1
      // Predicated region
      $region13: #{mask_decoder_forward.27} parent=11 // pred_check
        %p135 = pneg %p43
      $region14: #{mask_decoder_forward.27} parent=11 // pred_check_branch
        %137 = sbr.rel (%p135) target = $region16
      $region15: #{mask_decoder_forward.27} parent=11 // pred_region
        _
      $region16: #{mask_decoder_forward.27} parent=11 // pred_fallthru
        _
      // Predicated region
      $region17: #{mask_decoder_forward.27} parent=11 // pred_check
        %p138 = pneg %p64
      $region18: #{mask_decoder_forward.27} parent=11 // pred_check_branch
        %140 = sbr.rel (%p138) target = $region20
      $region19: #{mask_decoder_forward.27} parent=11 // pred_region
        _
      $region20: #{mask_decoder_forward.27} parent=11 // pred_fallthru
        _
    $region12: #{mask_decoder_forward.27} parent=5 // pred_fallthru
      _
    %p141 = scmp.lt.s32.totalorder %s10, 2
    // Predicated region
    $region21: #{mask_decoder_forward.27} parent=5 // pred_check
      %p142 = pneg %p141
    $region22: #{mask_decoder_forward.27} parent=5 // pred_check_branch
      %144 = sbr.rel (%p142) target = $region24
    $region23: #{mask_decoder_forward.27} parent=5 // pred_region
      // Predicated region
      $region25: #{mask_decoder_forward.27} parent=23 // pred_check
        %p145 = pneg %p86
      $region26: #{mask_decoder_forward.27} parent=23 // pred_check_branch
        %147 = sbr.rel (%p145) target = $region28
      $region27: #{mask_decoder_forward.27} parent=23 // pred_region
        %s148 = smul.u32 4, %s18
        %p149 = scmp.lt.s32.totalorder %s17, 1
        %s150 = scalar_select %p149, %s17, 1
        %p151 = scmp.lt.s32.totalorder %s148, 3
        %s152 = scalar_select %p151, %s148, 3
        %s153 = smul.addr %s150, 4
        %s154 = sadd.s32 %s152, %s153
        %s155 = smul.addr %s154, 4
        %s156 = scalar_lea.vmem %s2, %s155
        %s157 = smul.u32 4, %s18
      $region28: #{mask_decoder_forward.27} parent=23 // pred_fallthru
        _
    $region24: #{mask_decoder_forward.27} parent=5 // pred_fallthru
      _
    %p158 = scmp.le.s32.totalorder 1, %s10
    %p159 = scmp.lt.s32.totalorder %s10, 3
    %p160 = pnand %p158, %p159
    %p161 = pneg %p160
    // Predicated region
    $region29: #{mask_decoder_forward.27} parent=5 // pred_check
      _
    $region30: #{mask_decoder_forward.27} parent=5 // pred_check_branch
      %163 = sbr.rel (%p160) target = $region32
    $region31: #{mask_decoder_forward.27} parent=5 // pred_region
      %s164 = ssub.s32 %s10, 1
      %p165 = pneg %p43
      %p166 = pneg %p40
      %p167 = pneg %p64
      %p168 = pneg %p61
      %s169 = smul.u32 4, %s20
      %p170 = scmp.lt.s32.totalorder %s19, 1
      %s171 = scalar_select %p170, %s19, 1
      %p172 = scmp.lt.s32.totalorder %s169, 3
      %s173 = scalar_select %p172, %s169, 3
      %s174 = smul.addr %s171, 4
      %s175 = sadd.s32 %s173, %s174
      %s176 = smul.addr %s175, 4
      %s177 = scalar_lea.vmem %s2, %s176
      %p178 = pneg %p92
      %p179 = pneg %p89
      %p180 = pneg %p120
      %p181 = pneg %p117
      %p182 = scmp.lt.s32.totalorder %s19, 1
      %s183 = scalar_select %p182, %s19, 1
      %p184 = scmp.lt.s32.totalorder %s20, 0
      %s185 = scalar_select %p184, %s20, 0
      %s186 = sadd.s32 %s185, %s183
      %s187 = smul.addr %s186, 4
      %s188 = scalar_lea.vmem %s3, %s187
      %s189 = smul.u32 4, %s20
      %p190 = scmp.lt.s32.totalorder %s19, 1
      %s191 = scalar_select %p190, %s19, 1
      %p192 = scmp.lt.s32.totalorder %s189, 3
      %s193 = scalar_select %p192, %s189, 3
      %s194 = smul.addr %s191, 4
      %s195 = sadd.s32 %s193, %s194
      %s196 = smul.addr %s195, 4
      %s197 = scalar_lea.vmem %s2, %s196
      %s198 = smul.u32 4, %s20
      %p199 = scmp.lt.s32.totalorder %s19, 1
      %s200 = scalar_select %p199, %s19, 1
      %p201 = scmp.lt.s32.totalorder %s20, 0
      %s202 = scalar_select %p201, %s20, 0
      %s203 = sadd.s32 %s202, %s200
      %s204 = smul.addr %s203, 4
      %s205 = scalar_lea.vmem %s3, %s204
      %v206 = vld [vmem:[%s197] sm:$0xf]
      %v207 = vld [vmem:[%s197 + $0x4] sm:$0xf]
      %v208 = vld [vmem:[%s197 + $0x8] sm:$0xf]
      %v209 = vld [vmem:[%s197 + $0xc] sm:$0xf]
      %v210 = vunpack.c.l.bf16 %v206
      %v211 = vunpack.c.l.bf16 %v207
      %v212 = vunpack.c.l.bf16 %v208
      %v213 = vunpack.c.l.bf16 %v209
      %v214 = vld [vmem:[%s1] sm:$0xff]
      %216 = vset.pattern.permute.xlu0 0
      %217 = vperm.xlu0 %216, %v214
      %v218 = vpop.permute.xlu0 %217
      %v219 = vlaneseq
      %v220 = vand.u32 %v219, 127
      %v221 = vlaneseq
      %v222 = vshrl.u32 %v221, 7
      %v223 = vsub.s32 %v220, %v222
      %v224 = vrot.slane %v218, %v223
      %vm225 = vcmask 1041409
      %vm226 = vcmask 1042434
      %v227 = vsel %vm226, %v224, %v224
      %vm228 = vcmask 1043459
      %v229 = vsel %vm228, %v224, %v227
      %vm230 = vcmask 1044484
      %v231 = vsel %vm230, %v224, %v229
      %vm232 = vcmask 1045509
      %v233 = vsel %vm232, %v224, %v231
      %vm234 = vcmask 1046534
      %v235 = vsel %vm234, %v224, %v233
      %vm236 = vcmask 1047559
      %v237 = vsel %vm236, %v224, %v235
      %v239 = vmul.f32 %v210, %v237
      %v240 = vmul.f32 %v211, %v237
      %v241 = vmul.f32 %v212, %v237
      %v242 = vmul.f32 %v213, %v237
      %vm243 = vcmask 64512
      %v244 = vsel %vm243, %v239, 0.0
      %245 = vadd.xlane.f32.xlu0 %v244
      %v246 = vpop.xlane.xlu0 %245
      %v247 = vsel %vm243, %v240, 0.0
      %248 = vadd.xlane.f32.xlu0 %v247
      %v249 = vpop.xlane.xlu0 %248
      %v250 = vsel %vm243, %v241, 0.0
      %251 = vadd.xlane.f32.xlu0 %v250
      %v252 = vpop.xlane.xlu0 %251
      %v253 = vsel %vm243, %v242, 0.0
      %254 = vadd.xlane.f32.xlu0 %v253
      %v255 = vpop.xlane.xlu0 %254
      %256 = vset.pattern.permute.xlu0 1
      %257 = vperm.xlu0 %256, %v214
      %v258 = vpop.permute.xlu0 %257
      %v259 = vlaneseq
      %v260 = vshrl.u32 %v259, 7
      %v261 = vsub.s32 %v220, %v260
      %v262 = vrot.slane %v258, %v261
      %v263 = vsel %vm226, %v262, %v262
      %v264 = vsel %vm228, %v262, %v263
      %v265 = vsel %vm230, %v262, %v264
      %v266 = vsel %vm232, %v262, %v265
      %v267 = vsel %vm234, %v262, %v266
      %v268 = vsel %vm236, %v262, %v267
      %v270 = vmul.f32 %v210, %v268
      %v271 = vmul.f32 %v211, %v268
      %v272 = vmul.f32 %v212, %v268
      %v273 = vmul.f32 %v213, %v268
      %v274 = vsel %vm243, %v270, 0.0
      %275 = vadd.xlane.f32.xlu0 %v274
      %v276 = vpop.xlane.xlu0 %275
      %v277 = vsel %vm243, %v271, 0.0
      %278 = vadd.xlane.f32.xlu0 %v277
      %v279 = vpop.xlane.xlu0 %278
      %v280 = vsel %vm243, %v272, 0.0
      %281 = vadd.xlane.f32.xlu0 %v280
      %v282 = vpop.xlane.xlu0 %281
      %v283 = vsel %vm243, %v273, 0.0
      %284 = vadd.xlane.f32.xlu0 %v283
      %v285 = vpop.xlane.xlu0 %284
      %286 = vset.pattern.permute.xlu0 2
      %287 = vperm.xlu0 %286, %v214
      %v288 = vpop.permute.xlu0 %287
      %v289 = vlaneseq
      %v290 = vshrl.u32 %v289, 7
      %v291 = vsub.s32 %v220, %v290
      %v292 = vrot.slane %v288, %v291
      %v293 = vsel %vm226, %v292, %v292
      %v294 = vsel %vm228, %v292, %v293
      %v295 = vsel %vm230, %v292, %v294
      %v296 = vsel %vm232, %v292, %v295
      %v297 = vsel %vm234, %v292, %v296
      %v298 = vsel %vm236, %v292, %v297
      %v300 = vmul.f32 %v210, %v298
      %v301 = vmul.f32 %v211, %v298
      %v302 = vmul.f32 %v212, %v298
      %v303 = vmul.f32 %v213, %v298
      %v304 = vsel %vm243, %v300, 0.0
      %305 = vadd.xlane.f32.xlu0 %v304
      %v306 = vpop.xlane.xlu0 %305
      %v307 = vsel %vm243, %v301, 0.0
      %308 = vadd.xlane.f32.xlu0 %v307
      %v309 = vpop.xlane.xlu0 %308
      %v310 = vsel %vm243, %v302, 0.0
      %311 = vadd.xlane.f32.xlu0 %v310
      %v312 = vpop.xlane.xlu0 %311
      %v313 = vsel %vm243, %v303, 0.0
      %314 = vadd.xlane.f32.xlu0 %v313
      %v315 = vpop.xlane.xlu0 %314
      %316 = vset.pattern.permute.xlu0 3
      %317 = vperm.xlu0 %316, %v214
      %v318 = vpop.permute.xlu0 %317
      %v319 = vlaneseq
      %v320 = vshrl.u32 %v319, 7
      %v321 = vsub.s32 %v220, %v320
      %v322 = vrot.slane %v318, %v321
      %v323 = vsel %vm226, %v322, %v322
      %v324 = vsel %vm228, %v322, %v323
      %v325 = vsel %vm230, %v322, %v324
      %v326 = vsel %vm232, %v322, %v325
      %v327 = vsel %vm234, %v322, %v326
      %v328 = vsel %vm236, %v322, %v327
      %v330 = vmul.f32 %v210, %v328
      %v331 = vmul.f32 %v211, %v328
      %v332 = vmul.f32 %v212, %v328
      %v333 = vmul.f32 %v213, %v328
      %v334 = vsel %vm243, %v330, 0.0
      %335 = vadd.xlane.f32.xlu0 %v334
      %v336 = vpop.xlane.xlu0 %335
      %v337 = vsel %vm243, %v331, 0.0
      %338 = vadd.xlane.f32.xlu0 %v337
      %v339 = vpop.xlane.xlu0 %338
      %v340 = vsel %vm243, %v332, 0.0
      %341 = vadd.xlane.f32.xlu0 %v340
      %v342 = vpop.xlane.xlu0 %341
      %v343 = vsel %vm243, %v333, 0.0
      %344 = vadd.xlane.f32.xlu0 %v343
      %v345 = vpop.xlane.xlu0 %344
      %v350 = vadd.s32 %v220, 4294967295
      %v351 = vlaneseq
      %v352 = vshrl.u32 %v351, 7
      %v353 = vsub.s32 %v350, %v352
      %v354 = vrot.slane %v336, %v353
      %v355 = vlaneseq
      %v356 = vshrl.u32 %v355, 7
      %v357 = vsub.s32 %v350, %v356
      %v358 = vrot.slane %v339, %v357
      %v359 = vlaneseq
      %v360 = vshrl.u32 %v359, 7
      %v361 = vsub.s32 %v350, %v360
      %v362 = vrot.slane %v342, %v361
      %v363 = vlaneseq
      %v364 = vshrl.u32 %v363, 7
      %v365 = vsub.s32 %v350, %v364
      %v366 = vrot.slane %v345, %v365
      %v367 = vsel %vm225, %v358, %v354
      %v368 = vsel %vm226, %v362, %v367
      %v369 = vsel %vm228, %v366, %v368
      %vm371 = vcmask 7168
      %v372 = vsel %vm371, 0.0, %v369
      %v374 = vlaneseq
      %v375 = vshrl.u32 %v374, 7
      %v376 = vsub.s32 0, %v375
      %v377 = vrot.slane %v372, %v376
      %379 = vbcast.lane.b32.xlu0 %v377, 256
      %v380 = vpop.permute.xlu0 %379
      %v381 = vlaneseq
      %v382 = vshrl.u32 %v381, 7
      %v383 = vsub.s32 1, %v382
      %v384 = vrot.slane %v372, %v383
      %386 = vbcast.lane.b32.xlu0 %v384, 256
      %v387 = vpop.permute.xlu0 %386
      %v388 = vlaneseq
      %v389 = vshrl.u32 %v388, 7
      %v390 = vsub.s32 2, %v389
      %v391 = vrot.slane %v372, %v390
      %393 = vbcast.lane.b32.xlu0 %v391, 256
      %v394 = vpop.permute.xlu0 %393
      %v395 = vlaneseq
      %v396 = vshrl.u32 %v395, 7
      %v397 = vsub.s32 3, %v396
      %v398 = vrot.slane %v372, %v397
      %400 = vbcast.lane.b32.xlu0 %v398, 256
      %v401 = vpop.permute.xlu0 %400
      %v406 = vadd.f32 %v276, %v380
      %v407 = vadd.f32 %v279, %v387
      %v408 = vadd.f32 %v282, %v394
      %v409 = vadd.f32 %v285, %v401
      %v414 = vadd.s32 %v220, 1
      %v415 = vlaneseq
      %v416 = vshrl.u32 %v415, 7
      %v417 = vsub.s32 %v414, %v416
      %v418 = vrot.slane %v246, %v417
      %v419 = vlaneseq
      %v420 = vshrl.u32 %v419, 7
      %v421 = vsub.s32 %v414, %v420
      %v422 = vrot.slane %v249, %v421
      %v423 = vlaneseq
      %v424 = vshrl.u32 %v423, 7
      %v425 = vsub.s32 %v414, %v424
      %v426 = vrot.slane %v252, %v425
      %v427 = vlaneseq
      %v428 = vshrl.u32 %v427, 7
      %v429 = vsub.s32 %v414, %v428
      %v430 = vrot.slane %v255, %v429
      %v431 = vsel %vm226, %v422, %v418
      %v432 = vsel %vm228, %v426, %v431
      %v433 = vsel %vm230, %v430, %v432
      %vm435 = vcmask 56320
      %v436 = vsel %vm435, %v433, 0.0
      %v438 = vlaneseq
      %v439 = vshrl.u32 %v438, 7
      %v440 = vsub.s32 1, %v439
      %v441 = vrot.slane %v436, %v440
      %443 = vbcast.lane.b32.xlu0 %v441, 256
      %v444 = vpop.permute.xlu0 %443
      %v445 = vlaneseq
      %v446 = vshrl.u32 %v445, 7
      %v447 = vsub.s32 2, %v446
      %v448 = vrot.slane %v436, %v447
      %450 = vbcast.lane.b32.xlu0 %v448, 256
      %v451 = vpop.permute.xlu0 %450
      %v452 = vlaneseq
      %v453 = vshrl.u32 %v452, 7
      %v454 = vsub.s32 3, %v453
      %v455 = vrot.slane %v436, %v454
      %457 = vbcast.lane.b32.xlu0 %v455, 256
      %v458 = vpop.permute.xlu0 %457
      %v459 = vlaneseq
      %v460 = vshrl.u32 %v459, 7
      %v461 = vsub.s32 4, %v460
      %v462 = vrot.slane %v436, %v461
      %464 = vbcast.lane.b32.xlu0 %v462, 256
      %v465 = vpop.permute.xlu0 %464
      %v470 = vadd.f32 %v306, %v444
      %v471 = vadd.f32 %v309, %v451
      %v472 = vadd.f32 %v312, %v458
      %v473 = vadd.f32 %v315, %v465
      %478 = vset.pattern.permute.xlu0 0
      %479 = vperm.xlu0 %478, %v406
      %v480 = vpop.permute.xlu0 %479
      %481 = vset.pattern.permute.xlu0 0
      %482 = vperm.xlu0 %481, %v407
      %v483 = vpop.permute.xlu0 %482
      %484 = vset.pattern.permute.xlu0 0
      %485 = vperm.xlu0 %484, %v408
      %v486 = vpop.permute.xlu0 %485
      %487 = vset.pattern.permute.xlu0 0
      %488 = vperm.xlu0 %487, %v409
      %v489 = vpop.permute.xlu0 %488
      %v490 = vlaneseq
      %v491 = vshrl.u32 %v490, 7
      %v492 = vsub.s32 %v220, %v491
      %v493 = vrot.slane %v480, %v492
      %v494 = vlaneseq
      %v495 = vshrl.u32 %v494, 7
      %v496 = vsub.s32 %v220, %v495
      %v497 = vrot.slane %v483, %v496
      %v498 = vlaneseq
      %v499 = vshrl.u32 %v498, 7
      %v500 = vsub.s32 %v220, %v499
      %v501 = vrot.slane %v486, %v500
      %v502 = vlaneseq
      %v503 = vshrl.u32 %v502, 7
      %v504 = vsub.s32 %v220, %v503
      %v505 = vrot.slane %v489, %v504
      %v506 = vsel %vm225, %v497, %v493
      %v507 = vsel %vm226, %v501, %v506
      %v508 = vsel %vm228, %v505, %v507
      %514 = vset.pattern.permute.xlu0 0
      %515 = vperm.xlu0 %514, %v470
      %v516 = vpop.permute.xlu0 %515
      %517 = vset.pattern.permute.xlu0 0
      %518 = vperm.xlu0 %517, %v471
      %v519 = vpop.permute.xlu0 %518
      %520 = vset.pattern.permute.xlu0 0
      %521 = vperm.xlu0 %520, %v472
      %v522 = vpop.permute.xlu0 %521
      %523 = vset.pattern.permute.xlu0 0
      %524 = vperm.xlu0 %523, %v473
      %v525 = vpop.permute.xlu0 %524
      %v526 = vadd.s32 %v220, 4294967288
      %v527 = vlaneseq
      %v528 = vshrl.u32 %v527, 7
      %v529 = vsub.s32 %v526, %v528
      %v530 = vrot.slane %v516, %v529
      %v531 = vlaneseq
      %v532 = vshrl.u32 %v531, 7
      %v533 = vsub.s32 %v526, %v532
      %v534 = vrot.slane %v519, %v533
      %v535 = vlaneseq
      %v536 = vshrl.u32 %v535, 7
      %v537 = vsub.s32 %v526, %v536
      %v538 = vrot.slane %v522, %v537
      %v539 = vlaneseq
      %v540 = vshrl.u32 %v539, 7
      %v541 = vsub.s32 %v526, %v540
      %v542 = vrot.slane %v525, %v541
      %v543 = vsel %vm225, %v534, %v530
      %v544 = vsel %vm226, %v538, %v543
      %v545 = vsel %vm228, %v542, %v544
      %v547 = vsel %vm243, %v508, %v545
      %s548 = sld [smem:[#allocation2]]
      %v549 = vstv %s548
      %v550 = vadd.f32 %v547, %v549
      %vm551 = vcmask 125952
      %552 = vst.msk [vmem:[%s205] sm:$0xf] %vm551, %v550
      %p553 = scmp.lt.s32.totalorder %s19, 1
      %s554 = scalar_select %p553, %s19, 1
      %p555 = scmp.lt.s32.totalorder %s20, 0
      %s556 = scalar_select %p555, %s20, 0
      %s557 = sadd.s32 %s556, %s554
      %s558 = smul.addr %s557, 4
      %s559 = scalar_lea.vmem %s3, %s558
      // Predicated region
      $region33: #{mask_decoder_forward.27} parent=31 // pred_check
        %p560 = pneg %p117
      $region34: #{mask_decoder_forward.27} parent=31 // pred_check_branch
        %562 = sbr.rel (%p560) target = $region36
      $region35: #{mask_decoder_forward.27} parent=31 // pred_region
        _
      $region36: #{mask_decoder_forward.27} parent=31 // pred_fallthru
        _
    $region32: #{mask_decoder_forward.27} parent=5 // pred_fallthru
      _
    %p563 = scmp.le.s32.totalorder 2, %s10
    // Predicated region
    $region37: #{mask_decoder_forward.27} parent=5 // pred_check
      %p564 = pneg %p563
    $region38: #{mask_decoder_forward.27} parent=5 // pred_check_branch
      %566 = sbr.rel (%p564) target = $region40
    $region39: #{mask_decoder_forward.27} parent=5 // pred_region
      %s567 = ssub.s32 %s10, 2
      // Predicated region
      $region41: #{mask_decoder_forward.27} parent=39 // pred_check
        %p568 = pneg %p123
      $region42: #{mask_decoder_forward.27} parent=39 // pred_check_branch
        %570 = sbr.rel (%p568) target = $region44
      $region43: #{mask_decoder_forward.27} parent=39 // pred_region
        %p571 = scmp.lt.s32.totalorder %s21, 1
        %s572 = scalar_select %p571, %s21, 1
        %p573 = scmp.lt.s32.totalorder %s22, 0
        %s574 = scalar_select %p573, %s22, 0
        %s575 = sadd.s32 %s574, %s572
        %s576 = smul.addr %s575, 4
        %s577 = scalar_lea.vmem %s3, %s576
      $region44: #{mask_decoder_forward.27} parent=39 // pred_fallthru
        _
    $region40: #{mask_decoder_forward.27} parent=5 // pred_fallthru
      _
  $region6: #{mask_decoder_forward.27} parent=0 // loop_footer
    %s14 = sadd.s32 1, %s10
  $region7: #{mask_decoder_forward.27} parent=0 // loop_footer_branch
    %9 = sbr.rel target = $region3
  $region8: #{mask_decoder_forward.27} parent=0 // loop_exit
    _

</llo_original>
